<compile_context>
chip_gen: v7x
topology: tpu7x:2x2x1
jax: 0.10.0
libtpu: 0.0.40
codegen_flags: <defaults>
</compile_context>

<pallas_src>
import functools

import jax
import jax.numpy as jnp
from jax.experimental import pallas as pl
from jax.experimental.pallas import tpu as pltpu

LANE = 128      # native lane width
TILE_B = 128    # batch rows per grid step (also the lane-dense output tile)


def _round_up(x, m):
    return (x + m - 1) // m * m


def _collab_kernel(E,
                   u_idx_ref, v_idx_ref,        # scalar prefetch (SMEM), (B_pad,)
                   uemb_ref, vemb_ref,          # (Nu, E), (Nv, E) f32, VMEM resident
                   w1_ref,                      # (2E, H) bf16, VMEM resident
                   b1_ref,                      # (1, H) f32, VMEM resident
                   w2_ref,                      # (1, H) f32, VMEM resident
                   b2_ref,                      # (1,) f32 in SMEM
                   o_ref,                       # (1, TILE_B) f32 output block
                   cat_ref):                    # scratch (TILE_B, 2E) f32
    base = pl.program_id(0) * TILE_B

    # Fused embedding lookup: gather one user row + one like row per batch
    # element from the VMEM-resident tables into the concat buffer.
    for r in range(TILE_B):
        ui = u_idx_ref[base + r]
        vi = v_idx_ref[base + r]
        cat_ref[pl.ds(r, 1), 0:E] = uemb_ref[pl.ds(ui, 1), :]
        cat_ref[pl.ds(r, 1), E:2 * E] = vemb_ref[pl.ds(vi, 1), :]

    # relu(cat([U, V], 1)); dropout(p=0.1) is identity in eval/inference mode.
    # TODO(synk): training-mode dropout (pltpu.prng_random_bits mask) not implemented.
    x = jnp.maximum(cat_ref[...], 0.0).astype(jnp.bfloat16)

    # fc1: one K=2E MXU matmul, bf16 operands, f32 accumulation.
    h = jnp.dot(x, w1_ref[...], preferred_element_type=jnp.float32)
    h = jnp.maximum(h + b1_ref[...], 0.0)

    # fc2 (N=1): VPU multiply + lane reduction (keeps the MXU out of it).
    out = jnp.sum(h * w2_ref[...], axis=1) + b2_ref[0]          # (TILE_B,)

    # Lane-dense store: batch sits on the lane axis of the output block.
    o_ref[...] = out.reshape(1, TILE_B).astype(o_ref.dtype)


def collab_filter_net(u_idx, v_idx, params):
    """Full forward pass (embedding lookup + MLP) inside one Pallas kernel."""
    user_emb, like_emb = params["user_emb"], params["like_emb"]
    W1, b1, W2, b2 = params["W1"], params["b1"], params["W2"], params["b2"]

    E = user_emb.shape[1]
    H = W1.shape[1]
    B = u_idx.shape[0]

    E_p = _round_up(E, LANE)
    H_p = _round_up(H, LANE)
    B_p = _round_up(B, TILE_B)
    num_tiles = B_p // TILE_B

    # Zero-pad feature dims to the native 128-lane tile (pads contribute 0 -> exact).
    uemb_p = jnp.zeros((user_emb.shape[0], E_p), jnp.float32).at[:, :E].set(user_emb)
    vemb_p = jnp.zeros((like_emb.shape[0], E_p), jnp.float32).at[:, :E].set(like_emb)
    w1_p = (jnp.zeros((2 * E_p, H_p), jnp.float32)
            .at[:E, :H].set(W1[:E, :])
            .at[E_p:E_p + E, :H].set(W1[E:, :])
            .astype(jnp.bfloat16))
    b1_p = jnp.zeros((1, H_p), jnp.float32).at[0, :H].set(b1)
    w2_p = jnp.zeros((1, H_p), jnp.float32).at[0, :H].set(W2[:, 0])
    b2_p = b2.reshape(1).astype(jnp.float32)

    # Pad index vectors with a valid index (0); padded rows are sliced off below.
    u_p = jnp.zeros((B_p,), jnp.int32).at[:B].set(u_idx.astype(jnp.int32))
    v_p = jnp.zeros((B_p,), jnp.int32).at[:B].set(v_idx.astype(jnp.int32))

    def resident(shape):
        # Constant block index -> the buffer stays VMEM-resident across the grid.
        return pl.BlockSpec(shape, lambda i, u, v: (0,) * len(shape))

    grid_spec = pltpu.PrefetchScalarGridSpec(
        num_scalar_prefetch=2,                  # u_p, v_p land in SMEM
        grid=(num_tiles,),
        in_specs=[
            resident(uemb_p.shape),             # user embedding table
            resident(vemb_p.shape),             # like embedding table
            resident((2 * E_p, H_p)),           # W1 (bf16)
            resident((1, H_p)),                 # b1
            resident((1, H_p)),                 # W2 as a row
            pl.BlockSpec(memory_space=pltpu.MemorySpace.SMEM),   # b2 scalar
        ],
        out_specs=pl.BlockSpec((1, TILE_B), lambda i, u, v: (0, i)),
        scratch_shapes=[pltpu.VMEM((TILE_B, 2 * E_p), jnp.float32)],
    )

    out = pl.pallas_call(
        functools.partial(_collab_kernel, E_p),
        out_shape=jax.ShapeDtypeStruct((1, B_p), jnp.float32),
        grid_spec=grid_spec,
        compiler_params=pltpu.CompilerParams(
            dimension_semantics=("parallel",),          # batch tiles are independent
            vmem_limit_bytes=32 * 1024 * 1024,
        ),
    )(u_p, v_p, uemb_p, vemb_p, w1_p, b1_p, w2_p, b2_p)

    # (1, B_pad) lane-dense -> (B, 1) like the PyTorch module.
    return out.reshape(B_p, 1)[:B]


if __name__ == "__main__":
    # Small shapes consistent with the module (embed_size=100, num_hidden=10).
    num_users, num_likes = 40, 50
    embed_size, num_hidden = 100, 10
    batch = 200                                  # -> 2 batch tiles of 128 (padded)

    key = jax.random.PRNGKey(0)
    ks = jax.random.split(key, 8)
    params = {
        "user_emb": jax.random.normal(ks[0], (num_users, embed_size), jnp.float32),
        "like_emb": jax.random.normal(ks[1], (num_likes, embed_size), jnp.float32),
        "W1": jax.random.normal(ks[2], (embed_size * 2, num_hidden), jnp.float32) * 0.1,
        "b1": jax.random.normal(ks[3], (num_hidden,), jnp.float32) * 0.1,
        "W2": jax.random.normal(ks[4], (num_hidden, 1), jnp.float32) * 0.1,
        "b2": jax.random.normal(ks[5], (1,), jnp.float32) * 0.1,
    }
    u = jax.random.randint(ks[6], (batch,), 0, num_users, dtype=jnp.int32)
    v = jax.random.randint(ks[7], (batch,), 0, num_likes, dtype=jnp.int32)

    fwd = jax.jit(collab_filter_net)
    out = jax.block_until_ready(fwd(u, v, params))
    assert out.shape == (batch, 1)

    # Pure-JAX reference (eval-mode forward).  fc1 operands are cast to bf16 to
    # mirror the kernel's MXU inputs; accumulation is f32 in both.
    U = params["user_emb"][u]
    V = params["like_emb"][v]
    x = jnp.maximum(jnp.concatenate([U, V], axis=1), 0.0)
    xb = x.astype(jnp.bfloat16).astype(jnp.float32)
    W1b = params["W1"].astype(jnp.bfloat16).astype(jnp.float32)
    h = jnp.maximum(xb @ W1b + params["b1"], 0.0)
    ref = jnp.sum(h * params["W2"][:, 0][None, :], axis=1, keepdims=True) + params["b2"]

    err = float(jnp.max(jnp.abs(out - ref)))
    assert jnp.allclose(out, ref, atol=2e-3, rtol=2e-3), f"max abs err {err}"

    print("KERNEL_OK")
</pallas_src>

<mosaic_0001>
module attributes {stable_mosaic.version = 11 : i64} {
  func.func @_collab_kernel(%arg0: i32, %arg1: memref<256xi32, #tpu.memory_space<smem>>, %arg2: memref<256xi32, #tpu.memory_space<smem>>, %arg3: memref<40x128xf32, #tpu.memory_space<vmem>>, %arg4: memref<50x128xf32, #tpu.memory_space<vmem>>, %arg5: memref<256x128xbf16, #tpu.memory_space<vmem>>, %arg6: memref<1x128xf32, #tpu.memory_space<vmem>>, %arg7: memref<1x128xf32, #tpu.memory_space<vmem>>, %arg8: memref<1xf32, #tpu.memory_space<smem>>, %arg9: memref<1x128xf32, #tpu.memory_space<vmem>>, %arg10: memref<128x256xf32, #tpu.memory_space<vmem>>) attributes {dimension_semantics = [#tpu.dimension_semantics<parallel>], iteration_bounds = array<i64: 2>, scalar_prefetch = 2 : i64, scratch_operands = 1 : i64, tpu.core_type = #tpu.core_type<tc>, window_params = [{pipeline_mode = #tpu.pipeline_mode<synchronous>, transform_indices = @transform_0, window_bounds = array<i64: 40, 128>}, {pipeline_mode = #tpu.pipeline_mode<synchronous>, transform_indices = @transform_1, window_bounds = array<i64: 50, 128>}, {pipeline_mode = #tpu.pipeline_mode<synchronous>, transform_indices = @transform_2, window_bounds = array<i64: 256, 128>}, {pipeline_mode = #tpu.pipeline_mode<synchronous>, transform_indices = @transform_3, window_bounds = array<i64: 1, 128>}, {pipeline_mode = #tpu.pipeline_mode<synchronous>, transform_indices = @transform_4, window_bounds = array<i64: 1, 128>}, {transform_indices = @transform_5, window_bounds = array<i64: 1>}, {transform_indices = @transform_6, window_bounds = array<i64: 1, 128>}]} {
    %c128_i32 = arith.constant 128 : i32
    %0 = arith.muli %arg0, %c128_i32 : i32
    %c0_i32 = arith.constant 0 : i32
    %1 = arith.addi %0, %c0_i32 : i32
    %2 = arith.index_cast %1 : i32 to index
    %3 = memref.load %arg1[%2] : memref<256xi32, #tpu.memory_space<smem>>
    %c0_i32_0 = arith.constant 0 : i32
    %4 = arith.addi %0, %c0_i32_0 : i32
    %5 = arith.index_cast %4 : i32 to index
    %6 = memref.load %arg2[%5] : memref<256xi32, #tpu.memory_space<smem>>
    %7 = arith.index_cast %3 : i32 to index
    %c0 = arith.constant 0 : index
    %8 = vector.load %arg3[%7, %c0] : memref<40x128xf32, #tpu.memory_space<vmem>>, vector<1x128xf32>
    %c0_1 = arith.constant 0 : index
    %c0_2 = arith.constant 0 : index
    %9 = vector.load %arg10[%c0_1, %c0_2] : memref<128x256xf32, #tpu.memory_space<vmem>>, vector<1x128xf32>
    tpu.vector_store %arg10[%c0_1, %c0_2], %8 {strides = array<i32>} : memref<128x256xf32, #tpu.memory_space<vmem>>, vector<1x128xf32>,
    %10 = arith.index_cast %6 : i32 to index
    %c0_3 = arith.constant 0 : index
    %11 = vector.load %arg4[%10, %c0_3] : memref<50x128xf32, #tpu.memory_space<vmem>>, vector<1x128xf32>
    %c0_4 = arith.constant 0 : index
    %c128 = arith.constant 128 : index
    %12 = vector.load %arg10[%c0_4, %c128] : memref<128x256xf32, #tpu.memory_space<vmem>>, vector<1x128xf32>
    tpu.vector_store %arg10[%c0_4, %c128], %11 {strides = array<i32>} : memref<128x256xf32, #tpu.memory_space<vmem>>, vector<1x128xf32>,
    %c1_i32 = arith.constant 1 : i32
    %13 = arith.addi %0, %c1_i32 : i32
    %14 = arith.index_cast %13 : i32 to index
    %15 = memref.load %arg1[%14] : memref<256xi32, #tpu.memory_space<smem>>
    %c1_i32_5 = arith.constant 1 : i32
    %16 = arith.addi %0, %c1_i32_5 : i32
    %17 = arith.index_cast %16 : i32 to index
    %18 = memref.load %arg2[%17] : memref<256xi32, #tpu.memory_space<smem>>
    %19 = arith.index_cast %15 : i32 to index
    %c0_6 = arith.constant 0 : index
    %20 = vector.load %arg3[%19, %c0_6] : memref<40x128xf32, #tpu.memory_space<vmem>>, vector<1x128xf32>
    %c1 = arith.constant 1 : index
    %c0_7 = arith.constant 0 : index
    %21 = vector.load %arg10[%c1, %c0_7] : memref<128x256xf32, #tpu.memory_space<vmem>>, vector<1x128xf32>
    tpu.vector_store %arg10[%c1, %c0_7], %20 {strides = array<i32>} : memref<128x256xf32, #tpu.memory_space<vmem>>, vector<1x128xf32>,
    %22 = arith.index_cast %18 : i32 to index
    %c0_8 = arith.constant 0 : index
    %23 = vector.load %arg4[%22, %c0_8] : memref<50x128xf32, #tpu.memory_space<vmem>>, vector<1x128xf32>
    %c1_9 = arith.constant 1 : index
    %c128_10 = arith.constant 128 : index
    %24 = vector.load %arg10[%c1_9, %c128_10] : memref<128x256xf32, #tpu.memory_space<vmem>>, vector<1x128xf32>
    tpu.vector_store %arg10[%c1_9, %c128_10], %23 {strides = array<i32>} : memref<128x256xf32, #tpu.memory_space<vmem>>, vector<1x128xf32>,
    %c2_i32 = arith.constant 2 : i32
    %25 = arith.addi %0, %c2_i32 : i32
    %26 = arith.index_cast %25 : i32 to index
    %27 = memref.load %arg1[%26] : memref<256xi32, #tpu.memory_space<smem>>
    %c2_i32_11 = arith.constant 2 : i32
    %28 = arith.addi %0, %c2_i32_11 : i32
    %29 = arith.index_cast %28 : i32 to index
    %30 = memref.load %arg2[%29] : memref<256xi32, #tpu.memory_space<smem>>
    %31 = arith.index_cast %27 : i32 to index
    %c0_12 = arith.constant 0 : index
    %32 = vector.load %arg3[%31, %c0_12] : memref<40x128xf32, #tpu.memory_space<vmem>>, vector<1x128xf32>
    %c2 = arith.constant 2 : index
    %c0_13 = arith.constant 0 : index
    %33 = vector.load %arg10[%c2, %c0_13] : memref<128x256xf32, #tpu.memory_space<vmem>>, vector<1x128xf32>
    tpu.vector_store %arg10[%c2, %c0_13], %32 {strides = array<i32>} : memref<128x256xf32, #tpu.memory_space<vmem>>, vector<1x128xf32>,
    %34 = arith.index_cast %30 : i32 to index
    %c0_14 = arith.constant 0 : index
    %35 = vector.load %arg4[%34, %c0_14] : memref<50x128xf32, #tpu.memory_space<vmem>>, vector<1x128xf32>
    %c2_15 = arith.constant 2 : index
    %c128_16 = arith.constant 128 : index
    %36 = vector.load %arg10[%c2_15, %c128_16] : memref<128x256xf32, #tpu.memory_space<vmem>>, vector<1x128xf32>
    tpu.vector_store %arg10[%c2_15, %c128_16], %35 {strides = array<i32>} : memref<128x256xf32, #tpu.memory_space<vmem>>, vector<1x128xf32>,
    %c3_i32 = arith.constant 3 : i32
    %37 = arith.addi %0, %c3_i32 : i32
    %38 = arith.index_cast %37 : i32 to index
    %39 = memref.load %arg1[%38] : memref<256xi32, #tpu.memory_space<smem>>
    %c3_i32_17 = arith.constant 3 : i32
    %40 = arith.addi %0, %c3_i32_17 : i32
    %41 = arith.index_cast %40 : i32 to index
    %42 = memref.load %arg2[%41] : memref<256xi32, #tpu.memory_space<smem>>
    %43 = arith.index_cast %39 : i32 to index
    %c0_18 = arith.constant 0 : index
    %44 = vector.load %arg3[%43, %c0_18] : memref<40x128xf32, #tpu.memory_space<vmem>>, vector<1x128xf32>
    %c3 = arith.constant 3 : index
    %c0_19 = arith.constant 0 : index
    %45 = vector.load %arg10[%c3, %c0_19] : memref<128x256xf32, #tpu.memory_space<vmem>>, vector<1x128xf32>
    tpu.vector_store %arg10[%c3, %c0_19], %44 {strides = array<i32>} : memref<128x256xf32, #tpu.memory_space<vmem>>, vector<1x128xf32>,
    %46 = arith.index_cast %42 : i32 to index
    %c0_20 = arith.constant 0 : index
    %47 = vector.load %arg4[%46, %c0_20] : memref<50x128xf32, #tpu.memory_space<vmem>>, vector<1x128xf32>
    %c3_21 = arith.constant 3 : index
    %c128_22 = arith.constant 128 : index
    %48 = vector.load %arg10[%c3_21, %c128_22] : memref<128x256xf32, #tpu.memory_space<vmem>>, vector<1x128xf32>
    tpu.vector_store %arg10[%c3_21, %c128_22], %47 {strides = array<i32>} : memref<128x256xf32, #tpu.memory_space<vmem>>, vector<1x128xf32>,
    %c4_i32 = arith.constant 4 : i32
    %49 = arith.addi %0, %c4_i32 : i32
    %50 = arith.index_cast %49 : i32 to index
    %51 = memref.load %arg1[%50] : memref<256xi32, #tpu.memory_space<smem>>
    %c4_i32_23 = arith.constant 4 : i32
    %52 = arith.addi %0, %c4_i32_23 : i32
    %53 = arith.index_cast %52 : i32 to index
    %54 = memref.load %arg2[%53] : memref<256xi32, #tpu.memory_space<smem>>
    %55 = arith.index_cast %51 : i32 to index
    %c0_24 = arith.constant 0 : index
    %56 = vector.load %arg3[%55, %c0_24] : memref<40x128xf32, #tpu.memory_space<vmem>>, vector<1x128xf32>
    %c4 = arith.constant 4 : index
    %c0_25 = arith.constant 0 : index
    %57 = vector.load %arg10[%c4, %c0_25] : memref<128x256xf32, #tpu.memory_space<vmem>>, vector<1x128xf32>
    tpu.vector_store %arg10[%c4, %c0_25], %56 {strides = array<i32>} : memref<128x256xf32, #tpu.memory_space<vmem>>, vector<1x128xf32>,
    %58 = arith.index_cast %54 : i32 to index
    %c0_26 = arith.constant 0 : index
    %59 = vector.load %arg4[%58, %c0_26] : memref<50x128xf32, #tpu.memory_space<vmem>>, vector<1x128xf32>
    %c4_27 = arith.constant 4 : index
    %c128_28 = arith.constant 128 : index
    %60 = vector.load %arg10[%c4_27, %c128_28] : memref<128x256xf32, #tpu.memory_space<vmem>>, vector<1x128xf32>
    tpu.vector_store %arg10[%c4_27, %c128_28], %59 {strides = array<i32>} : memref<128x256xf32, #tpu.memory_space<vmem>>, vector<1x128xf32>,
    %c5_i32 = arith.constant 5 : i32
    %61 = arith.addi %0, %c5_i32 : i32
    %62 = arith.index_cast %61 : i32 to index
    %63 = memref.load %arg1[%62] : memref<256xi32, #tpu.memory_space<smem>>
    %c5_i32_29 = arith.constant 5 : i32
    %64 = arith.addi %0, %c5_i32_29 : i32
    %65 = arith.index_cast %64 : i32 to index
    %66 = memref.load %arg2[%65] : memref<256xi32, #tpu.memory_space<smem>>
    %67 = arith.index_cast %63 : i32 to index
    %c0_30 = arith.constant 0 : index
    %68 = vector.load %arg3[%67, %c0_30] : memref<40x128xf32, #tpu.memory_space<vmem>>, vector<1x128xf32>
    %c5 = arith.constant 5 : index
    %c0_31 = arith.constant 0 : index
    %69 = vector.load %arg10[%c5, %c0_31] : memref<128x256xf32, #tpu.memory_space<vmem>>, vector<1x128xf32>
    tpu.vector_store %arg10[%c5, %c0_31], %68 {strides = array<i32>} : memref<128x256xf32, #tpu.memory_space<vmem>>, vector<1x128xf32>,
    %70 = arith.index_cast %66 : i32 to index
    %c0_32 = arith.constant 0 : index
    %71 = vector.load %arg4[%70, %c0_32] : memref<50x128xf32, #tpu.memory_space<vmem>>, vector<1x128xf32>
    %c5_33 = arith.constant 5 : index
    %c128_34 = arith.constant 128 : index
    %72 = vector.load %arg10[%c5_33, %c128_34] : memref<128x256xf32, #tpu.memory_space<vmem>>, vector<1x128xf32>
    tpu.vector_store %arg10[%c5_33, %c128_34], %71 {strides = array<i32>} : memref<128x256xf32, #tpu.memory_space<vmem>>, vector<1x128xf32>,
    %c6_i32 = arith.constant 6 : i32
    %73 = arith.addi %0, %c6_i32 : i32
    %74 = arith.index_cast %73 : i32 to index
    %75 = memref.load %arg1[%74] : memref<256xi32, #tpu.memory_space<smem>>
    %c6_i32_35 = arith.constant 6 : i32
    %76 = arith.addi %0, %c6_i32_35 : i32
    %77 = arith.index_cast %76 : i32 to index
    %78 = memref.load %arg2[%77] : memref<256xi32, #tpu.memory_space<smem>>
    %79 = arith.index_cast %75 : i32 to index
    %c0_36 = arith.constant 0 : index
    %80 = vector.load %arg3[%79, %c0_36] : memref<40x128xf32, #tpu.memory_space<vmem>>, vector<1x128xf32>
    %c6 = arith.constant 6 : index
    %c0_37 = arith.constant 0 : index
    %81 = vector.load %arg10[%c6, %c0_37] : memref<128x256xf32, #tpu.memory_space<vmem>>, vector<1x128xf32>
    tpu.vector_store %arg10[%c6, %c0_37], %80 {strides = array<i32>} : memref<128x256xf32, #tpu.memory_space<vmem>>, vector<1x128xf32>,
    %82 = arith.index_cast %78 : i32 to index
    %c0_38 = arith.constant 0 : index
    %83 = vector.load %arg4[%82, %c0_38] : memref<50x128xf32, #tpu.memory_space<vmem>>, vector<1x128xf32>
    %c6_39 = arith.constant 6 : index
    %c128_40 = arith.constant 128 : index
    %84 = vector.load %arg10[%c6_39, %c128_40] : memref<128x256xf32, #tpu.memory_space<vmem>>, vector<1x128xf32>
    tpu.vector_store %arg10[%c6_39, %c128_40], %83 {strides = array<i32>} : memref<128x256xf32, #tpu.memory_space<vmem>>, vector<1x128xf32>,
    %c7_i32 = arith.constant 7 : i32
    %85 = arith.addi %0, %c7_i32 : i32
    %86 = arith.index_cast %85 : i32 to index
    %87 = memref.load %arg1[%86] : memref<256xi32, #tpu.memory_space<smem>>
    %c7_i32_41 = arith.constant 7 : i32
    %88 = arith.addi %0, %c7_i32_41 : i32
    %89 = arith.index_cast %88 : i32 to index
    %90 = memref.load %arg2[%89] : memref<256xi32, #tpu.memory_space<smem>>
    %91 = arith.index_cast %87 : i32 to index
    %c0_42 = arith.constant 0 : index
    %92 = vector.load %arg3[%91, %c0_42] : memref<40x128xf32, #tpu.memory_space<vmem>>, vector<1x128xf32>
    %c7 = arith.constant 7 : index
    %c0_43 = arith.constant 0 : index
    %93 = vector.load %arg10[%c7, %c0_43] : memref<128x256xf32, #tpu.memory_space<vmem>>, vector<1x128xf32>
    tpu.vector_store %arg10[%c7, %c0_43], %92 {strides = array<i32>} : memref<128x256xf32, #tpu.memory_space<vmem>>, vector<1x128xf32>,
    %94 = arith.index_cast %90 : i32 to index
    %c0_44 = arith.constant 0 : index
    %95 = vector.load %arg4[%94, %c0_44] : memref<50x128xf32, #tpu.memory_space<vmem>>, vector<1x128xf32>
    %c7_45 = arith.constant 7 : index
    %c128_46 = arith.constant 128 : index
    %96 = vector.load %arg10[%c7_45, %c128_46] : memref<128x256xf32, #tpu.memory_space<vmem>>, vector<1x128xf32>
    tpu.vector_store %arg10[%c7_45, %c128_46], %95 {strides = array<i32>} : memref<128x256xf32, #tpu.memory_space<vmem>>, vector<1x128xf32>,
    %c8_i32 = arith.constant 8 : i32
    %97 = arith.addi %0, %c8_i32 : i32
    %98 = arith.index_cast %97 : i32 to index
    %99 = memref.load %arg1[%98] : memref<256xi32, #tpu.memory_space<smem>>
    %c8_i32_47 = arith.constant 8 : i32
    %100 = arith.addi %0, %c8_i32_47 : i32
    %101 = arith.index_cast %100 : i32 to index
    %102 = memref.load %arg2[%101] : memref<256xi32, #tpu.memory_space<smem>>
    %103 = arith.index_cast %99 : i32 to index
    %c0_48 = arith.constant 0 : index
    %104 = vector.load %arg3[%103, %c0_48] : memref<40x128xf32, #tpu.memory_space<vmem>>, vector<1x128xf32>
    %c8 = arith.constant 8 : index
    %c0_49 = arith.constant 0 : index
    %105 = vector.load %arg10[%c8, %c0_49] : memref<128x256xf32, #tpu.memory_space<vmem>>, vector<1x128xf32>
    tpu.vector_store %arg10[%c8, %c0_49], %104 {strides = array<i32>} : memref<128x256xf32, #tpu.memory_space<vmem>>, vector<1x128xf32>,
    %106 = arith.index_cast %102 : i32 to index
    %c0_50 = arith.constant 0 : index
    %107 = vector.load %arg4[%106, %c0_50] : memref<50x128xf32, #tpu.memory_space<vmem>>, vector<1x128xf32>
    %c8_51 = arith.constant 8 : index
    %c128_52 = arith.constant 128 : index
    %108 = vector.load %arg10[%c8_51, %c128_52] : memref<128x256xf32, #tpu.memory_space<vmem>>, vector<1x128xf32>
    tpu.vector_store %arg10[%c8_51, %c128_52], %107 {strides = array<i32>} : memref<128x256xf32, #tpu.memory_space<vmem>>, vector<1x128xf32>,
    %c9_i32 = arith.constant 9 : i32
    %109 = arith.addi %0, %c9_i32 : i32
    %110 = arith.index_cast %109 : i32 to index
    %111 = memref.load %arg1[%110] : memref<256xi32, #tpu.memory_space<smem>>
    %c9_i32_53 = arith.constant 9 : i32
    %112 = arith.addi %0, %c9_i32_53 : i32
    %113 = arith.index_cast %112 : i32 to index
    %114 = memref.load %arg2[%113] : memref<256xi32, #tpu.memory_space<smem>>
    %115 = arith.index_cast %111 : i32 to index
    %c0_54 = arith.constant 0 : index
    %116 = vector.load %arg3[%115, %c0_54] : memref<40x128xf32, #tpu.memory_space<vmem>>, vector<1x128xf32>
    %c9 = arith.constant 9 : index
    %c0_55 = arith.constant 0 : index
    %117 = vector.load %arg10[%c9, %c0_55] : memref<128x256xf32, #tpu.memory_space<vmem>>, vector<1x128xf32>
    tpu.vector_store %arg10[%c9, %c0_55], %116 {strides = array<i32>} : memref<128x256xf32, #tpu.memory_space<vmem>>, vector<1x128xf32>,
    %118 = arith.index_cast %114 : i32 to index
    %c0_56 = arith.constant 0 : index
    %119 = vector.load %arg4[%118, %c0_56] : memref<50x128xf32, #tpu.memory_space<vmem>>, vector<1x128xf32>
    %c9_57 = arith.constant 9 : index
    %c128_58 = arith.constant 128 : index
    %120 = vector.load %arg10[%c9_57, %c128_58] : memref<128x256xf32, #tpu.memory_space<vmem>>, vector<1x128xf32>
    tpu.vector_store %arg10[%c9_57, %c128_58], %119 {strides = array<i32>} : memref<128x256xf32, #tpu.memory_space<vmem>>, vector<1x128xf32>,
    %c10_i32 = arith.constant 10 : i32
    %121 = arith.addi %0, %c10_i32 : i32
    %122 = arith.index_cast %121 : i32 to index
    %123 = memref.load %arg1[%122] : memref<256xi32, #tpu.memory_space<smem>>
    %c10_i32_59 = arith.constant 10 : i32
    %124 = arith.addi %0, %c10_i32_59 : i32
    %125 = arith.index_cast %124 : i32 to index
    %126 = memref.load %arg2[%125] : memref<256xi32, #tpu.memory_space<smem>>
    %127 = arith.index_cast %123 : i32 to index
    %c0_60 = arith.constant 0 : index
    %128 = vector.load %arg3[%127, %c0_60] : memref<40x128xf32, #tpu.memory_space<vmem>>, vector<1x128xf32>
    %c10 = arith.constant 10 : index
    %c0_61 = arith.constant 0 : index
    %129 = vector.load %arg10[%c10, %c0_61] : memref<128x256xf32, #tpu.memory_space<vmem>>, vector<1x128xf32>
    tpu.vector_store %arg10[%c10, %c0_61], %128 {strides = array<i32>} : memref<128x256xf32, #tpu.memory_space<vmem>>, vector<1x128xf32>,
    %130 = arith.index_cast %126 : i32 to index
    %c0_62 = arith.constant 0 : index
    %131 = vector.load %arg4[%130, %c0_62] : memref<50x128xf32, #tpu.memory_space<vmem>>, vector<1x128xf32>
    %c10_63 = arith.constant 10 : index
    %c128_64 = arith.constant 128 : index
    %132 = vector.load %arg10[%c10_63, %c128_64] : memref<128x256xf32, #tpu.memory_space<vmem>>, vector<1x128xf32>
    tpu.vector_store %arg10[%c10_63, %c128_64], %131 {strides = array<i32>} : memref<128x256xf32, #tpu.memory_space<vmem>>, vector<1x128xf32>,
    %c11_i32 = arith.constant 11 : i32
    %133 = arith.addi %0, %c11_i32 : i32
    %134 = arith.index_cast %133 : i32 to index
    %135 = memref.load %arg1[%134] : memref<256xi32, #tpu.memory_space<smem>>
    %c11_i32_65 = arith.constant 11 : i32
    %136 = arith.addi %0, %c11_i32_65 : i32
    %137 = arith.index_cast %136 : i32 to index
    %138 = memref.load %arg2[%137] : memref<256xi32, #tpu.memory_space<smem>>
    %139 = arith.index_cast %135 : i32 to index
    %c0_66 = arith.constant 0 : index
    %140 = vector.load %arg3[%139, %c0_66] : memref<40x128xf32, #tpu.memory_space<vmem>>, vector<1x128xf32>
    %c11 = arith.constant 11 : index
    %c0_67 = arith.constant 0 : index
    %141 = vector.load %arg10[%c11, %c0_67] : memref<128x256xf32, #tpu.memory_space<vmem>>, vector<1x128xf32>
    tpu.vector_store %arg10[%c11, %c0_67], %140 {strides = array<i32>} : memref<128x256xf32, #tpu.memory_space<vmem>>, vector<1x128xf32>,
    %142 = arith.index_cast %138 : i32 to index
    %c0_68 = arith.constant 0 : index
    %143 = vector.load %arg4[%142, %c0_68] : memref<50x128xf32, #tpu.memory_space<vmem>>, vector<1x128xf32>
    %c11_69 = arith.constant 11 : index
    %c128_70 = arith.constant 128 : index
    %144 = vector.load %arg10[%c11_69, %c128_70] : memref<128x256xf32, #tpu.memory_space<vmem>>, vector<1x128xf32>
    tpu.vector_store %arg10[%c11_69, %c128_70], %143 {strides = array<i32>} : memref<128x256xf32, #tpu.memory_space<vmem>>, vector<1x128xf32>,
    %c12_i32 = arith.constant 12 : i32
    %145 = arith.addi %0, %c12_i32 : i32
    %146 = arith.index_cast %145 : i32 to index
    %147 = memref.load %arg1[%146] : memref<256xi32, #tpu.memory_space<smem>>
    %c12_i32_71 = arith.constant 12 : i32
    %148 = arith.addi %0, %c12_i32_71 : i32
    %149 = arith.index_cast %148 : i32 to index
    %150 = memref.load %arg2[%149] : memref<256xi32, #tpu.memory_space<smem>>
    %151 = arith.index_cast %147 : i32 to index
    %c0_72 = arith.constant 0 : index
    %152 = vector.load %arg3[%151, %c0_72] : memref<40x128xf32, #tpu.memory_space<vmem>>, vector<1x128xf32>
    %c12 = arith.constant 12 : index
    %c0_73 = arith.constant 0 : index
    %153 = vector.load %arg10[%c12, %c0_73] : memref<128x256xf32, #tpu.memory_space<vmem>>, vector<1x128xf32>
    tpu.vector_store %arg10[%c12, %c0_73], %152 {strides = array<i32>} : memref<128x256xf32, #tpu.memory_space<vmem>>, vector<1x128xf32>,
    %154 = arith.index_cast %150 : i32 to index
    %c0_74 = arith.constant 0 : index
    %155 = vector.load %arg4[%154, %c0_74] : memref<50x128xf32, #tpu.memory_space<vmem>>, vector<1x128xf32>
    %c12_75 = arith.constant 12 : index
    %c128_76 = arith.constant 128 : index
    %156 = vector.load %arg10[%c12_75, %c128_76] : memref<128x256xf32, #tpu.memory_space<vmem>>, vector<1x128xf32>
    tpu.vector_store %arg10[%c12_75, %c128_76], %155 {strides = array<i32>} : memref<128x256xf32, #tpu.memory_space<vmem>>, vector<1x128xf32>,
    %c13_i32 = arith.constant 13 : i32
    %157 = arith.addi %0, %c13_i32 : i32
    %158 = arith.index_cast %157 : i32 to index
    %159 = memref.load %arg1[%158] : memref<256xi32, #tpu.memory_space<smem>>
    %c13_i32_77 = arith.constant 13 : i32
    %160 = arith.addi %0, %c13_i32_77 : i32
    %161 = arith.index_cast %160 : i32 to index
    %162 = memref.load %arg2[%161] : memref<256xi32, #tpu.memory_space<smem>>
    %163 = arith.index_cast %159 : i32 to index
    %c0_78 = arith.constant 0 : index
    %164 = vector.load %arg3[%163, %c0_78] : memref<40x128xf32, #tpu.memory_space<vmem>>, vector<1x128xf32>
    %c13 = arith.constant 13 : index
    %c0_79 = arith.constant 0 : index
    %165 = vector.load %arg10[%c13, %c0_79] : memref<128x256xf32, #tpu.memory_space<vmem>>, vector<1x128xf32>
    tpu.vector_store %arg10[%c13, %c0_79], %164 {strides = array<i32>} : memref<128x256xf32, #tpu.memory_space<vmem>>, vector<1x128xf32>,
    %166 = arith.index_cast %162 : i32 to index
    %c0_80 = arith.constant 0 : index
    %167 = vector.load %arg4[%166, %c0_80] : memref<50x128xf32, #tpu.memory_space<vmem>>, vector<1x128xf32>
    %c13_81 = arith.constant 13 : index
    %c128_82 = arith.constant 128 : index
    %168 = vector.load %arg10[%c13_81, %c128_82] : memref<128x256xf32, #tpu.memory_space<vmem>>, vector<1x128xf32>
    tpu.vector_store %arg10[%c13_81, %c128_82], %167 {strides = array<i32>} : memref<128x256xf32, #tpu.memory_space<vmem>>, vector<1x128xf32>,
    %c14_i32 = arith.constant 14 : i32
    %169 = arith.addi %0, %c14_i32 : i32
    %170 = arith.index_cast %169 : i32 to index
    %171 = memref.load %arg1[%170] : memref<256xi32, #tpu.memory_space<smem>>
    %c14_i32_83 = arith.constant 14 : i32
    %172 = arith.addi %0, %c14_i32_83 : i32
    %173 = arith.index_cast %172 : i32 to index
    %174 = memref.load %arg2[%173] : memref<256xi32, #tpu.memory_space<smem>>
    %175 = arith.index_cast %171 : i32 to index
    %c0_84 = arith.constant 0 : index
    %176 = vector.load %arg3[%175, %c0_84] : memref<40x128xf32, #tpu.memory_space<vmem>>, vector<1x128xf32>
    %c14 = arith.constant 14 : index
    %c0_85 = arith.constant 0 : index
    %177 = vector.load %arg10[%c14, %c0_85] : memref<128x256xf32, #tpu.memory_space<vmem>>, vector<1x128xf32>
    tpu.vector_store %arg10[%c14, %c0_85], %176 {strides = array<i32>} : memref<128x256xf32, #tpu.memory_space<vmem>>, vector<1x128xf32>,
    %178 = arith.index_cast %174 : i32 to index
    %c0_86 = arith.constant 0 : index
    %179 = vector.load %arg4[%178, %c0_86] : memref<50x128xf32, #tpu.memory_space<vmem>>, vector<1x128xf32>
    %c14_87 = arith.constant 14 : index
    %c128_88 = arith.constant 128 : index
    %180 = vector.load %arg10[%c14_87, %c128_88] : memref<128x256xf32, #tpu.memory_space<vmem>>, vector<1x128xf32>
    tpu.vector_store %arg10[%c14_87, %c128_88], %179 {strides = array<i32>} : memref<128x256xf32, #tpu.memory_space<vmem>>, vector<1x128xf32>,
    %c15_i32 = arith.constant 15 : i32
    %181 = arith.addi %0, %c15_i32 : i32
    %182 = arith.index_cast %181 : i32 to index
    %183 = memref.load %arg1[%182] : memref<256xi32, #tpu.memory_space<smem>>
    %c15_i32_89 = arith.constant 15 : i32
    %184 = arith.addi %0, %c15_i32_89 : i32
    %185 = arith.index_cast %184 : i32 to index
    %186 = memref.load %arg2[%185] : memref<256xi32, #tpu.memory_space<smem>>
    %187 = arith.index_cast %183 : i32 to index
    %c0_90 = arith.constant 0 : index
    %188 = vector.load %arg3[%187, %c0_90] : memref<40x128xf32, #tpu.memory_space<vmem>>, vector<1x128xf32>
    %c15 = arith.constant 15 : index
    %c0_91 = arith.constant 0 : index
    %189 = vector.load %arg10[%c15, %c0_91] : memref<128x256xf32, #tpu.memory_space<vmem>>, vector<1x128xf32>
    tpu.vector_store %arg10[%c15, %c0_91], %188 {strides = array<i32>} : memref<128x256xf32, #tpu.memory_space<vmem>>, vector<1x128xf32>,
    %190 = arith.index_cast %186 : i32 to index
    %c0_92 = arith.constant 0 : index
    %191 = vector.load %arg4[%190, %c0_92] : memref<50x128xf32, #tpu.memory_space<vmem>>, vector<1x128xf32>
    %c15_93 = arith.constant 15 : index
    %c128_94 = arith.constant 128 : index
    %192 = vector.load %arg10[%c15_93, %c128_94] : memref<128x256xf32, #tpu.memory_space<vmem>>, vector<1x128xf32>
    tpu.vector_store %arg10[%c15_93, %c128_94], %191 {strides = array<i32>} : memref<128x256xf32, #tpu.memory_space<vmem>>, vector<1x128xf32>,
    %c16_i32 = arith.constant 16 : i32
    %193 = arith.addi %0, %c16_i32 : i32
    %194 = arith.index_cast %193 : i32 to index
    %195 = memref.load %arg1[%194] : memref<256xi32, #tpu.memory_space<smem>>
    %c16_i32_95 = arith.constant 16 : i32
    %196 = arith.addi %0, %c16_i32_95 : i32
    %197 = arith.index_cast %196 : i32 to index
    %198 = memref.load %arg2[%197] : memref<256xi32, #tpu.memory_space<smem>>
    %199 = arith.index_cast %195 : i32 to index
    %c0_96 = arith.constant 0 : index
    %200 = vector.load %arg3[%199, %c0_96] : memref<40x128xf32, #tpu.memory_space<vmem>>, vector<1x128xf32>
    %c16 = arith.constant 16 : index
    %c0_97 = arith.constant 0 : index
    %201 = vector.load %arg10[%c16, %c0_97] : memref<128x256xf32, #tpu.memory_space<vmem>>, vector<1x128xf32>
    tpu.vector_store %arg10[%c16, %c0_97], %200 {strides = array<i32>} : memref<128x256xf32, #tpu.memory_space<vmem>>, vector<1x128xf32>,
    %202 = arith.index_cast %198 : i32 to index
    %c0_98 = arith.constant 0 : index
    %203 = vector.load %arg4[%202, %c0_98] : memref<50x128xf32, #tpu.memory_space<vmem>>, vector<1x128xf32>
    %c16_99 = arith.constant 16 : index
    %c128_100 = arith.constant 128 : index
    %204 = vector.load %arg10[%c16_99, %c128_100] : memref<128x256xf32, #tpu.memory_space<vmem>>, vector<1x128xf32>
    tpu.vector_store %arg10[%c16_99, %c128_100], %203 {strides = array<i32>} : memref<128x256xf32, #tpu.memory_space<vmem>>, vector<1x128xf32>,
    %c17_i32 = arith.constant 17 : i32
    %205 = arith.addi %0, %c17_i32 : i32
    %206 = arith.index_cast %205 : i32 to index
    %207 = memref.load %arg1[%206] : memref<256xi32, #tpu.memory_space<smem>>
    %c17_i32_101 = arith.constant 17 : i32
    %208 = arith.addi %0, %c17_i32_101 : i32
    %209 = arith.index_cast %208 : i32 to index
    %210 = memref.load %arg2[%209] : memref<256xi32, #tpu.memory_space<smem>>
    %211 = arith.index_cast %207 : i32 to index
    %c0_102 = arith.constant 0 : index
    %212 = vector.load %arg3[%211, %c0_102] : memref<40x128xf32, #tpu.memory_space<vmem>>, vector<1x128xf32>
    %c17 = arith.constant 17 : index
    %c0_103 = arith.constant 0 : index
    %213 = vector.load %arg10[%c17, %c0_103] : memref<128x256xf32, #tpu.memory_space<vmem>>, vector<1x128xf32>
    tpu.vector_store %arg10[%c17, %c0_103], %212 {strides = array<i32>} : memref<128x256xf32, #tpu.memory_space<vmem>>, vector<1x128xf32>,
    %214 = arith.index_cast %210 : i32 to index
    %c0_104 = arith.constant 0 : index
    %215 = vector.load %arg4[%214, %c0_104] : memref<50x128xf32, #tpu.memory_space<vmem>>, vector<1x128xf32>
    %c17_105 = arith.constant 17 : index
    %c128_106 = arith.constant 128 : index
    %216 = vector.load %arg10[%c17_105, %c128_106] : memref<128x256xf32, #tpu.memory_space<vmem>>, vector<1x128xf32>
    tpu.vector_store %arg10[%c17_105, %c128_106], %215 {strides = array<i32>} : memref<128x256xf32, #tpu.memory_space<vmem>>, vector<1x128xf32>,
    %c18_i32 = arith.constant 18 : i32
    %217 = arith.addi %0, %c18_i32 : i32
    %218 = arith.index_cast %217 : i32 to index
    %219 = memref.load %arg1[%218] : memref<256xi32, #tpu.memory_space<smem>>
    %c18_i32_107 = arith.constant 18 : i32
    %220 = arith.addi %0, %c18_i32_107 : i32
    %221 = arith.index_cast %220 : i32 to index
    %222 = memref.load %arg2[%221] : memref<256xi32, #tpu.memory_space<smem>>
    %223 = arith.index_cast %219 : i32 to index
    %c0_108 = arith.constant 0 : index
    %224 = vector.load %arg3[%223, %c0_108] : memref<40x128xf32, #tpu.memory_space<vmem>>, vector<1x128xf32>
    %c18 = arith.constant 18 : index
    %c0_109 = arith.constant 0 : index
    %225 = vector.load %arg10[%c18, %c0_109] : memref<128x256xf32, #tpu.memory_space<vmem>>, vector<1x128xf32>
    tpu.vector_store %arg10[%c18, %c0_109], %224 {strides = array<i32>} : memref<128x256xf32, #tpu.memory_space<vmem>>, vector<1x128xf32>,
    %226 = arith.index_cast %222 : i32 to index
    %c0_110 = arith.constant 0 : index
    %227 = vector.load %arg4[%226, %c0_110] : memref<50x128xf32, #tpu.memory_space<vmem>>, vector<1x128xf32>
    %c18_111 = arith.constant 18 : index
    %c128_112 = arith.constant 128 : index
    %228 = vector.load %arg10[%c18_111, %c128_112] : memref<128x256xf32, #tpu.memory_space<vmem>>, vector<1x128xf32>
    tpu.vector_store %arg10[%c18_111, %c128_112], %227 {strides = array<i32>} : memref<128x256xf32, #tpu.memory_space<vmem>>, vector<1x128xf32>,
    %c19_i32 = arith.constant 19 : i32
    %229 = arith.addi %0, %c19_i32 : i32
    %230 = arith.index_cast %229 : i32 to index
    %231 = memref.load %arg1[%230] : memref<256xi32, #tpu.memory_space<smem>>
    %c19_i32_113 = arith.constant 19 : i32
    %232 = arith.addi %0, %c19_i32_113 : i32
    %233 = arith.index_cast %232 : i32 to index
    %234 = memref.load %arg2[%233] : memref<256xi32, #tpu.memory_space<smem>>
    %235 = arith.index_cast %231 : i32 to index
    %c0_114 = arith.constant 0 : index
    %236 = vector.load %arg3[%235, %c0_114] : memref<40x128xf32, #tpu.memory_space<vmem>>, vector<1x128xf32>
    %c19 = arith.constant 19 : index
    %c0_115 = arith.constant 0 : index
    %237 = vector.load %arg10[%c19, %c0_115] : memref<128x256xf32, #tpu.memory_space<vmem>>, vector<1x128xf32>
    tpu.vector_store %arg10[%c19, %c0_115], %236 {strides = array<i32>} : memref<128x256xf32, #tpu.memory_space<vmem>>, vector<1x128xf32>,
    %238 = arith.index_cast %234 : i32 to index
    %c0_116 = arith.constant 0 : index
    %239 = vector.load %arg4[%238, %c0_116] : memref<50x128xf32, #tpu.memory_space<vmem>>, vector<1x128xf32>
    %c19_117 = arith.constant 19 : index
    %c128_118 = arith.constant 128 : index
    %240 = vector.load %arg10[%c19_117, %c128_118] : memref<128x256xf32, #tpu.memory_space<vmem>>, vector<1x128xf32>
    tpu.vector_store %arg10[%c19_117, %c128_118], %239 {strides = array<i32>} : memref<128x256xf32, #tpu.memory_space<vmem>>, vector<1x128xf32>,
    %c20_i32 = arith.constant 20 : i32
    %241 = arith.addi %0, %c20_i32 : i32
    %242 = arith.index_cast %241 : i32 to index
    %243 = memref.load %arg1[%242] : memref<256xi32, #tpu.memory_space<smem>>
    %c20_i32_119 = arith.constant 20 : i32
    %244 = arith.addi %0, %c20_i32_119 : i32
    %245 = arith.index_cast %244 : i32 to index
    %246 = memref.load %arg2[%245] : memref<256xi32, #tpu.memory_space<smem>>
    %247 = arith.index_cast %243 : i32 to index
    %c0_120 = arith.constant 0 : index
    %248 = vector.load %arg3[%247, %c0_120] : memref<40x128xf32, #tpu.memory_space<vmem>>, vector<1x128xf32>
    %c20 = arith.constant 20 : index
    %c0_121 = arith.constant 0 : index
    %249 = vector.load %arg10[%c20, %c0_121] : memref<128x256xf32, #tpu.memory_space<vmem>>, vector<1x128xf32>
    tpu.vector_store %arg10[%c20, %c0_121], %248 {strides = array<i32>} : memref<128x256xf32, #tpu.memory_space<vmem>>, vector<1x128xf32>,
    %250 = arith.index_cast %246 : i32 to index
    %c0_122 = arith.constant 0 : index
    %251 = vector.load %arg4[%250, %c0_122] : memref<50x128xf32, #tpu.memory_space<vmem>>, vector<1x128xf32>
    %c20_123 = arith.constant 20 : index
    %c128_124 = arith.constant 128 : index
    %252 = vector.load %arg10[%c20_123, %c128_124] : memref<128x256xf32, #tpu.memory_space<vmem>>, vector<1x128xf32>
    tpu.vector_store %arg10[%c20_123, %c128_124], %251 {strides = array<i32>} : memref<128x256xf32, #tpu.memory_space<vmem>>, vector<1x128xf32>,
    %c21_i32 = arith.constant 21 : i32
    %253 = arith.addi %0, %c21_i32 : i32
    %254 = arith.index_cast %253 : i32 to index
    %255 = memref.load %arg1[%254] : memref<256xi32, #tpu.memory_space<smem>>
    %c21_i32_125 = arith.constant 21 : i32
    %256 = arith.addi %0, %c21_i32_125 : i32
    %257 = arith.index_cast %256 : i32 to index
    %258 = memref.load %arg2[%257] : memref<256xi32, #tpu.memory_space<smem>>
    %259 = arith.index_cast %255 : i32 to index
    %c0_126 = arith.constant 0 : index
    %260 = vector.load %arg3[%259, %c0_126] : memref<40x128xf32, #tpu.memory_space<vmem>>, vector<1x128xf32>
    %c21 = arith.constant 21 : index
    %c0_127 = arith.constant 0 : index
    %261 = vector.load %arg10[%c21, %c0_127] : memref<128x256xf32, #tpu.memory_space<vmem>>, vector<1x128xf32>
    tpu.vector_store %arg10[%c21, %c0_127], %260 {strides = array<i32>} : memref<128x256xf32, #tpu.memory_space<vmem>>, vector<1x128xf32>,
    %262 = arith.index_cast %258 : i32 to index
    %c0_128 = arith.constant 0 : index
    %263 = vector.load %arg4[%262, %c0_128] : memref<50x128xf32, #tpu.memory_space<vmem>>, vector<1x128xf32>
    %c21_129 = arith.constant 21 : index
    %c128_130 = arith.constant 128 : index
    %264 = vector.load %arg10[%c21_129, %c128_130] : memref<128x256xf32, #tpu.memory_space<vmem>>, vector<1x128xf32>
    tpu.vector_store %arg10[%c21_129, %c128_130], %263 {strides = array<i32>} : memref<128x256xf32, #tpu.memory_space<vmem>>, vector<1x128xf32>,
    %c22_i32 = arith.constant 22 : i32
    %265 = arith.addi %0, %c22_i32 : i32
    %266 = arith.index_cast %265 : i32 to index
    %267 = memref.load %arg1[%266] : memref<256xi32, #tpu.memory_space<smem>>
    %c22_i32_131 = arith.constant 22 : i32
    %268 = arith.addi %0, %c22_i32_131 : i32
    %269 = arith.index_cast %268 : i32 to index
    %270 = memref.load %arg2[%269] : memref<256xi32, #tpu.memory_space<smem>>
    %271 = arith.index_cast %267 : i32 to index
    %c0_132 = arith.constant 0 : index
    %272 = vector.load %arg3[%271, %c0_132] : memref<40x128xf32, #tpu.memory_space<vmem>>, vector<1x128xf32>
    %c22 = arith.constant 22 : index
    %c0_133 = arith.constant 0 : index
    %273 = vector.load %arg10[%c22, %c0_133] : memref<128x256xf32, #tpu.memory_space<vmem>>, vector<1x128xf32>
    tpu.vector_store %arg10[%c22, %c0_133], %272 {strides = array<i32>} : memref<128x256xf32, #tpu.memory_space<vmem>>, vector<1x128xf32>,
    %274 = arith.index_cast %270 : i32 to index
    %c0_134 = arith.constant 0 : index
    %275 = vector.load %arg4[%274, %c0_134] : memref<50x128xf32, #tpu.memory_space<vmem>>, vector<1x128xf32>
    %c22_135 = arith.constant 22 : index
    %c128_136 = arith.constant 128 : index
    %276 = vector.load %arg10[%c22_135, %c128_136] : memref<128x256xf32, #tpu.memory_space<vmem>>, vector<1x128xf32>
    tpu.vector_store %arg10[%c22_135, %c128_136], %275 {strides = array<i32>} : memref<128x256xf32, #tpu.memory_space<vmem>>, vector<1x128xf32>,
    %c23_i32 = arith.constant 23 : i32
    %277 = arith.addi %0, %c23_i32 : i32
    %278 = arith.index_cast %277 : i32 to index
    %279 = memref.load %arg1[%278] : memref<256xi32, #tpu.memory_space<smem>>
    %c23_i32_137 = arith.constant 23 : i32
    %280 = arith.addi %0, %c23_i32_137 : i32
    %281 = arith.index_cast %280 : i32 to index
    %282 = memref.load %arg2[%281] : memref<256xi32, #tpu.memory_space<smem>>
    %283 = arith.index_cast %279 : i32 to index
    %c0_138 = arith.constant 0 : index
    %284 = vector.load %arg3[%283, %c0_138] : memref<40x128xf32, #tpu.memory_space<vmem>>, vector<1x128xf32>
    %c23 = arith.constant 23 : index
    %c0_139 = arith.constant 0 : index
    %285 = vector.load %arg10[%c23, %c0_139] : memref<128x256xf32, #tpu.memory_space<vmem>>, vector<1x128xf32>
    tpu.vector_store %arg10[%c23, %c0_139], %284 {strides = array<i32>} : memref<128x256xf32, #tpu.memory_space<vmem>>, vector<1x128xf32>,
    %286 = arith.index_cast %282 : i32 to index
    %c0_140 = arith.constant 0 : index
    %287 = vector.load %arg4[%286, %c0_140] : memref<50x128xf32, #tpu.memory_space<vmem>>, vector<1x128xf32>
    %c23_141 = arith.constant 23 : index
    %c128_142 = arith.constant 128 : index
    %288 = vector.load %arg10[%c23_141, %c128_142] : memref<128x256xf32, #tpu.memory_space<vmem>>, vector<1x128xf32>
    tpu.vector_store %arg10[%c23_141, %c128_142], %287 {strides = array<i32>} : memref<128x256xf32, #tpu.memory_space<vmem>>, vector<1x128xf32>,
    %c24_i32 = arith.constant 24 : i32
    %289 = arith.addi %0, %c24_i32 : i32
    %290 = arith.index_cast %289 : i32 to index
    %291 = memref.load %arg1[%290] : memref<256xi32, #tpu.memory_space<smem>>
    %c24_i32_143 = arith.constant 24 : i32
    %292 = arith.addi %0, %c24_i32_143 : i32
    %293 = arith.index_cast %292 : i32 to index
    %294 = memref.load %arg2[%293] : memref<256xi32, #tpu.memory_space<smem>>
    %295 = arith.index_cast %291 : i32 to index
    %c0_144 = arith.constant 0 : index
    %296 = vector.load %arg3[%295, %c0_144] : memref<40x128xf32, #tpu.memory_space<vmem>>, vector<1x128xf32>
    %c24 = arith.constant 24 : index
    %c0_145 = arith.constant 0 : index
    %297 = vector.load %arg10[%c24, %c0_145] : memref<128x256xf32, #tpu.memory_space<vmem>>, vector<1x128xf32>
    tpu.vector_store %arg10[%c24, %c0_145], %296 {strides = array<i32>} : memref<128x256xf32, #tpu.memory_space<vmem>>, vector<1x128xf32>,
    %298 = arith.index_cast %294 : i32 to index
    %c0_146 = arith.constant 0 : index
    %299 = vector.load %arg4[%298, %c0_146] : memref<50x128xf32, #tpu.memory_space<vmem>>, vector<1x128xf32>
    %c24_147 = arith.constant 24 : index
    %c128_148 = arith.constant 128 : index
    %300 = vector.load %arg10[%c24_147, %c128_148] : memref<128x256xf32, #tpu.memory_space<vmem>>, vector<1x128xf32>
    tpu.vector_store %arg10[%c24_147, %c128_148], %299 {strides = array<i32>} : memref<128x256xf32, #tpu.memory_space<vmem>>, vector<1x128xf32>,
    %c25_i32 = arith.constant 25 : i32
    %301 = arith.addi %0, %c25_i32 : i32
    %302 = arith.index_cast %301 : i32 to index
    %303 = memref.load %arg1[%302] : memref<256xi32, #tpu.memory_space<smem>>
    %c25_i32_149 = arith.constant 25 : i32
    %304 = arith.addi %0, %c25_i32_149 : i32
    %305 = arith.index_cast %304 : i32 to index
    %306 = memref.load %arg2[%305] : memref<256xi32, #tpu.memory_space<smem>>
    %307 = arith.index_cast %303 : i32 to index
    %c0_150 = arith.constant 0 : index
    %308 = vector.load %arg3[%307, %c0_150] : memref<40x128xf32, #tpu.memory_space<vmem>>, vector<1x128xf32>
    %c25 = arith.constant 25 : index
    %c0_151 = arith.constant 0 : index
    %309 = vector.load %arg10[%c25, %c0_151] : memref<128x256xf32, #tpu.memory_space<vmem>>, vector<1x128xf32>
    tpu.vector_store %arg10[%c25, %c0_151], %308 {strides = array<i32>} : memref<128x256xf32, #tpu.memory_space<vmem>>, vector<1x128xf32>,
    %310 = arith.index_cast %306 : i32 to index
    %c0_152 = arith.constant 0 : index
    %311 = vector.load %arg4[%310, %c0_152] : memref<50x128xf32, #tpu.memory_space<vmem>>, vector<1x128xf32>
    %c25_153 = arith.constant 25 : index
    %c128_154 = arith.constant 128 : index
    %312 = vector.load %arg10[%c25_153, %c128_154] : memref<128x256xf32, #tpu.memory_space<vmem>>, vector<1x128xf32>
    tpu.vector_store %arg10[%c25_153, %c128_154], %311 {strides = array<i32>} : memref<128x256xf32, #tpu.memory_space<vmem>>, vector<1x128xf32>,
    %c26_i32 = arith.constant 26 : i32
    %313 = arith.addi %0, %c26_i32 : i32
    %314 = arith.index_cast %313 : i32 to index
    %315 = memref.load %arg1[%314] : memref<256xi32, #tpu.memory_space<smem>>
    %c26_i32_155 = arith.constant 26 : i32
    %316 = arith.addi %0, %c26_i32_155 : i32
    %317 = arith.index_cast %316 : i32 to index
    %318 = memref.load %arg2[%317] : memref<256xi32, #tpu.memory_space<smem>>
    %319 = arith.index_cast %315 : i32 to index
    %c0_156 = arith.constant 0 : index
    %320 = vector.load %arg3[%319, %c0_156] : memref<40x128xf32, #tpu.memory_space<vmem>>, vector<1x128xf32>
    %c26 = arith.constant 26 : index
    %c0_157 = arith.constant 0 : index
    %321 = vector.load %arg10[%c26, %c0_157] : memref<128x256xf32, #tpu.memory_space<vmem>>, vector<1x128xf32>
    tpu.vector_store %arg10[%c26, %c0_157], %320 {strides = array<i32>} : memref<128x256xf32, #tpu.memory_space<vmem>>, vector<1x128xf32>,
    %322 = arith.index_cast %318 : i32 to index
    %c0_158 = arith.constant 0 : index
    %323 = vector.load %arg4[%322, %c0_158] : memref<50x128xf32, #tpu.memory_space<vmem>>, vector<1x128xf32>
    %c26_159 = arith.constant 26 : index
    %c128_160 = arith.constant 128 : index
    %324 = vector.load %arg10[%c26_159, %c128_160] : memref<128x256xf32, #tpu.memory_space<vmem>>, vector<1x128xf32>
    tpu.vector_store %arg10[%c26_159, %c128_160], %323 {strides = array<i32>} : memref<128x256xf32, #tpu.memory_space<vmem>>, vector<1x128xf32>,
    %c27_i32 = arith.constant 27 : i32
    %325 = arith.addi %0, %c27_i32 : i32
    %326 = arith.index_cast %325 : i32 to index
    %327 = memref.load %arg1[%326] : memref<256xi32, #tpu.memory_space<smem>>
    %c27_i32_161 = arith.constant 27 : i32
    %328 = arith.addi %0, %c27_i32_161 : i32
    %329 = arith.index_cast %328 : i32 to index
    %330 = memref.load %arg2[%329] : memref<256xi32, #tpu.memory_space<smem>>
    %331 = arith.index_cast %327 : i32 to index
    %c0_162 = arith.constant 0 : index
    %332 = vector.load %arg3[%331, %c0_162] : memref<40x128xf32, #tpu.memory_space<vmem>>, vector<1x128xf32>
    %c27 = arith.constant 27 : index
    %c0_163 = arith.constant 0 : index
    %333 = vector.load %arg10[%c27, %c0_163] : memref<128x256xf32, #tpu.memory_space<vmem>>, vector<1x128xf32>
    tpu.vector_store %arg10[%c27, %c0_163], %332 {strides = array<i32>} : memref<128x256xf32, #tpu.memory_space<vmem>>, vector<1x128xf32>,
    %334 = arith.index_cast %330 : i32 to index
    %c0_164 = arith.constant 0 : index
    %335 = vector.load %arg4[%334, %c0_164] : memref<50x128xf32, #tpu.memory_space<vmem>>, vector<1x128xf32>
    %c27_165 = arith.constant 27 : index
    %c128_166 = arith.constant 128 : index
    %336 = vector.load %arg10[%c27_165, %c128_166] : memref<128x256xf32, #tpu.memory_space<vmem>>, vector<1x128xf32>
    tpu.vector_store %arg10[%c27_165, %c128_166], %335 {strides = array<i32>} : memref<128x256xf32, #tpu.memory_space<vmem>>, vector<1x128xf32>,
    %c28_i32 = arith.constant 28 : i32
    %337 = arith.addi %0, %c28_i32 : i32
    %338 = arith.index_cast %337 : i32 to index
    %339 = memref.load %arg1[%338] : memref<256xi32, #tpu.memory_space<smem>>
    %c28_i32_167 = arith.constant 28 : i32
    %340 = arith.addi %0, %c28_i32_167 : i32
    %341 = arith.index_cast %340 : i32 to index
    %342 = memref.load %arg2[%341] : memref<256xi32, #tpu.memory_space<smem>>
    %343 = arith.index_cast %339 : i32 to index
    %c0_168 = arith.constant 0 : index
    %344 = vector.load %arg3[%343, %c0_168] : memref<40x128xf32, #tpu.memory_space<vmem>>, vector<1x128xf32>
    %c28 = arith.constant 28 : index
    %c0_169 = arith.constant 0 : index
    %345 = vector.load %arg10[%c28, %c0_169] : memref<128x256xf32, #tpu.memory_space<vmem>>, vector<1x128xf32>
    tpu.vector_store %arg10[%c28, %c0_169], %344 {strides = array<i32>} : memref<128x256xf32, #tpu.memory_space<vmem>>, vector<1x128xf32>,
    %346 = arith.index_cast %342 : i32 to index
    %c0_170 = arith.constant 0 : index
    %347 = vector.load %arg4[%346, %c0_170] : memref<50x128xf32, #tpu.memory_space<vmem>>, vector<1x128xf32>
    %c28_171 = arith.constant 28 : index
    %c128_172 = arith.constant 128 : index
    %348 = vector.load %arg10[%c28_171, %c128_172] : memref<128x256xf32, #tpu.memory_space<vmem>>, vector<1x128xf32>
    tpu.vector_store %arg10[%c28_171, %c128_172], %347 {strides = array<i32>} : memref<128x256xf32, #tpu.memory_space<vmem>>, vector<1x128xf32>,
    %c29_i32 = arith.constant 29 : i32
    %349 = arith.addi %0, %c29_i32 : i32
    %350 = arith.index_cast %349 : i32 to index
    %351 = memref.load %arg1[%350] : memref<256xi32, #tpu.memory_space<smem>>
    %c29_i32_173 = arith.constant 29 : i32
    %352 = arith.addi %0, %c29_i32_173 : i32
    %353 = arith.index_cast %352 : i32 to index
    %354 = memref.load %arg2[%353] : memref<256xi32, #tpu.memory_space<smem>>
    %355 = arith.index_cast %351 : i32 to index
    %c0_174 = arith.constant 0 : index
    %356 = vector.load %arg3[%355, %c0_174] : memref<40x128xf32, #tpu.memory_space<vmem>>, vector<1x128xf32>
    %c29 = arith.constant 29 : index
    %c0_175 = arith.constant 0 : index
    %357 = vector.load %arg10[%c29, %c0_175] : memref<128x256xf32, #tpu.memory_space<vmem>>, vector<1x128xf32>
    tpu.vector_store %arg10[%c29, %c0_175], %356 {strides = array<i32>} : memref<128x256xf32, #tpu.memory_space<vmem>>, vector<1x128xf32>,
    %358 = arith.index_cast %354 : i32 to index
    %c0_176 = arith.constant 0 : index
    %359 = vector.load %arg4[%358, %c0_176] : memref<50x128xf32, #tpu.memory_space<vmem>>, vector<1x128xf32>
    %c29_177 = arith.constant 29 : index
    %c128_178 = arith.constant 128 : index
    %360 = vector.load %arg10[%c29_177, %c128_178] : memref<128x256xf32, #tpu.memory_space<vmem>>, vector<1x128xf32>
    tpu.vector_store %arg10[%c29_177, %c128_178], %359 {strides = array<i32>} : memref<128x256xf32, #tpu.memory_space<vmem>>, vector<1x128xf32>,
    %c30_i32 = arith.constant 30 : i32
    %361 = arith.addi %0, %c30_i32 : i32
    %362 = arith.index_cast %361 : i32 to index
    %363 = memref.load %arg1[%362] : memref<256xi32, #tpu.memory_space<smem>>
    %c30_i32_179 = arith.constant 30 : i32
    %364 = arith.addi %0, %c30_i32_179 : i32
    %365 = arith.index_cast %364 : i32 to index
    %366 = memref.load %arg2[%365] : memref<256xi32, #tpu.memory_space<smem>>
    %367 = arith.index_cast %363 : i32 to index
    %c0_180 = arith.constant 0 : index
    %368 = vector.load %arg3[%367, %c0_180] : memref<40x128xf32, #tpu.memory_space<vmem>>, vector<1x128xf32>
    %c30 = arith.constant 30 : index
    %c0_181 = arith.constant 0 : index
    %369 = vector.load %arg10[%c30, %c0_181] : memref<128x256xf32, #tpu.memory_space<vmem>>, vector<1x128xf32>
    tpu.vector_store %arg10[%c30, %c0_181], %368 {strides = array<i32>} : memref<128x256xf32, #tpu.memory_space<vmem>>, vector<1x128xf32>,
    %370 = arith.index_cast %366 : i32 to index
    %c0_182 = arith.constant 0 : index
    %371 = vector.load %arg4[%370, %c0_182] : memref<50x128xf32, #tpu.memory_space<vmem>>, vector<1x128xf32>
    %c30_183 = arith.constant 30 : index
    %c128_184 = arith.constant 128 : index
    %372 = vector.load %arg10[%c30_183, %c128_184] : memref<128x256xf32, #tpu.memory_space<vmem>>, vector<1x128xf32>
    tpu.vector_store %arg10[%c30_183, %c128_184], %371 {strides = array<i32>} : memref<128x256xf32, #tpu.memory_space<vmem>>, vector<1x128xf32>,
    %c31_i32 = arith.constant 31 : i32
    %373 = arith.addi %0, %c31_i32 : i32
    %374 = arith.index_cast %373 : i32 to index
    %375 = memref.load %arg1[%374] : memref<256xi32, #tpu.memory_space<smem>>
    %c31_i32_185 = arith.constant 31 : i32
    %376 = arith.addi %0, %c31_i32_185 : i32
    %377 = arith.index_cast %376 : i32 to index
    %378 = memref.load %arg2[%377] : memref<256xi32, #tpu.memory_space<smem>>
    %379 = arith.index_cast %375 : i32 to index
    %c0_186 = arith.constant 0 : index
    %380 = vector.load %arg3[%379, %c0_186] : memref<40x128xf32, #tpu.memory_space<vmem>>, vector<1x128xf32>
    %c31 = arith.constant 31 : index
    %c0_187 = arith.constant 0 : index
    %381 = vector.load %arg10[%c31, %c0_187] : memref<128x256xf32, #tpu.memory_space<vmem>>, vector<1x128xf32>
    tpu.vector_store %arg10[%c31, %c0_187], %380 {strides = array<i32>} : memref<128x256xf32, #tpu.memory_space<vmem>>, vector<1x128xf32>,
    %382 = arith.index_cast %378 : i32 to index
    %c0_188 = arith.constant 0 : index
    %383 = vector.load %arg4[%382, %c0_188] : memref<50x128xf32, #tpu.memory_space<vmem>>, vector<1x128xf32>
    %c31_189 = arith.constant 31 : index
    %c128_190 = arith.constant 128 : index
    %384 = vector.load %arg10[%c31_189, %c128_190] : memref<128x256xf32, #tpu.memory_space<vmem>>, vector<1x128xf32>
    tpu.vector_store %arg10[%c31_189, %c128_190], %383 {strides = array<i32>} : memref<128x256xf32, #tpu.memory_space<vmem>>, vector<1x128xf32>,
    %c32_i32 = arith.constant 32 : i32
    %385 = arith.addi %0, %c32_i32 : i32
    %386 = arith.index_cast %385 : i32 to index
    %387 = memref.load %arg1[%386] : memref<256xi32, #tpu.memory_space<smem>>
    %c32_i32_191 = arith.constant 32 : i32
    %388 = arith.addi %0, %c32_i32_191 : i32
    %389 = arith.index_cast %388 : i32 to index
    %390 = memref.load %arg2[%389] : memref<256xi32, #tpu.memory_space<smem>>
    %391 = arith.index_cast %387 : i32 to index
    %c0_192 = arith.constant 0 : index
    %392 = vector.load %arg3[%391, %c0_192] : memref<40x128xf32, #tpu.memory_space<vmem>>, vector<1x128xf32>
    %c32 = arith.constant 32 : index
    %c0_193 = arith.constant 0 : index
    %393 = vector.load %arg10[%c32, %c0_193] : memref<128x256xf32, #tpu.memory_space<vmem>>, vector<1x128xf32>
    tpu.vector_store %arg10[%c32, %c0_193], %392 {strides = array<i32>} : memref<128x256xf32, #tpu.memory_space<vmem>>, vector<1x128xf32>,
    %394 = arith.index_cast %390 : i32 to index
    %c0_194 = arith.constant 0 : index
    %395 = vector.load %arg4[%394, %c0_194] : memref<50x128xf32, #tpu.memory_space<vmem>>, vector<1x128xf32>
    %c32_195 = arith.constant 32 : index
    %c128_196 = arith.constant 128 : index
    %396 = vector.load %arg10[%c32_195, %c128_196] : memref<128x256xf32, #tpu.memory_space<vmem>>, vector<1x128xf32>
    tpu.vector_store %arg10[%c32_195, %c128_196], %395 {strides = array<i32>} : memref<128x256xf32, #tpu.memory_space<vmem>>, vector<1x128xf32>,
    %c33_i32 = arith.constant 33 : i32
    %397 = arith.addi %0, %c33_i32 : i32
    %398 = arith.index_cast %397 : i32 to index
    %399 = memref.load %arg1[%398] : memref<256xi32, #tpu.memory_space<smem>>
    %c33_i32_197 = arith.constant 33 : i32
    %400 = arith.addi %0, %c33_i32_197 : i32
    %401 = arith.index_cast %400 : i32 to index
    %402 = memref.load %arg2[%401] : memref<256xi32, #tpu.memory_space<smem>>
    %403 = arith.index_cast %399 : i32 to index
    %c0_198 = arith.constant 0 : index
    %404 = vector.load %arg3[%403, %c0_198] : memref<40x128xf32, #tpu.memory_space<vmem>>, vector<1x128xf32>
    %c33 = arith.constant 33 : index
    %c0_199 = arith.constant 0 : index
    %405 = vector.load %arg10[%c33, %c0_199] : memref<128x256xf32, #tpu.memory_space<vmem>>, vector<1x128xf32>
    tpu.vector_store %arg10[%c33, %c0_199], %404 {strides = array<i32>} : memref<128x256xf32, #tpu.memory_space<vmem>>, vector<1x128xf32>,
    %406 = arith.index_cast %402 : i32 to index
    %c0_200 = arith.constant 0 : index
    %407 = vector.load %arg4[%406, %c0_200] : memref<50x128xf32, #tpu.memory_space<vmem>>, vector<1x128xf32>
    %c33_201 = arith.constant 33 : index
    %c128_202 = arith.constant 128 : index
    %408 = vector.load %arg10[%c33_201, %c128_202] : memref<128x256xf32, #tpu.memory_space<vmem>>, vector<1x128xf32>
    tpu.vector_store %arg10[%c33_201, %c128_202], %407 {strides = array<i32>} : memref<128x256xf32, #tpu.memory_space<vmem>>, vector<1x128xf32>,
    %c34_i32 = arith.constant 34 : i32
    %409 = arith.addi %0, %c34_i32 : i32
    %410 = arith.index_cast %409 : i32 to index
    %411 = memref.load %arg1[%410] : memref<256xi32, #tpu.memory_space<smem>>
    %c34_i32_203 = arith.constant 34 : i32
    %412 = arith.addi %0, %c34_i32_203 : i32
    %413 = arith.index_cast %412 : i32 to index
    %414 = memref.load %arg2[%413] : memref<256xi32, #tpu.memory_space<smem>>
    %415 = arith.index_cast %411 : i32 to index
    %c0_204 = arith.constant 0 : index
    %416 = vector.load %arg3[%415, %c0_204] : memref<40x128xf32, #tpu.memory_space<vmem>>, vector<1x128xf32>
    %c34 = arith.constant 34 : index
    %c0_205 = arith.constant 0 : index
    %417 = vector.load %arg10[%c34, %c0_205] : memref<128x256xf32, #tpu.memory_space<vmem>>, vector<1x128xf32>
    tpu.vector_store %arg10[%c34, %c0_205], %416 {strides = array<i32>} : memref<128x256xf32, #tpu.memory_space<vmem>>, vector<1x128xf32>,
    %418 = arith.index_cast %414 : i32 to index
    %c0_206 = arith.constant 0 : index
    %419 = vector.load %arg4[%418, %c0_206] : memref<50x128xf32, #tpu.memory_space<vmem>>, vector<1x128xf32>
    %c34_207 = arith.constant 34 : index
    %c128_208 = arith.constant 128 : index
    %420 = vector.load %arg10[%c34_207, %c128_208] : memref<128x256xf32, #tpu.memory_space<vmem>>, vector<1x128xf32>
    tpu.vector_store %arg10[%c34_207, %c128_208], %419 {strides = array<i32>} : memref<128x256xf32, #tpu.memory_space<vmem>>, vector<1x128xf32>,
    %c35_i32 = arith.constant 35 : i32
    %421 = arith.addi %0, %c35_i32 : i32
    %422 = arith.index_cast %421 : i32 to index
    %423 = memref.load %arg1[%422] : memref<256xi32, #tpu.memory_space<smem>>
    %c35_i32_209 = arith.constant 35 : i32
    %424 = arith.addi %0, %c35_i32_209 : i32
    %425 = arith.index_cast %424 : i32 to index
    %426 = memref.load %arg2[%425] : memref<256xi32, #tpu.memory_space<smem>>
    %427 = arith.index_cast %423 : i32 to index
    %c0_210 = arith.constant 0 : index
    %428 = vector.load %arg3[%427, %c0_210] : memref<40x128xf32, #tpu.memory_space<vmem>>, vector<1x128xf32>
    %c35 = arith.constant 35 : index
    %c0_211 = arith.constant 0 : index
    %429 = vector.load %arg10[%c35, %c0_211] : memref<128x256xf32, #tpu.memory_space<vmem>>, vector<1x128xf32>
    tpu.vector_store %arg10[%c35, %c0_211], %428 {strides = array<i32>} : memref<128x256xf32, #tpu.memory_space<vmem>>, vector<1x128xf32>,
    %430 = arith.index_cast %426 : i32 to index
    %c0_212 = arith.constant 0 : index
    %431 = vector.load %arg4[%430, %c0_212] : memref<50x128xf32, #tpu.memory_space<vmem>>, vector<1x128xf32>
    %c35_213 = arith.constant 35 : index
    %c128_214 = arith.constant 128 : index
    %432 = vector.load %arg10[%c35_213, %c128_214] : memref<128x256xf32, #tpu.memory_space<vmem>>, vector<1x128xf32>
    tpu.vector_store %arg10[%c35_213, %c128_214], %431 {strides = array<i32>} : memref<128x256xf32, #tpu.memory_space<vmem>>, vector<1x128xf32>,
    %c36_i32 = arith.constant 36 : i32
    %433 = arith.addi %0, %c36_i32 : i32
    %434 = arith.index_cast %433 : i32 to index
    %435 = memref.load %arg1[%434] : memref<256xi32, #tpu.memory_space<smem>>
    %c36_i32_215 = arith.constant 36 : i32
    %436 = arith.addi %0, %c36_i32_215 : i32
    %437 = arith.index_cast %436 : i32 to index
    %438 = memref.load %arg2[%437] : memref<256xi32, #tpu.memory_space<smem>>
    %439 = arith.index_cast %435 : i32 to index
    %c0_216 = arith.constant 0 : index
    %440 = vector.load %arg3[%439, %c0_216] : memref<40x128xf32, #tpu.memory_space<vmem>>, vector<1x128xf32>
    %c36 = arith.constant 36 : index
    %c0_217 = arith.constant 0 : index
    %441 = vector.load %arg10[%c36, %c0_217] : memref<128x256xf32, #tpu.memory_space<vmem>>, vector<1x128xf32>
    tpu.vector_store %arg10[%c36, %c0_217], %440 {strides = array<i32>} : memref<128x256xf32, #tpu.memory_space<vmem>>, vector<1x128xf32>,
    %442 = arith.index_cast %438 : i32 to index
    %c0_218 = arith.constant 0 : index
    %443 = vector.load %arg4[%442, %c0_218] : memref<50x128xf32, #tpu.memory_space<vmem>>, vector<1x128xf32>
    %c36_219 = arith.constant 36 : index
    %c128_220 = arith.constant 128 : index
    %444 = vector.load %arg10[%c36_219, %c128_220] : memref<128x256xf32, #tpu.memory_space<vmem>>, vector<1x128xf32>
    tpu.vector_store %arg10[%c36_219, %c128_220], %443 {strides = array<i32>} : memref<128x256xf32, #tpu.memory_space<vmem>>, vector<1x128xf32>,
    %c37_i32 = arith.constant 37 : i32
    %445 = arith.addi %0, %c37_i32 : i32
    %446 = arith.index_cast %445 : i32 to index
    %447 = memref.load %arg1[%446] : memref<256xi32, #tpu.memory_space<smem>>
    %c37_i32_221 = arith.constant 37 : i32
    %448 = arith.addi %0, %c37_i32_221 : i32
    %449 = arith.index_cast %448 : i32 to index
    %450 = memref.load %arg2[%449] : memref<256xi32, #tpu.memory_space<smem>>
    %451 = arith.index_cast %447 : i32 to index
    %c0_222 = arith.constant 0 : index
    %452 = vector.load %arg3[%451, %c0_222] : memref<40x128xf32, #tpu.memory_space<vmem>>, vector<1x128xf32>
    %c37 = arith.constant 37 : index
    %c0_223 = arith.constant 0 : index
    %453 = vector.load %arg10[%c37, %c0_223] : memref<128x256xf32, #tpu.memory_space<vmem>>, vector<1x128xf32>
    tpu.vector_store %arg10[%c37, %c0_223], %452 {strides = array<i32>} : memref<128x256xf32, #tpu.memory_space<vmem>>, vector<1x128xf32>,
    %454 = arith.index_cast %450 : i32 to index
    %c0_224 = arith.constant 0 : index
    %455 = vector.load %arg4[%454, %c0_224] : memref<50x128xf32, #tpu.memory_space<vmem>>, vector<1x128xf32>
    %c37_225 = arith.constant 37 : index
    %c128_226 = arith.constant 128 : index
    %456 = vector.load %arg10[%c37_225, %c128_226] : memref<128x256xf32, #tpu.memory_space<vmem>>, vector<1x128xf32>
    tpu.vector_store %arg10[%c37_225, %c128_226], %455 {strides = array<i32>} : memref<128x256xf32, #tpu.memory_space<vmem>>, vector<1x128xf32>,
    %c38_i32 = arith.constant 38 : i32
    %457 = arith.addi %0, %c38_i32 : i32
    %458 = arith.index_cast %457 : i32 to index
    %459 = memref.load %arg1[%458] : memref<256xi32, #tpu.memory_space<smem>>
    %c38_i32_227 = arith.constant 38 : i32
    %460 = arith.addi %0, %c38_i32_227 : i32
    %461 = arith.index_cast %460 : i32 to index
    %462 = memref.load %arg2[%461] : memref<256xi32, #tpu.memory_space<smem>>
    %463 = arith.index_cast %459 : i32 to index
    %c0_228 = arith.constant 0 : index
    %464 = vector.load %arg3[%463, %c0_228] : memref<40x128xf32, #tpu.memory_space<vmem>>, vector<1x128xf32>
    %c38 = arith.constant 38 : index
    %c0_229 = arith.constant 0 : index
    %465 = vector.load %arg10[%c38, %c0_229] : memref<128x256xf32, #tpu.memory_space<vmem>>, vector<1x128xf32>
    tpu.vector_store %arg10[%c38, %c0_229], %464 {strides = array<i32>} : memref<128x256xf32, #tpu.memory_space<vmem>>, vector<1x128xf32>,
    %466 = arith.index_cast %462 : i32 to index
    %c0_230 = arith.constant 0 : index
    %467 = vector.load %arg4[%466, %c0_230] : memref<50x128xf32, #tpu.memory_space<vmem>>, vector<1x128xf32>
    %c38_231 = arith.constant 38 : index
    %c128_232 = arith.constant 128 : index
    %468 = vector.load %arg10[%c38_231, %c128_232] : memref<128x256xf32, #tpu.memory_space<vmem>>, vector<1x128xf32>
    tpu.vector_store %arg10[%c38_231, %c128_232], %467 {strides = array<i32>} : memref<128x256xf32, #tpu.memory_space<vmem>>, vector<1x128xf32>,
    %c39_i32 = arith.constant 39 : i32
    %469 = arith.addi %0, %c39_i32 : i32
    %470 = arith.index_cast %469 : i32 to index
    %471 = memref.load %arg1[%470] : memref<256xi32, #tpu.memory_space<smem>>
    %c39_i32_233 = arith.constant 39 : i32
    %472 = arith.addi %0, %c39_i32_233 : i32
    %473 = arith.index_cast %472 : i32 to index
    %474 = memref.load %arg2[%473] : memref<256xi32, #tpu.memory_space<smem>>
    %475 = arith.index_cast %471 : i32 to index
    %c0_234 = arith.constant 0 : index
    %476 = vector.load %arg3[%475, %c0_234] : memref<40x128xf32, #tpu.memory_space<vmem>>, vector<1x128xf32>
    %c39 = arith.constant 39 : index
    %c0_235 = arith.constant 0 : index
    %477 = vector.load %arg10[%c39, %c0_235] : memref<128x256xf32, #tpu.memory_space<vmem>>, vector<1x128xf32>
    tpu.vector_store %arg10[%c39, %c0_235], %476 {strides = array<i32>} : memref<128x256xf32, #tpu.memory_space<vmem>>, vector<1x128xf32>,
    %478 = arith.index_cast %474 : i32 to index
    %c0_236 = arith.constant 0 : index
    %479 = vector.load %arg4[%478, %c0_236] : memref<50x128xf32, #tpu.memory_space<vmem>>, vector<1x128xf32>
    %c39_237 = arith.constant 39 : index
    %c128_238 = arith.constant 128 : index
    %480 = vector.load %arg10[%c39_237, %c128_238] : memref<128x256xf32, #tpu.memory_space<vmem>>, vector<1x128xf32>
    tpu.vector_store %arg10[%c39_237, %c128_238], %479 {strides = array<i32>} : memref<128x256xf32, #tpu.memory_space<vmem>>, vector<1x128xf32>,
    %c40_i32 = arith.constant 40 : i32
    %481 = arith.addi %0, %c40_i32 : i32
    %482 = arith.index_cast %481 : i32 to index
    %483 = memref.load %arg1[%482] : memref<256xi32, #tpu.memory_space<smem>>
    %c40_i32_239 = arith.constant 40 : i32
    %484 = arith.addi %0, %c40_i32_239 : i32
    %485 = arith.index_cast %484 : i32 to index
    %486 = memref.load %arg2[%485] : memref<256xi32, #tpu.memory_space<smem>>
    %487 = arith.index_cast %483 : i32 to index
    %c0_240 = arith.constant 0 : index
    %488 = vector.load %arg3[%487, %c0_240] : memref<40x128xf32, #tpu.memory_space<vmem>>, vector<1x128xf32>
    %c40 = arith.constant 40 : index
    %c0_241 = arith.constant 0 : index
    %489 = vector.load %arg10[%c40, %c0_241] : memref<128x256xf32, #tpu.memory_space<vmem>>, vector<1x128xf32>
    tpu.vector_store %arg10[%c40, %c0_241], %488 {strides = array<i32>} : memref<128x256xf32, #tpu.memory_space<vmem>>, vector<1x128xf32>,
    %490 = arith.index_cast %486 : i32 to index
    %c0_242 = arith.constant 0 : index
    %491 = vector.load %arg4[%490, %c0_242] : memref<50x128xf32, #tpu.memory_space<vmem>>, vector<1x128xf32>
    %c40_243 = arith.constant 40 : index
    %c128_244 = arith.constant 128 : index
    %492 = vector.load %arg10[%c40_243, %c128_244] : memref<128x256xf32, #tpu.memory_space<vmem>>, vector<1x128xf32>
    tpu.vector_store %arg10[%c40_243, %c128_244], %491 {strides = array<i32>} : memref<128x256xf32, #tpu.memory_space<vmem>>, vector<1x128xf32>,
    %c41_i32 = arith.constant 41 : i32
    %493 = arith.addi %0, %c41_i32 : i32
    %494 = arith.index_cast %493 : i32 to index
    %495 = memref.load %arg1[%494] : memref<256xi32, #tpu.memory_space<smem>>
    %c41_i32_245 = arith.constant 41 : i32
    %496 = arith.addi %0, %c41_i32_245 : i32
    %497 = arith.index_cast %496 : i32 to index
    %498 = memref.load %arg2[%497] : memref<256xi32, #tpu.memory_space<smem>>
    %499 = arith.index_cast %495 : i32 to index
    %c0_246 = arith.constant 0 : index
    %500 = vector.load %arg3[%499, %c0_246] : memref<40x128xf32, #tpu.memory_space<vmem>>, vector<1x128xf32>
    %c41 = arith.constant 41 : index
    %c0_247 = arith.constant 0 : index
    %501 = vector.load %arg10[%c41, %c0_247] : memref<128x256xf32, #tpu.memory_space<vmem>>, vector<1x128xf32>
    tpu.vector_store %arg10[%c41, %c0_247], %500 {strides = array<i32>} : memref<128x256xf32, #tpu.memory_space<vmem>>, vector<1x128xf32>,
    %502 = arith.index_cast %498 : i32 to index
    %c0_248 = arith.constant 0 : index
    %503 = vector.load %arg4[%502, %c0_248] : memref<50x128xf32, #tpu.memory_space<vmem>>, vector<1x128xf32>
    %c41_249 = arith.constant 41 : index
    %c128_250 = arith.constant 128 : index
    %504 = vector.load %arg10[%c41_249, %c128_250] : memref<128x256xf32, #tpu.memory_space<vmem>>, vector<1x128xf32>
    tpu.vector_store %arg10[%c41_249, %c128_250], %503 {strides = array<i32>} : memref<128x256xf32, #tpu.memory_space<vmem>>, vector<1x128xf32>,
    %c42_i32 = arith.constant 42 : i32
    %505 = arith.addi %0, %c42_i32 : i32
    %506 = arith.index_cast %505 : i32 to index
    %507 = memref.load %arg1[%506] : memref<256xi32, #tpu.memory_space<smem>>
    %c42_i32_251 = arith.constant 42 : i32
    %508 = arith.addi %0, %c42_i32_251 : i32
    %509 = arith.index_cast %508 : i32 to index
    %510 = memref.load %arg2[%509] : memref<256xi32, #tpu.memory_space<smem>>
    %511 = arith.index_cast %507 : i32 to index
    %c0_252 = arith.constant 0 : index
    %512 = vector.load %arg3[%511, %c0_252] : memref<40x128xf32, #tpu.memory_space<vmem>>, vector<1x128xf32>
    %c42 = arith.constant 42 : index
    %c0_253 = arith.constant 0 : index
    %513 = vector.load %arg10[%c42, %c0_253] : memref<128x256xf32, #tpu.memory_space<vmem>>, vector<1x128xf32>
    tpu.vector_store %arg10[%c42, %c0_253], %512 {strides = array<i32>} : memref<128x256xf32, #tpu.memory_space<vmem>>, vector<1x128xf32>,
    %514 = arith.index_cast %510 : i32 to index
    %c0_254 = arith.constant 0 : index
    %515 = vector.load %arg4[%514, %c0_254] : memref<50x128xf32, #tpu.memory_space<vmem>>, vector<1x128xf32>
    %c42_255 = arith.constant 42 : index
    %c128_256 = arith.constant 128 : index
    %516 = vector.load %arg10[%c42_255, %c128_256] : memref<128x256xf32, #tpu.memory_space<vmem>>, vector<1x128xf32>
    tpu.vector_store %arg10[%c42_255, %c128_256], %515 {strides = array<i32>} : memref<128x256xf32, #tpu.memory_space<vmem>>, vector<1x128xf32>,
    %c43_i32 = arith.constant 43 : i32
    %517 = arith.addi %0, %c43_i32 : i32
    %518 = arith.index_cast %517 : i32 to index
    %519 = memref.load %arg1[%518] : memref<256xi32, #tpu.memory_space<smem>>
    %c43_i32_257 = arith.constant 43 : i32
    %520 = arith.addi %0, %c43_i32_257 : i32
    %521 = arith.index_cast %520 : i32 to index
    %522 = memref.load %arg2[%521] : memref<256xi32, #tpu.memory_space<smem>>
    %523 = arith.index_cast %519 : i32 to index
    %c0_258 = arith.constant 0 : index
    %524 = vector.load %arg3[%523, %c0_258] : memref<40x128xf32, #tpu.memory_space<vmem>>, vector<1x128xf32>
    %c43 = arith.constant 43 : index
    %c0_259 = arith.constant 0 : index
    %525 = vector.load %arg10[%c43, %c0_259] : memref<128x256xf32, #tpu.memory_space<vmem>>, vector<1x128xf32>
    tpu.vector_store %arg10[%c43, %c0_259], %524 {strides = array<i32>} : memref<128x256xf32, #tpu.memory_space<vmem>>, vector<1x128xf32>,
    %526 = arith.index_cast %522 : i32 to index
    %c0_260 = arith.constant 0 : index
    %527 = vector.load %arg4[%526, %c0_260] : memref<50x128xf32, #tpu.memory_space<vmem>>, vector<1x128xf32>
    %c43_261 = arith.constant 43 : index
    %c128_262 = arith.constant 128 : index
    %528 = vector.load %arg10[%c43_261, %c128_262] : memref<128x256xf32, #tpu.memory_space<vmem>>, vector<1x128xf32>
    tpu.vector_store %arg10[%c43_261, %c128_262], %527 {strides = array<i32>} : memref<128x256xf32, #tpu.memory_space<vmem>>, vector<1x128xf32>,
    %c44_i32 = arith.constant 44 : i32
    %529 = arith.addi %0, %c44_i32 : i32
    %530 = arith.index_cast %529 : i32 to index
    %531 = memref.load %arg1[%530] : memref<256xi32, #tpu.memory_space<smem>>
    %c44_i32_263 = arith.constant 44 : i32
    %532 = arith.addi %0, %c44_i32_263 : i32
    %533 = arith.index_cast %532 : i32 to index
    %534 = memref.load %arg2[%533] : memref<256xi32, #tpu.memory_space<smem>>
    %535 = arith.index_cast %531 : i32 to index
    %c0_264 = arith.constant 0 : index
    %536 = vector.load %arg3[%535, %c0_264] : memref<40x128xf32, #tpu.memory_space<vmem>>, vector<1x128xf32>
    %c44 = arith.constant 44 : index
    %c0_265 = arith.constant 0 : index
    %537 = vector.load %arg10[%c44, %c0_265] : memref<128x256xf32, #tpu.memory_space<vmem>>, vector<1x128xf32>
    tpu.vector_store %arg10[%c44, %c0_265], %536 {strides = array<i32>} : memref<128x256xf32, #tpu.memory_space<vmem>>, vector<1x128xf32>,
    %538 = arith.index_cast %534 : i32 to index
    %c0_266 = arith.constant 0 : index
    %539 = vector.load %arg4[%538, %c0_266] : memref<50x128xf32, #tpu.memory_space<vmem>>, vector<1x128xf32>
    %c44_267 = arith.constant 44 : index
    %c128_268 = arith.constant 128 : index
    %540 = vector.load %arg10[%c44_267, %c128_268] : memref<128x256xf32, #tpu.memory_space<vmem>>, vector<1x128xf32>
    tpu.vector_store %arg10[%c44_267, %c128_268], %539 {strides = array<i32>} : memref<128x256xf32, #tpu.memory_space<vmem>>, vector<1x128xf32>,
    %c45_i32 = arith.constant 45 : i32
    %541 = arith.addi %0, %c45_i32 : i32
    %542 = arith.index_cast %541 : i32 to index
    %543 = memref.load %arg1[%542] : memref<256xi32, #tpu.memory_space<smem>>
    %c45_i32_269 = arith.constant 45 : i32
    %544 = arith.addi %0, %c45_i32_269 : i32
    %545 = arith.index_cast %544 : i32 to index
    %546 = memref.load %arg2[%545] : memref<256xi32, #tpu.memory_space<smem>>
    %547 = arith.index_cast %543 : i32 to index
    %c0_270 = arith.constant 0 : index
    %548 = vector.load %arg3[%547, %c0_270] : memref<40x128xf32, #tpu.memory_space<vmem>>, vector<1x128xf32>
    %c45 = arith.constant 45 : index
    %c0_271 = arith.constant 0 : index
    %549 = vector.load %arg10[%c45, %c0_271] : memref<128x256xf32, #tpu.memory_space<vmem>>, vector<1x128xf32>
    tpu.vector_store %arg10[%c45, %c0_271], %548 {strides = array<i32>} : memref<128x256xf32, #tpu.memory_space<vmem>>, vector<1x128xf32>,
    %550 = arith.index_cast %546 : i32 to index
    %c0_272 = arith.constant 0 : index
    %551 = vector.load %arg4[%550, %c0_272] : memref<50x128xf32, #tpu.memory_space<vmem>>, vector<1x128xf32>
    %c45_273 = arith.constant 45 : index
    %c128_274 = arith.constant 128 : index
    %552 = vector.load %arg10[%c45_273, %c128_274] : memref<128x256xf32, #tpu.memory_space<vmem>>, vector<1x128xf32>
    tpu.vector_store %arg10[%c45_273, %c128_274], %551 {strides = array<i32>} : memref<128x256xf32, #tpu.memory_space<vmem>>, vector<1x128xf32>,
    %c46_i32 = arith.constant 46 : i32
    %553 = arith.addi %0, %c46_i32 : i32
    %554 = arith.index_cast %553 : i32 to index
    %555 = memref.load %arg1[%554] : memref<256xi32, #tpu.memory_space<smem>>
    %c46_i32_275 = arith.constant 46 : i32
    %556 = arith.addi %0, %c46_i32_275 : i32
    %557 = arith.index_cast %556 : i32 to index
    %558 = memref.load %arg2[%557] : memref<256xi32, #tpu.memory_space<smem>>
    %559 = arith.index_cast %555 : i32 to index
    %c0_276 = arith.constant 0 : index
    %560 = vector.load %arg3[%559, %c0_276] : memref<40x128xf32, #tpu.memory_space<vmem>>, vector<1x128xf32>
    %c46 = arith.constant 46 : index
    %c0_277 = arith.constant 0 : index
    %561 = vector.load %arg10[%c46, %c0_277] : memref<128x256xf32, #tpu.memory_space<vmem>>, vector<1x128xf32>
    tpu.vector_store %arg10[%c46, %c0_277], %560 {strides = array<i32>} : memref<128x256xf32, #tpu.memory_space<vmem>>, vector<1x128xf32>,
    %562 = arith.index_cast %558 : i32 to index
    %c0_278 = arith.constant 0 : index
    %563 = vector.load %arg4[%562, %c0_278] : memref<50x128xf32, #tpu.memory_space<vmem>>, vector<1x128xf32>
    %c46_279 = arith.constant 46 : index
    %c128_280 = arith.constant 128 : index
    %564 = vector.load %arg10[%c46_279, %c128_280] : memref<128x256xf32, #tpu.memory_space<vmem>>, vector<1x128xf32>
    tpu.vector_store %arg10[%c46_279, %c128_280], %563 {strides = array<i32>} : memref<128x256xf32, #tpu.memory_space<vmem>>, vector<1x128xf32>,
    %c47_i32 = arith.constant 47 : i32
    %565 = arith.addi %0, %c47_i32 : i32
    %566 = arith.index_cast %565 : i32 to index
    %567 = memref.load %arg1[%566] : memref<256xi32, #tpu.memory_space<smem>>
    %c47_i32_281 = arith.constant 47 : i32
    %568 = arith.addi %0, %c47_i32_281 : i32
    %569 = arith.index_cast %568 : i32 to index
    %570 = memref.load %arg2[%569] : memref<256xi32, #tpu.memory_space<smem>>
    %571 = arith.index_cast %567 : i32 to index
    %c0_282 = arith.constant 0 : index
    %572 = vector.load %arg3[%571, %c0_282] : memref<40x128xf32, #tpu.memory_space<vmem>>, vector<1x128xf32>
    %c47 = arith.constant 47 : index
    %c0_283 = arith.constant 0 : index
    %573 = vector.load %arg10[%c47, %c0_283] : memref<128x256xf32, #tpu.memory_space<vmem>>, vector<1x128xf32>
    tpu.vector_store %arg10[%c47, %c0_283], %572 {strides = array<i32>} : memref<128x256xf32, #tpu.memory_space<vmem>>, vector<1x128xf32>,
    %574 = arith.index_cast %570 : i32 to index
    %c0_284 = arith.constant 0 : index
    %575 = vector.load %arg4[%574, %c0_284] : memref<50x128xf32, #tpu.memory_space<vmem>>, vector<1x128xf32>
    %c47_285 = arith.constant 47 : index
    %c128_286 = arith.constant 128 : index
    %576 = vector.load %arg10[%c47_285, %c128_286] : memref<128x256xf32, #tpu.memory_space<vmem>>, vector<1x128xf32>
    tpu.vector_store %arg10[%c47_285, %c128_286], %575 {strides = array<i32>} : memref<128x256xf32, #tpu.memory_space<vmem>>, vector<1x128xf32>,
    %c48_i32 = arith.constant 48 : i32
    %577 = arith.addi %0, %c48_i32 : i32
    %578 = arith.index_cast %577 : i32 to index
    %579 = memref.load %arg1[%578] : memref<256xi32, #tpu.memory_space<smem>>
    %c48_i32_287 = arith.constant 48 : i32
    %580 = arith.addi %0, %c48_i32_287 : i32
    %581 = arith.index_cast %580 : i32 to index
    %582 = memref.load %arg2[%581] : memref<256xi32, #tpu.memory_space<smem>>
    %583 = arith.index_cast %579 : i32 to index
    %c0_288 = arith.constant 0 : index
    %584 = vector.load %arg3[%583, %c0_288] : memref<40x128xf32, #tpu.memory_space<vmem>>, vector<1x128xf32>
    %c48 = arith.constant 48 : index
    %c0_289 = arith.constant 0 : index
    %585 = vector.load %arg10[%c48, %c0_289] : memref<128x256xf32, #tpu.memory_space<vmem>>, vector<1x128xf32>
    tpu.vector_store %arg10[%c48, %c0_289], %584 {strides = array<i32>} : memref<128x256xf32, #tpu.memory_space<vmem>>, vector<1x128xf32>,
    %586 = arith.index_cast %582 : i32 to index
    %c0_290 = arith.constant 0 : index
    %587 = vector.load %arg4[%586, %c0_290] : memref<50x128xf32, #tpu.memory_space<vmem>>, vector<1x128xf32>
    %c48_291 = arith.constant 48 : index
    %c128_292 = arith.constant 128 : index
    %588 = vector.load %arg10[%c48_291, %c128_292] : memref<128x256xf32, #tpu.memory_space<vmem>>, vector<1x128xf32>
    tpu.vector_store %arg10[%c48_291, %c128_292], %587 {strides = array<i32>} : memref<128x256xf32, #tpu.memory_space<vmem>>, vector<1x128xf32>,
    %c49_i32 = arith.constant 49 : i32
    %589 = arith.addi %0, %c49_i32 : i32
    %590 = arith.index_cast %589 : i32 to index
    %591 = memref.load %arg1[%590] : memref<256xi32, #tpu.memory_space<smem>>
    %c49_i32_293 = arith.constant 49 : i32
    %592 = arith.addi %0, %c49_i32_293 : i32
    %593 = arith.index_cast %592 : i32 to index
    %594 = memref.load %arg2[%593] : memref<256xi32, #tpu.memory_space<smem>>
    %595 = arith.index_cast %591 : i32 to index
    %c0_294 = arith.constant 0 : index
    %596 = vector.load %arg3[%595, %c0_294] : memref<40x128xf32, #tpu.memory_space<vmem>>, vector<1x128xf32>
    %c49 = arith.constant 49 : index
    %c0_295 = arith.constant 0 : index
    %597 = vector.load %arg10[%c49, %c0_295] : memref<128x256xf32, #tpu.memory_space<vmem>>, vector<1x128xf32>
    tpu.vector_store %arg10[%c49, %c0_295], %596 {strides = array<i32>} : memref<128x256xf32, #tpu.memory_space<vmem>>, vector<1x128xf32>,
    %598 = arith.index_cast %594 : i32 to index
    %c0_296 = arith.constant 0 : index
    %599 = vector.load %arg4[%598, %c0_296] : memref<50x128xf32, #tpu.memory_space<vmem>>, vector<1x128xf32>
    %c49_297 = arith.constant 49 : index
    %c128_298 = arith.constant 128 : index
    %600 = vector.load %arg10[%c49_297, %c128_298] : memref<128x256xf32, #tpu.memory_space<vmem>>, vector<1x128xf32>
    tpu.vector_store %arg10[%c49_297, %c128_298], %599 {strides = array<i32>} : memref<128x256xf32, #tpu.memory_space<vmem>>, vector<1x128xf32>,
    %c50_i32 = arith.constant 50 : i32
    %601 = arith.addi %0, %c50_i32 : i32
    %602 = arith.index_cast %601 : i32 to index
    %603 = memref.load %arg1[%602] : memref<256xi32, #tpu.memory_space<smem>>
    %c50_i32_299 = arith.constant 50 : i32
    %604 = arith.addi %0, %c50_i32_299 : i32
    %605 = arith.index_cast %604 : i32 to index
    %606 = memref.load %arg2[%605] : memref<256xi32, #tpu.memory_space<smem>>
    %607 = arith.index_cast %603 : i32 to index
    %c0_300 = arith.constant 0 : index
    %608 = vector.load %arg3[%607, %c0_300] : memref<40x128xf32, #tpu.memory_space<vmem>>, vector<1x128xf32>
    %c50 = arith.constant 50 : index
    %c0_301 = arith.constant 0 : index
    %609 = vector.load %arg10[%c50, %c0_301] : memref<128x256xf32, #tpu.memory_space<vmem>>, vector<1x128xf32>
    tpu.vector_store %arg10[%c50, %c0_301], %608 {strides = array<i32>} : memref<128x256xf32, #tpu.memory_space<vmem>>, vector<1x128xf32>,
    %610 = arith.index_cast %606 : i32 to index
    %c0_302 = arith.constant 0 : index
    %611 = vector.load %arg4[%610, %c0_302] : memref<50x128xf32, #tpu.memory_space<vmem>>, vector<1x128xf32>
    %c50_303 = arith.constant 50 : index
    %c128_304 = arith.constant 128 : index
    %612 = vector.load %arg10[%c50_303, %c128_304] : memref<128x256xf32, #tpu.memory_space<vmem>>, vector<1x128xf32>
    tpu.vector_store %arg10[%c50_303, %c128_304], %611 {strides = array<i32>} : memref<128x256xf32, #tpu.memory_space<vmem>>, vector<1x128xf32>,
    %c51_i32 = arith.constant 51 : i32
    %613 = arith.addi %0, %c51_i32 : i32
    %614 = arith.index_cast %613 : i32 to index
    %615 = memref.load %arg1[%614] : memref<256xi32, #tpu.memory_space<smem>>
    %c51_i32_305 = arith.constant 51 : i32
    %616 = arith.addi %0, %c51_i32_305 : i32
    %617 = arith.index_cast %616 : i32 to index
    %618 = memref.load %arg2[%617] : memref<256xi32, #tpu.memory_space<smem>>
    %619 = arith.index_cast %615 : i32 to index
    %c0_306 = arith.constant 0 : index
    %620 = vector.load %arg3[%619, %c0_306] : memref<40x128xf32, #tpu.memory_space<vmem>>, vector<1x128xf32>
    %c51 = arith.constant 51 : index
    %c0_307 = arith.constant 0 : index
    %621 = vector.load %arg10[%c51, %c0_307] : memref<128x256xf32, #tpu.memory_space<vmem>>, vector<1x128xf32>
    tpu.vector_store %arg10[%c51, %c0_307], %620 {strides = array<i32>} : memref<128x256xf32, #tpu.memory_space<vmem>>, vector<1x128xf32>,
    %622 = arith.index_cast %618 : i32 to index
    %c0_308 = arith.constant 0 : index
    %623 = vector.load %arg4[%622, %c0_308] : memref<50x128xf32, #tpu.memory_space<vmem>>, vector<1x128xf32>
    %c51_309 = arith.constant 51 : index
    %c128_310 = arith.constant 128 : index
    %624 = vector.load %arg10[%c51_309, %c128_310] : memref<128x256xf32, #tpu.memory_space<vmem>>, vector<1x128xf32>
    tpu.vector_store %arg10[%c51_309, %c128_310], %623 {strides = array<i32>} : memref<128x256xf32, #tpu.memory_space<vmem>>, vector<1x128xf32>,
    %c52_i32 = arith.constant 52 : i32
    %625 = arith.addi %0, %c52_i32 : i32
    %626 = arith.index_cast %625 : i32 to index
    %627 = memref.load %arg1[%626] : memref<256xi32, #tpu.memory_space<smem>>
    %c52_i32_311 = arith.constant 52 : i32
    %628 = arith.addi %0, %c52_i32_311 : i32
    %629 = arith.index_cast %628 : i32 to index
    %630 = memref.load %arg2[%629] : memref<256xi32, #tpu.memory_space<smem>>
    %631 = arith.index_cast %627 : i32 to index
    %c0_312 = arith.constant 0 : index
    %632 = vector.load %arg3[%631, %c0_312] : memref<40x128xf32, #tpu.memory_space<vmem>>, vector<1x128xf32>
    %c52 = arith.constant 52 : index
    %c0_313 = arith.constant 0 : index
    %633 = vector.load %arg10[%c52, %c0_313] : memref<128x256xf32, #tpu.memory_space<vmem>>, vector<1x128xf32>
    tpu.vector_store %arg10[%c52, %c0_313], %632 {strides = array<i32>} : memref<128x256xf32, #tpu.memory_space<vmem>>, vector<1x128xf32>,
    %634 = arith.index_cast %630 : i32 to index
    %c0_314 = arith.constant 0 : index
    %635 = vector.load %arg4[%634, %c0_314] : memref<50x128xf32, #tpu.memory_space<vmem>>, vector<1x128xf32>
    %c52_315 = arith.constant 52 : index
    %c128_316 = arith.constant 128 : index
    %636 = vector.load %arg10[%c52_315, %c128_316] : memref<128x256xf32, #tpu.memory_space<vmem>>, vector<1x128xf32>
    tpu.vector_store %arg10[%c52_315, %c128_316], %635 {strides = array<i32>} : memref<128x256xf32, #tpu.memory_space<vmem>>, vector<1x128xf32>,
    %c53_i32 = arith.constant 53 : i32
    %637 = arith.addi %0, %c53_i32 : i32
    %638 = arith.index_cast %637 : i32 to index
    %639 = memref.load %arg1[%638] : memref<256xi32, #tpu.memory_space<smem>>
    %c53_i32_317 = arith.constant 53 : i32
    %640 = arith.addi %0, %c53_i32_317 : i32
    %641 = arith.index_cast %640 : i32 to index
    %642 = memref.load %arg2[%641] : memref<256xi32, #tpu.memory_space<smem>>
    %643 = arith.index_cast %639 : i32 to index
    %c0_318 = arith.constant 0 : index
    %644 = vector.load %arg3[%643, %c0_318] : memref<40x128xf32, #tpu.memory_space<vmem>>, vector<1x128xf32>
    %c53 = arith.constant 53 : index
    %c0_319 = arith.constant 0 : index
    %645 = vector.load %arg10[%c53, %c0_319] : memref<128x256xf32, #tpu.memory_space<vmem>>, vector<1x128xf32>
    tpu.vector_store %arg10[%c53, %c0_319], %644 {strides = array<i32>} : memref<128x256xf32, #tpu.memory_space<vmem>>, vector<1x128xf32>,
    %646 = arith.index_cast %642 : i32 to index
    %c0_320 = arith.constant 0 : index
    %647 = vector.load %arg4[%646, %c0_320] : memref<50x128xf32, #tpu.memory_space<vmem>>, vector<1x128xf32>
    %c53_321 = arith.constant 53 : index
    %c128_322 = arith.constant 128 : index
    %648 = vector.load %arg10[%c53_321, %c128_322] : memref<128x256xf32, #tpu.memory_space<vmem>>, vector<1x128xf32>
    tpu.vector_store %arg10[%c53_321, %c128_322], %647 {strides = array<i32>} : memref<128x256xf32, #tpu.memory_space<vmem>>, vector<1x128xf32>,
    %c54_i32 = arith.constant 54 : i32
    %649 = arith.addi %0, %c54_i32 : i32
    %650 = arith.index_cast %649 : i32 to index
    %651 = memref.load %arg1[%650] : memref<256xi32, #tpu.memory_space<smem>>
    %c54_i32_323 = arith.constant 54 : i32
    %652 = arith.addi %0, %c54_i32_323 : i32
    %653 = arith.index_cast %652 : i32 to index
    %654 = memref.load %arg2[%653] : memref<256xi32, #tpu.memory_space<smem>>
    %655 = arith.index_cast %651 : i32 to index
    %c0_324 = arith.constant 0 : index
    %656 = vector.load %arg3[%655, %c0_324] : memref<40x128xf32, #tpu.memory_space<vmem>>, vector<1x128xf32>
    %c54 = arith.constant 54 : index
    %c0_325 = arith.constant 0 : index
    %657 = vector.load %arg10[%c54, %c0_325] : memref<128x256xf32, #tpu.memory_space<vmem>>, vector<1x128xf32>
    tpu.vector_store %arg10[%c54, %c0_325], %656 {strides = array<i32>} : memref<128x256xf32, #tpu.memory_space<vmem>>, vector<1x128xf32>,
    %658 = arith.index_cast %654 : i32 to index
    %c0_326 = arith.constant 0 : index
    %659 = vector.load %arg4[%658, %c0_326] : memref<50x128xf32, #tpu.memory_space<vmem>>, vector<1x128xf32>
    %c54_327 = arith.constant 54 : index
    %c128_328 = arith.constant 128 : index
    %660 = vector.load %arg10[%c54_327, %c128_328] : memref<128x256xf32, #tpu.memory_space<vmem>>, vector<1x128xf32>
    tpu.vector_store %arg10[%c54_327, %c128_328], %659 {strides = array<i32>} : memref<128x256xf32, #tpu.memory_space<vmem>>, vector<1x128xf32>,
    %c55_i32 = arith.constant 55 : i32
    %661 = arith.addi %0, %c55_i32 : i32
    %662 = arith.index_cast %661 : i32 to index
    %663 = memref.load %arg1[%662] : memref<256xi32, #tpu.memory_space<smem>>
    %c55_i32_329 = arith.constant 55 : i32
    %664 = arith.addi %0, %c55_i32_329 : i32
    %665 = arith.index_cast %664 : i32 to index
    %666 = memref.load %arg2[%665] : memref<256xi32, #tpu.memory_space<smem>>
    %667 = arith.index_cast %663 : i32 to index
    %c0_330 = arith.constant 0 : index
    %668 = vector.load %arg3[%667, %c0_330] : memref<40x128xf32, #tpu.memory_space<vmem>>, vector<1x128xf32>
    %c55 = arith.constant 55 : index
    %c0_331 = arith.constant 0 : index
    %669 = vector.load %arg10[%c55, %c0_331] : memref<128x256xf32, #tpu.memory_space<vmem>>, vector<1x128xf32>
    tpu.vector_store %arg10[%c55, %c0_331], %668 {strides = array<i32>} : memref<128x256xf32, #tpu.memory_space<vmem>>, vector<1x128xf32>,
    %670 = arith.index_cast %666 : i32 to index
    %c0_332 = arith.constant 0 : index
    %671 = vector.load %arg4[%670, %c0_332] : memref<50x128xf32, #tpu.memory_space<vmem>>, vector<1x128xf32>
    %c55_333 = arith.constant 55 : index
    %c128_334 = arith.constant 128 : index
    %672 = vector.load %arg10[%c55_333, %c128_334] : memref<128x256xf32, #tpu.memory_space<vmem>>, vector<1x128xf32>
    tpu.vector_store %arg10[%c55_333, %c128_334], %671 {strides = array<i32>} : memref<128x256xf32, #tpu.memory_space<vmem>>, vector<1x128xf32>,
    %c56_i32 = arith.constant 56 : i32
    %673 = arith.addi %0, %c56_i32 : i32
    %674 = arith.index_cast %673 : i32 to index
    %675 = memref.load %arg1[%674] : memref<256xi32, #tpu.memory_space<smem>>
    %c56_i32_335 = arith.constant 56 : i32
    %676 = arith.addi %0, %c56_i32_335 : i32
    %677 = arith.index_cast %676 : i32 to index
    %678 = memref.load %arg2[%677] : memref<256xi32, #tpu.memory_space<smem>>
    %679 = arith.index_cast %675 : i32 to index
    %c0_336 = arith.constant 0 : index
    %680 = vector.load %arg3[%679, %c0_336] : memref<40x128xf32, #tpu.memory_space<vmem>>, vector<1x128xf32>
    %c56 = arith.constant 56 : index
    %c0_337 = arith.constant 0 : index
    %681 = vector.load %arg10[%c56, %c0_337] : memref<128x256xf32, #tpu.memory_space<vmem>>, vector<1x128xf32>
    tpu.vector_store %arg10[%c56, %c0_337], %680 {strides = array<i32>} : memref<128x256xf32, #tpu.memory_space<vmem>>, vector<1x128xf32>,
    %682 = arith.index_cast %678 : i32 to index
    %c0_338 = arith.constant 0 : index
    %683 = vector.load %arg4[%682, %c0_338] : memref<50x128xf32, #tpu.memory_space<vmem>>, vector<1x128xf32>
    %c56_339 = arith.constant 56 : index
    %c128_340 = arith.constant 128 : index
    %684 = vector.load %arg10[%c56_339, %c128_340] : memref<128x256xf32, #tpu.memory_space<vmem>>, vector<1x128xf32>
    tpu.vector_store %arg10[%c56_339, %c128_340], %683 {strides = array<i32>} : memref<128x256xf32, #tpu.memory_space<vmem>>, vector<1x128xf32>,
    %c57_i32 = arith.constant 57 : i32
    %685 = arith.addi %0, %c57_i32 : i32
    %686 = arith.index_cast %685 : i32 to index
    %687 = memref.load %arg1[%686] : memref<256xi32, #tpu.memory_space<smem>>
    %c57_i32_341 = arith.constant 57 : i32
    %688 = arith.addi %0, %c57_i32_341 : i32
    %689 = arith.index_cast %688 : i32 to index
    %690 = memref.load %arg2[%689] : memref<256xi32, #tpu.memory_space<smem>>
    %691 = arith.index_cast %687 : i32 to index
    %c0_342 = arith.constant 0 : index
    %692 = vector.load %arg3[%691, %c0_342] : memref<40x128xf32, #tpu.memory_space<vmem>>, vector<1x128xf32>
    %c57 = arith.constant 57 : index
    %c0_343 = arith.constant 0 : index
    %693 = vector.load %arg10[%c57, %c0_343] : memref<128x256xf32, #tpu.memory_space<vmem>>, vector<1x128xf32>
    tpu.vector_store %arg10[%c57, %c0_343], %692 {strides = array<i32>} : memref<128x256xf32, #tpu.memory_space<vmem>>, vector<1x128xf32>,
    %694 = arith.index_cast %690 : i32 to index
    %c0_344 = arith.constant 0 : index
    %695 = vector.load %arg4[%694, %c0_344] : memref<50x128xf32, #tpu.memory_space<vmem>>, vector<1x128xf32>
    %c57_345 = arith.constant 57 : index
    %c128_346 = arith.constant 128 : index
    %696 = vector.load %arg10[%c57_345, %c128_346] : memref<128x256xf32, #tpu.memory_space<vmem>>, vector<1x128xf32>
    tpu.vector_store %arg10[%c57_345, %c128_346], %695 {strides = array<i32>} : memref<128x256xf32, #tpu.memory_space<vmem>>, vector<1x128xf32>,
    %c58_i32 = arith.constant 58 : i32
    %697 = arith.addi %0, %c58_i32 : i32
    %698 = arith.index_cast %697 : i32 to index
    %699 = memref.load %arg1[%698] : memref<256xi32, #tpu.memory_space<smem>>
    %c58_i32_347 = arith.constant 58 : i32
    %700 = arith.addi %0, %c58_i32_347 : i32
    %701 = arith.index_cast %700 : i32 to index
    %702 = memref.load %arg2[%701] : memref<256xi32, #tpu.memory_space<smem>>
    %703 = arith.index_cast %699 : i32 to index
    %c0_348 = arith.constant 0 : index
    %704 = vector.load %arg3[%703, %c0_348] : memref<40x128xf32, #tpu.memory_space<vmem>>, vector<1x128xf32>
    %c58 = arith.constant 58 : index
    %c0_349 = arith.constant 0 : index
    %705 = vector.load %arg10[%c58, %c0_349] : memref<128x256xf32, #tpu.memory_space<vmem>>, vector<1x128xf32>
    tpu.vector_store %arg10[%c58, %c0_349], %704 {strides = array<i32>} : memref<128x256xf32, #tpu.memory_space<vmem>>, vector<1x128xf32>,
    %706 = arith.index_cast %702 : i32 to index
    %c0_350 = arith.constant 0 : index
    %707 = vector.load %arg4[%706, %c0_350] : memref<50x128xf32, #tpu.memory_space<vmem>>, vector<1x128xf32>
    %c58_351 = arith.constant 58 : index
    %c128_352 = arith.constant 128 : index
    %708 = vector.load %arg10[%c58_351, %c128_352] : memref<128x256xf32, #tpu.memory_space<vmem>>, vector<1x128xf32>
    tpu.vector_store %arg10[%c58_351, %c128_352], %707 {strides = array<i32>} : memref<128x256xf32, #tpu.memory_space<vmem>>, vector<1x128xf32>,
    %c59_i32 = arith.constant 59 : i32
    %709 = arith.addi %0, %c59_i32 : i32
    %710 = arith.index_cast %709 : i32 to index
    %711 = memref.load %arg1[%710] : memref<256xi32, #tpu.memory_space<smem>>
    %c59_i32_353 = arith.constant 59 : i32
    %712 = arith.addi %0, %c59_i32_353 : i32
    %713 = arith.index_cast %712 : i32 to index
    %714 = memref.load %arg2[%713] : memref<256xi32, #tpu.memory_space<smem>>
    %715 = arith.index_cast %711 : i32 to index
    %c0_354 = arith.constant 0 : index
    %716 = vector.load %arg3[%715, %c0_354] : memref<40x128xf32, #tpu.memory_space<vmem>>, vector<1x128xf32>
    %c59 = arith.constant 59 : index
    %c0_355 = arith.constant 0 : index
    %717 = vector.load %arg10[%c59, %c0_355] : memref<128x256xf32, #tpu.memory_space<vmem>>, vector<1x128xf32>
    tpu.vector_store %arg10[%c59, %c0_355], %716 {strides = array<i32>} : memref<128x256xf32, #tpu.memory_space<vmem>>, vector<1x128xf32>,
    %718 = arith.index_cast %714 : i32 to index
    %c0_356 = arith.constant 0 : index
    %719 = vector.load %arg4[%718, %c0_356] : memref<50x128xf32, #tpu.memory_space<vmem>>, vector<1x128xf32>
    %c59_357 = arith.constant 59 : index
    %c128_358 = arith.constant 128 : index
    %720 = vector.load %arg10[%c59_357, %c128_358] : memref<128x256xf32, #tpu.memory_space<vmem>>, vector<1x128xf32>
    tpu.vector_store %arg10[%c59_357, %c128_358], %719 {strides = array<i32>} : memref<128x256xf32, #tpu.memory_space<vmem>>, vector<1x128xf32>,
    %c60_i32 = arith.constant 60 : i32
    %721 = arith.addi %0, %c60_i32 : i32
    %722 = arith.index_cast %721 : i32 to index
    %723 = memref.load %arg1[%722] : memref<256xi32, #tpu.memory_space<smem>>
    %c60_i32_359 = arith.constant 60 : i32
    %724 = arith.addi %0, %c60_i32_359 : i32
    %725 = arith.index_cast %724 : i32 to index
    %726 = memref.load %arg2[%725] : memref<256xi32, #tpu.memory_space<smem>>
    %727 = arith.index_cast %723 : i32 to index
    %c0_360 = arith.constant 0 : index
    %728 = vector.load %arg3[%727, %c0_360] : memref<40x128xf32, #tpu.memory_space<vmem>>, vector<1x128xf32>
    %c60 = arith.constant 60 : index
    %c0_361 = arith.constant 0 : index
    %729 = vector.load %arg10[%c60, %c0_361] : memref<128x256xf32, #tpu.memory_space<vmem>>, vector<1x128xf32>
    tpu.vector_store %arg10[%c60, %c0_361], %728 {strides = array<i32>} : memref<128x256xf32, #tpu.memory_space<vmem>>, vector<1x128xf32>,
    %730 = arith.index_cast %726 : i32 to index
    %c0_362 = arith.constant 0 : index
    %731 = vector.load %arg4[%730, %c0_362] : memref<50x128xf32, #tpu.memory_space<vmem>>, vector<1x128xf32>
    %c60_363 = arith.constant 60 : index
    %c128_364 = arith.constant 128 : index
    %732 = vector.load %arg10[%c60_363, %c128_364] : memref<128x256xf32, #tpu.memory_space<vmem>>, vector<1x128xf32>
    tpu.vector_store %arg10[%c60_363, %c128_364], %731 {strides = array<i32>} : memref<128x256xf32, #tpu.memory_space<vmem>>, vector<1x128xf32>,
    %c61_i32 = arith.constant 61 : i32
    %733 = arith.addi %0, %c61_i32 : i32
    %734 = arith.index_cast %733 : i32 to index
    %735 = memref.load %arg1[%734] : memref<256xi32, #tpu.memory_space<smem>>
    %c61_i32_365 = arith.constant 61 : i32
    %736 = arith.addi %0, %c61_i32_365 : i32
    %737 = arith.index_cast %736 : i32 to index
    %738 = memref.load %arg2[%737] : memref<256xi32, #tpu.memory_space<smem>>
    %739 = arith.index_cast %735 : i32 to index
    %c0_366 = arith.constant 0 : index
    %740 = vector.load %arg3[%739, %c0_366] : memref<40x128xf32, #tpu.memory_space<vmem>>, vector<1x128xf32>
    %c61 = arith.constant 61 : index
    %c0_367 = arith.constant 0 : index
    %741 = vector.load %arg10[%c61, %c0_367] : memref<128x256xf32, #tpu.memory_space<vmem>>, vector<1x128xf32>
    tpu.vector_store %arg10[%c61, %c0_367], %740 {strides = array<i32>} : memref<128x256xf32, #tpu.memory_space<vmem>>, vector<1x128xf32>,
    %742 = arith.index_cast %738 : i32 to index
    %c0_368 = arith.constant 0 : index
    %743 = vector.load %arg4[%742, %c0_368] : memref<50x128xf32, #tpu.memory_space<vmem>>, vector<1x128xf32>
    %c61_369 = arith.constant 61 : index
    %c128_370 = arith.constant 128 : index
    %744 = vector.load %arg10[%c61_369, %c128_370] : memref<128x256xf32, #tpu.memory_space<vmem>>, vector<1x128xf32>
    tpu.vector_store %arg10[%c61_369, %c128_370], %743 {strides = array<i32>} : memref<128x256xf32, #tpu.memory_space<vmem>>, vector<1x128xf32>,
    %c62_i32 = arith.constant 62 : i32
    %745 = arith.addi %0, %c62_i32 : i32
    %746 = arith.index_cast %745 : i32 to index
    %747 = memref.load %arg1[%746] : memref<256xi32, #tpu.memory_space<smem>>
    %c62_i32_371 = arith.constant 62 : i32
    %748 = arith.addi %0, %c62_i32_371 : i32
    %749 = arith.index_cast %748 : i32 to index
    %750 = memref.load %arg2[%749] : memref<256xi32, #tpu.memory_space<smem>>
    %751 = arith.index_cast %747 : i32 to index
    %c0_372 = arith.constant 0 : index
    %752 = vector.load %arg3[%751, %c0_372] : memref<40x128xf32, #tpu.memory_space<vmem>>, vector<1x128xf32>
    %c62 = arith.constant 62 : index
    %c0_373 = arith.constant 0 : index
    %753 = vector.load %arg10[%c62, %c0_373] : memref<128x256xf32, #tpu.memory_space<vmem>>, vector<1x128xf32>
    tpu.vector_store %arg10[%c62, %c0_373], %752 {strides = array<i32>} : memref<128x256xf32, #tpu.memory_space<vmem>>, vector<1x128xf32>,
    %754 = arith.index_cast %750 : i32 to index
    %c0_374 = arith.constant 0 : index
    %755 = vector.load %arg4[%754, %c0_374] : memref<50x128xf32, #tpu.memory_space<vmem>>, vector<1x128xf32>
    %c62_375 = arith.constant 62 : index
    %c128_376 = arith.constant 128 : index
    %756 = vector.load %arg10[%c62_375, %c128_376] : memref<128x256xf32, #tpu.memory_space<vmem>>, vector<1x128xf32>
    tpu.vector_store %arg10[%c62_375, %c128_376], %755 {strides = array<i32>} : memref<128x256xf32, #tpu.memory_space<vmem>>, vector<1x128xf32>,
    %c63_i32 = arith.constant 63 : i32
    %757 = arith.addi %0, %c63_i32 : i32
    %758 = arith.index_cast %757 : i32 to index
    %759 = memref.load %arg1[%758] : memref<256xi32, #tpu.memory_space<smem>>
    %c63_i32_377 = arith.constant 63 : i32
    %760 = arith.addi %0, %c63_i32_377 : i32
    %761 = arith.index_cast %760 : i32 to index
    %762 = memref.load %arg2[%761] : memref<256xi32, #tpu.memory_space<smem>>
    %763 = arith.index_cast %759 : i32 to index
    %c0_378 = arith.constant 0 : index
    %764 = vector.load %arg3[%763, %c0_378] : memref<40x128xf32, #tpu.memory_space<vmem>>, vector<1x128xf32>
    %c63 = arith.constant 63 : index
    %c0_379 = arith.constant 0 : index
    %765 = vector.load %arg10[%c63, %c0_379] : memref<128x256xf32, #tpu.memory_space<vmem>>, vector<1x128xf32>
    tpu.vector_store %arg10[%c63, %c0_379], %764 {strides = array<i32>} : memref<128x256xf32, #tpu.memory_space<vmem>>, vector<1x128xf32>,
    %766 = arith.index_cast %762 : i32 to index
    %c0_380 = arith.constant 0 : index
    %767 = vector.load %arg4[%766, %c0_380] : memref<50x128xf32, #tpu.memory_space<vmem>>, vector<1x128xf32>
    %c63_381 = arith.constant 63 : index
    %c128_382 = arith.constant 128 : index
    %768 = vector.load %arg10[%c63_381, %c128_382] : memref<128x256xf32, #tpu.memory_space<vmem>>, vector<1x128xf32>
    tpu.vector_store %arg10[%c63_381, %c128_382], %767 {strides = array<i32>} : memref<128x256xf32, #tpu.memory_space<vmem>>, vector<1x128xf32>,
    %c64_i32 = arith.constant 64 : i32
    %769 = arith.addi %0, %c64_i32 : i32
    %770 = arith.index_cast %769 : i32 to index
    %771 = memref.load %arg1[%770] : memref<256xi32, #tpu.memory_space<smem>>
    %c64_i32_383 = arith.constant 64 : i32
    %772 = arith.addi %0, %c64_i32_383 : i32
    %773 = arith.index_cast %772 : i32 to index
    %774 = memref.load %arg2[%773] : memref<256xi32, #tpu.memory_space<smem>>
    %775 = arith.index_cast %771 : i32 to index
    %c0_384 = arith.constant 0 : index
    %776 = vector.load %arg3[%775, %c0_384] : memref<40x128xf32, #tpu.memory_space<vmem>>, vector<1x128xf32>
    %c64 = arith.constant 64 : index
    %c0_385 = arith.constant 0 : index
    %777 = vector.load %arg10[%c64, %c0_385] : memref<128x256xf32, #tpu.memory_space<vmem>>, vector<1x128xf32>
    tpu.vector_store %arg10[%c64, %c0_385], %776 {strides = array<i32>} : memref<128x256xf32, #tpu.memory_space<vmem>>, vector<1x128xf32>,
    %778 = arith.index_cast %774 : i32 to index
    %c0_386 = arith.constant 0 : index
    %779 = vector.load %arg4[%778, %c0_386] : memref<50x128xf32, #tpu.memory_space<vmem>>, vector<1x128xf32>
    %c64_387 = arith.constant 64 : index
    %c128_388 = arith.constant 128 : index
    %780 = vector.load %arg10[%c64_387, %c128_388] : memref<128x256xf32, #tpu.memory_space<vmem>>, vector<1x128xf32>
    tpu.vector_store %arg10[%c64_387, %c128_388], %779 {strides = array<i32>} : memref<128x256xf32, #tpu.memory_space<vmem>>, vector<1x128xf32>,
    %c65_i32 = arith.constant 65 : i32
    %781 = arith.addi %0, %c65_i32 : i32
    %782 = arith.index_cast %781 : i32 to index
    %783 = memref.load %arg1[%782] : memref<256xi32, #tpu.memory_space<smem>>
    %c65_i32_389 = arith.constant 65 : i32
    %784 = arith.addi %0, %c65_i32_389 : i32
    %785 = arith.index_cast %784 : i32 to index
    %786 = memref.load %arg2[%785] : memref<256xi32, #tpu.memory_space<smem>>
    %787 = arith.index_cast %783 : i32 to index
    %c0_390 = arith.constant 0 : index
    %788 = vector.load %arg3[%787, %c0_390] : memref<40x128xf32, #tpu.memory_space<vmem>>, vector<1x128xf32>
    %c65 = arith.constant 65 : index
    %c0_391 = arith.constant 0 : index
    %789 = vector.load %arg10[%c65, %c0_391] : memref<128x256xf32, #tpu.memory_space<vmem>>, vector<1x128xf32>
    tpu.vector_store %arg10[%c65, %c0_391], %788 {strides = array<i32>} : memref<128x256xf32, #tpu.memory_space<vmem>>, vector<1x128xf32>,
    %790 = arith.index_cast %786 : i32 to index
    %c0_392 = arith.constant 0 : index
    %791 = vector.load %arg4[%790, %c0_392] : memref<50x128xf32, #tpu.memory_space<vmem>>, vector<1x128xf32>
    %c65_393 = arith.constant 65 : index
    %c128_394 = arith.constant 128 : index
    %792 = vector.load %arg10[%c65_393, %c128_394] : memref<128x256xf32, #tpu.memory_space<vmem>>, vector<1x128xf32>
    tpu.vector_store %arg10[%c65_393, %c128_394], %791 {strides = array<i32>} : memref<128x256xf32, #tpu.memory_space<vmem>>, vector<1x128xf32>,
    %c66_i32 = arith.constant 66 : i32
    %793 = arith.addi %0, %c66_i32 : i32
    %794 = arith.index_cast %793 : i32 to index
    %795 = memref.load %arg1[%794] : memref<256xi32, #tpu.memory_space<smem>>
    %c66_i32_395 = arith.constant 66 : i32
    %796 = arith.addi %0, %c66_i32_395 : i32
    %797 = arith.index_cast %796 : i32 to index
    %798 = memref.load %arg2[%797] : memref<256xi32, #tpu.memory_space<smem>>
    %799 = arith.index_cast %795 : i32 to index
    %c0_396 = arith.constant 0 : index
    %800 = vector.load %arg3[%799, %c0_396] : memref<40x128xf32, #tpu.memory_space<vmem>>, vector<1x128xf32>
    %c66 = arith.constant 66 : index
    %c0_397 = arith.constant 0 : index
    %801 = vector.load %arg10[%c66, %c0_397] : memref<128x256xf32, #tpu.memory_space<vmem>>, vector<1x128xf32>
    tpu.vector_store %arg10[%c66, %c0_397], %800 {strides = array<i32>} : memref<128x256xf32, #tpu.memory_space<vmem>>, vector<1x128xf32>,
    %802 = arith.index_cast %798 : i32 to index
    %c0_398 = arith.constant 0 : index
    %803 = vector.load %arg4[%802, %c0_398] : memref<50x128xf32, #tpu.memory_space<vmem>>, vector<1x128xf32>
    %c66_399 = arith.constant 66 : index
    %c128_400 = arith.constant 128 : index
    %804 = vector.load %arg10[%c66_399, %c128_400] : memref<128x256xf32, #tpu.memory_space<vmem>>, vector<1x128xf32>
    tpu.vector_store %arg10[%c66_399, %c128_400], %803 {strides = array<i32>} : memref<128x256xf32, #tpu.memory_space<vmem>>, vector<1x128xf32>,
    %c67_i32 = arith.constant 67 : i32
    %805 = arith.addi %0, %c67_i32 : i32
    %806 = arith.index_cast %805 : i32 to index
    %807 = memref.load %arg1[%806] : memref<256xi32, #tpu.memory_space<smem>>
    %c67_i32_401 = arith.constant 67 : i32
    %808 = arith.addi %0, %c67_i32_401 : i32
    %809 = arith.index_cast %808 : i32 to index
    %810 = memref.load %arg2[%809] : memref<256xi32, #tpu.memory_space<smem>>
    %811 = arith.index_cast %807 : i32 to index
    %c0_402 = arith.constant 0 : index
    %812 = vector.load %arg3[%811, %c0_402] : memref<40x128xf32, #tpu.memory_space<vmem>>, vector<1x128xf32>
    %c67 = arith.constant 67 : index
    %c0_403 = arith.constant 0 : index
    %813 = vector.load %arg10[%c67, %c0_403] : memref<128x256xf32, #tpu.memory_space<vmem>>, vector<1x128xf32>
    tpu.vector_store %arg10[%c67, %c0_403], %812 {strides = array<i32>} : memref<128x256xf32, #tpu.memory_space<vmem>>, vector<1x128xf32>,
    %814 = arith.index_cast %810 : i32 to index
    %c0_404 = arith.constant 0 : index
    %815 = vector.load %arg4[%814, %c0_404] : memref<50x128xf32, #tpu.memory_space<vmem>>, vector<1x128xf32>
    %c67_405 = arith.constant 67 : index
    %c128_406 = arith.constant 128 : index
    %816 = vector.load %arg10[%c67_405, %c128_406] : memref<128x256xf32, #tpu.memory_space<vmem>>, vector<1x128xf32>
    tpu.vector_store %arg10[%c67_405, %c128_406], %815 {strides = array<i32>} : memref<128x256xf32, #tpu.memory_space<vmem>>, vector<1x128xf32>,
    %c68_i32 = arith.constant 68 : i32
    %817 = arith.addi %0, %c68_i32 : i32
    %818 = arith.index_cast %817 : i32 to index
    %819 = memref.load %arg1[%818] : memref<256xi32, #tpu.memory_space<smem>>
    %c68_i32_407 = arith.constant 68 : i32
    %820 = arith.addi %0, %c68_i32_407 : i32
    %821 = arith.index_cast %820 : i32 to index
    %822 = memref.load %arg2[%821] : memref<256xi32, #tpu.memory_space<smem>>
    %823 = arith.index_cast %819 : i32 to index
    %c0_408 = arith.constant 0 : index
    %824 = vector.load %arg3[%823, %c0_408] : memref<40x128xf32, #tpu.memory_space<vmem>>, vector<1x128xf32>
    %c68 = arith.constant 68 : index
    %c0_409 = arith.constant 0 : index
    %825 = vector.load %arg10[%c68, %c0_409] : memref<128x256xf32, #tpu.memory_space<vmem>>, vector<1x128xf32>
    tpu.vector_store %arg10[%c68, %c0_409], %824 {strides = array<i32>} : memref<128x256xf32, #tpu.memory_space<vmem>>, vector<1x128xf32>,
    %826 = arith.index_cast %822 : i32 to index
    %c0_410 = arith.constant 0 : index
    %827 = vector.load %arg4[%826, %c0_410] : memref<50x128xf32, #tpu.memory_space<vmem>>, vector<1x128xf32>
    %c68_411 = arith.constant 68 : index
    %c128_412 = arith.constant 128 : index
    %828 = vector.load %arg10[%c68_411, %c128_412] : memref<128x256xf32, #tpu.memory_space<vmem>>, vector<1x128xf32>
    tpu.vector_store %arg10[%c68_411, %c128_412], %827 {strides = array<i32>} : memref<128x256xf32, #tpu.memory_space<vmem>>, vector<1x128xf32>,
    %c69_i32 = arith.constant 69 : i32
    %829 = arith.addi %0, %c69_i32 : i32
    %830 = arith.index_cast %829 : i32 to index
    %831 = memref.load %arg1[%830] : memref<256xi32, #tpu.memory_space<smem>>
    %c69_i32_413 = arith.constant 69 : i32
    %832 = arith.addi %0, %c69_i32_413 : i32
    %833 = arith.index_cast %832 : i32 to index
    %834 = memref.load %arg2[%833] : memref<256xi32, #tpu.memory_space<smem>>
    %835 = arith.index_cast %831 : i32 to index
    %c0_414 = arith.constant 0 : index
    %836 = vector.load %arg3[%835, %c0_414] : memref<40x128xf32, #tpu.memory_space<vmem>>, vector<1x128xf32>
    %c69 = arith.constant 69 : index
    %c0_415 = arith.constant 0 : index
    %837 = vector.load %arg10[%c69, %c0_415] : memref<128x256xf32, #tpu.memory_space<vmem>>, vector<1x128xf32>
    tpu.vector_store %arg10[%c69, %c0_415], %836 {strides = array<i32>} : memref<128x256xf32, #tpu.memory_space<vmem>>, vector<1x128xf32>,
    %838 = arith.index_cast %834 : i32 to index
    %c0_416 = arith.constant 0 : index
    %839 = vector.load %arg4[%838, %c0_416] : memref<50x128xf32, #tpu.memory_space<vmem>>, vector<1x128xf32>
    %c69_417 = arith.constant 69 : index
    %c128_418 = arith.constant 128 : index
    %840 = vector.load %arg10[%c69_417, %c128_418] : memref<128x256xf32, #tpu.memory_space<vmem>>, vector<1x128xf32>
    tpu.vector_store %arg10[%c69_417, %c128_418], %839 {strides = array<i32>} : memref<128x256xf32, #tpu.memory_space<vmem>>, vector<1x128xf32>,
    %c70_i32 = arith.constant 70 : i32
    %841 = arith.addi %0, %c70_i32 : i32
    %842 = arith.index_cast %841 : i32 to index
    %843 = memref.load %arg1[%842] : memref<256xi32, #tpu.memory_space<smem>>
    %c70_i32_419 = arith.constant 70 : i32
    %844 = arith.addi %0, %c70_i32_419 : i32
    %845 = arith.index_cast %844 : i32 to index
    %846 = memref.load %arg2[%845] : memref<256xi32, #tpu.memory_space<smem>>
    %847 = arith.index_cast %843 : i32 to index
    %c0_420 = arith.constant 0 : index
    %848 = vector.load %arg3[%847, %c0_420] : memref<40x128xf32, #tpu.memory_space<vmem>>, vector<1x128xf32>
    %c70 = arith.constant 70 : index
    %c0_421 = arith.constant 0 : index
    %849 = vector.load %arg10[%c70, %c0_421] : memref<128x256xf32, #tpu.memory_space<vmem>>, vector<1x128xf32>
    tpu.vector_store %arg10[%c70, %c0_421], %848 {strides = array<i32>} : memref<128x256xf32, #tpu.memory_space<vmem>>, vector<1x128xf32>,
    %850 = arith.index_cast %846 : i32 to index
    %c0_422 = arith.constant 0 : index
    %851 = vector.load %arg4[%850, %c0_422] : memref<50x128xf32, #tpu.memory_space<vmem>>, vector<1x128xf32>
    %c70_423 = arith.constant 70 : index
    %c128_424 = arith.constant 128 : index
    %852 = vector.load %arg10[%c70_423, %c128_424] : memref<128x256xf32, #tpu.memory_space<vmem>>, vector<1x128xf32>
    tpu.vector_store %arg10[%c70_423, %c128_424], %851 {strides = array<i32>} : memref<128x256xf32, #tpu.memory_space<vmem>>, vector<1x128xf32>,
    %c71_i32 = arith.constant 71 : i32
    %853 = arith.addi %0, %c71_i32 : i32
    %854 = arith.index_cast %853 : i32 to index
    %855 = memref.load %arg1[%854] : memref<256xi32, #tpu.memory_space<smem>>
    %c71_i32_425 = arith.constant 71 : i32
    %856 = arith.addi %0, %c71_i32_425 : i32
    %857 = arith.index_cast %856 : i32 to index
    %858 = memref.load %arg2[%857] : memref<256xi32, #tpu.memory_space<smem>>
    %859 = arith.index_cast %855 : i32 to index
    %c0_426 = arith.constant 0 : index
    %860 = vector.load %arg3[%859, %c0_426] : memref<40x128xf32, #tpu.memory_space<vmem>>, vector<1x128xf32>
    %c71 = arith.constant 71 : index
    %c0_427 = arith.constant 0 : index
    %861 = vector.load %arg10[%c71, %c0_427] : memref<128x256xf32, #tpu.memory_space<vmem>>, vector<1x128xf32>
    tpu.vector_store %arg10[%c71, %c0_427], %860 {strides = array<i32>} : memref<128x256xf32, #tpu.memory_space<vmem>>, vector<1x128xf32>,
    %862 = arith.index_cast %858 : i32 to index
    %c0_428 = arith.constant 0 : index
    %863 = vector.load %arg4[%862, %c0_428] : memref<50x128xf32, #tpu.memory_space<vmem>>, vector<1x128xf32>
    %c71_429 = arith.constant 71 : index
    %c128_430 = arith.constant 128 : index
    %864 = vector.load %arg10[%c71_429, %c128_430] : memref<128x256xf32, #tpu.memory_space<vmem>>, vector<1x128xf32>
    tpu.vector_store %arg10[%c71_429, %c128_430], %863 {strides = array<i32>} : memref<128x256xf32, #tpu.memory_space<vmem>>, vector<1x128xf32>,
    %c72_i32 = arith.constant 72 : i32
    %865 = arith.addi %0, %c72_i32 : i32
    %866 = arith.index_cast %865 : i32 to index
    %867 = memref.load %arg1[%866] : memref<256xi32, #tpu.memory_space<smem>>
    %c72_i32_431 = arith.constant 72 : i32
    %868 = arith.addi %0, %c72_i32_431 : i32
    %869 = arith.index_cast %868 : i32 to index
    %870 = memref.load %arg2[%869] : memref<256xi32, #tpu.memory_space<smem>>
    %871 = arith.index_cast %867 : i32 to index
    %c0_432 = arith.constant 0 : index
    %872 = vector.load %arg3[%871, %c0_432] : memref<40x128xf32, #tpu.memory_space<vmem>>, vector<1x128xf32>
    %c72 = arith.constant 72 : index
    %c0_433 = arith.constant 0 : index
    %873 = vector.load %arg10[%c72, %c0_433] : memref<128x256xf32, #tpu.memory_space<vmem>>, vector<1x128xf32>
    tpu.vector_store %arg10[%c72, %c0_433], %872 {strides = array<i32>} : memref<128x256xf32, #tpu.memory_space<vmem>>, vector<1x128xf32>,
    %874 = arith.index_cast %870 : i32 to index
    %c0_434 = arith.constant 0 : index
    %875 = vector.load %arg4[%874, %c0_434] : memref<50x128xf32, #tpu.memory_space<vmem>>, vector<1x128xf32>
    %c72_435 = arith.constant 72 : index
    %c128_436 = arith.constant 128 : index
    %876 = vector.load %arg10[%c72_435, %c128_436] : memref<128x256xf32, #tpu.memory_space<vmem>>, vector<1x128xf32>
    tpu.vector_store %arg10[%c72_435, %c128_436], %875 {strides = array<i32>} : memref<128x256xf32, #tpu.memory_space<vmem>>, vector<1x128xf32>,
    %c73_i32 = arith.constant 73 : i32
    %877 = arith.addi %0, %c73_i32 : i32
    %878 = arith.index_cast %877 : i32 to index
    %879 = memref.load %arg1[%878] : memref<256xi32, #tpu.memory_space<smem>>
    %c73_i32_437 = arith.constant 73 : i32
    %880 = arith.addi %0, %c73_i32_437 : i32
    %881 = arith.index_cast %880 : i32 to index
    %882 = memref.load %arg2[%881] : memref<256xi32, #tpu.memory_space<smem>>
    %883 = arith.index_cast %879 : i32 to index
    %c0_438 = arith.constant 0 : index
    %884 = vector.load %arg3[%883, %c0_438] : memref<40x128xf32, #tpu.memory_space<vmem>>, vector<1x128xf32>
    %c73 = arith.constant 73 : index
    %c0_439 = arith.constant 0 : index
    %885 = vector.load %arg10[%c73, %c0_439] : memref<128x256xf32, #tpu.memory_space<vmem>>, vector<1x128xf32>
    tpu.vector_store %arg10[%c73, %c0_439], %884 {strides = array<i32>} : memref<128x256xf32, #tpu.memory_space<vmem>>, vector<1x128xf32>,
    %886 = arith.index_cast %882 : i32 to index
    %c0_440 = arith.constant 0 : index
    %887 = vector.load %arg4[%886, %c0_440] : memref<50x128xf32, #tpu.memory_space<vmem>>, vector<1x128xf32>
    %c73_441 = arith.constant 73 : index
    %c128_442 = arith.constant 128 : index
    %888 = vector.load %arg10[%c73_441, %c128_442] : memref<128x256xf32, #tpu.memory_space<vmem>>, vector<1x128xf32>
    tpu.vector_store %arg10[%c73_441, %c128_442], %887 {strides = array<i32>} : memref<128x256xf32, #tpu.memory_space<vmem>>, vector<1x128xf32>,
    %c74_i32 = arith.constant 74 : i32
    %889 = arith.addi %0, %c74_i32 : i32
    %890 = arith.index_cast %889 : i32 to index
    %891 = memref.load %arg1[%890] : memref<256xi32, #tpu.memory_space<smem>>
    %c74_i32_443 = arith.constant 74 : i32
    %892 = arith.addi %0, %c74_i32_443 : i32
    %893 = arith.index_cast %892 : i32 to index
    %894 = memref.load %arg2[%893] : memref<256xi32, #tpu.memory_space<smem>>
    %895 = arith.index_cast %891 : i32 to index
    %c0_444 = arith.constant 0 : index
    %896 = vector.load %arg3[%895, %c0_444] : memref<40x128xf32, #tpu.memory_space<vmem>>, vector<1x128xf32>
    %c74 = arith.constant 74 : index
    %c0_445 = arith.constant 0 : index
    %897 = vector.load %arg10[%c74, %c0_445] : memref<128x256xf32, #tpu.memory_space<vmem>>, vector<1x128xf32>
    tpu.vector_store %arg10[%c74, %c0_445], %896 {strides = array<i32>} : memref<128x256xf32, #tpu.memory_space<vmem>>, vector<1x128xf32>,
    %898 = arith.index_cast %894 : i32 to index
    %c0_446 = arith.constant 0 : index
    %899 = vector.load %arg4[%898, %c0_446] : memref<50x128xf32, #tpu.memory_space<vmem>>, vector<1x128xf32>
    %c74_447 = arith.constant 74 : index
    %c128_448 = arith.constant 128 : index
    %900 = vector.load %arg10[%c74_447, %c128_448] : memref<128x256xf32, #tpu.memory_space<vmem>>, vector<1x128xf32>
    tpu.vector_store %arg10[%c74_447, %c128_448], %899 {strides = array<i32>} : memref<128x256xf32, #tpu.memory_space<vmem>>, vector<1x128xf32>,
    %c75_i32 = arith.constant 75 : i32
    %901 = arith.addi %0, %c75_i32 : i32
    %902 = arith.index_cast %901 : i32 to index
    %903 = memref.load %arg1[%902] : memref<256xi32, #tpu.memory_space<smem>>
    %c75_i32_449 = arith.constant 75 : i32
    %904 = arith.addi %0, %c75_i32_449 : i32
    %905 = arith.index_cast %904 : i32 to index
    %906 = memref.load %arg2[%905] : memref<256xi32, #tpu.memory_space<smem>>
    %907 = arith.index_cast %903 : i32 to index
    %c0_450 = arith.constant 0 : index
    %908 = vector.load %arg3[%907, %c0_450] : memref<40x128xf32, #tpu.memory_space<vmem>>, vector<1x128xf32>
    %c75 = arith.constant 75 : index
    %c0_451 = arith.constant 0 : index
    %909 = vector.load %arg10[%c75, %c0_451] : memref<128x256xf32, #tpu.memory_space<vmem>>, vector<1x128xf32>
    tpu.vector_store %arg10[%c75, %c0_451], %908 {strides = array<i32>} : memref<128x256xf32, #tpu.memory_space<vmem>>, vector<1x128xf32>,
    %910 = arith.index_cast %906 : i32 to index
    %c0_452 = arith.constant 0 : index
    %911 = vector.load %arg4[%910, %c0_452] : memref<50x128xf32, #tpu.memory_space<vmem>>, vector<1x128xf32>
    %c75_453 = arith.constant 75 : index
    %c128_454 = arith.constant 128 : index
    %912 = vector.load %arg10[%c75_453, %c128_454] : memref<128x256xf32, #tpu.memory_space<vmem>>, vector<1x128xf32>
    tpu.vector_store %arg10[%c75_453, %c128_454], %911 {strides = array<i32>} : memref<128x256xf32, #tpu.memory_space<vmem>>, vector<1x128xf32>,
    %c76_i32 = arith.constant 76 : i32
    %913 = arith.addi %0, %c76_i32 : i32
    %914 = arith.index_cast %913 : i32 to index
    %915 = memref.load %arg1[%914] : memref<256xi32, #tpu.memory_space<smem>>
    %c76_i32_455 = arith.constant 76 : i32
    %916 = arith.addi %0, %c76_i32_455 : i32
    %917 = arith.index_cast %916 : i32 to index
    %918 = memref.load %arg2[%917] : memref<256xi32, #tpu.memory_space<smem>>
    %919 = arith.index_cast %915 : i32 to index
    %c0_456 = arith.constant 0 : index
    %920 = vector.load %arg3[%919, %c0_456] : memref<40x128xf32, #tpu.memory_space<vmem>>, vector<1x128xf32>
    %c76 = arith.constant 76 : index
    %c0_457 = arith.constant 0 : index
    %921 = vector.load %arg10[%c76, %c0_457] : memref<128x256xf32, #tpu.memory_space<vmem>>, vector<1x128xf32>
    tpu.vector_store %arg10[%c76, %c0_457], %920 {strides = array<i32>} : memref<128x256xf32, #tpu.memory_space<vmem>>, vector<1x128xf32>,
    %922 = arith.index_cast %918 : i32 to index
    %c0_458 = arith.constant 0 : index
    %923 = vector.load %arg4[%922, %c0_458] : memref<50x128xf32, #tpu.memory_space<vmem>>, vector<1x128xf32>
    %c76_459 = arith.constant 76 : index
    %c128_460 = arith.constant 128 : index
    %924 = vector.load %arg10[%c76_459, %c128_460] : memref<128x256xf32, #tpu.memory_space<vmem>>, vector<1x128xf32>
    tpu.vector_store %arg10[%c76_459, %c128_460], %923 {strides = array<i32>} : memref<128x256xf32, #tpu.memory_space<vmem>>, vector<1x128xf32>,
    %c77_i32 = arith.constant 77 : i32
    %925 = arith.addi %0, %c77_i32 : i32
    %926 = arith.index_cast %925 : i32 to index
    %927 = memref.load %arg1[%926] : memref<256xi32, #tpu.memory_space<smem>>
    %c77_i32_461 = arith.constant 77 : i32
    %928 = arith.addi %0, %c77_i32_461 : i32
    %929 = arith.index_cast %928 : i32 to index
    %930 = memref.load %arg2[%929] : memref<256xi32, #tpu.memory_space<smem>>
    %931 = arith.index_cast %927 : i32 to index
    %c0_462 = arith.constant 0 : index
    %932 = vector.load %arg3[%931, %c0_462] : memref<40x128xf32, #tpu.memory_space<vmem>>, vector<1x128xf32>
    %c77 = arith.constant 77 : index
    %c0_463 = arith.constant 0 : index
    %933 = vector.load %arg10[%c77, %c0_463] : memref<128x256xf32, #tpu.memory_space<vmem>>, vector<1x128xf32>
    tpu.vector_store %arg10[%c77, %c0_463], %932 {strides = array<i32>} : memref<128x256xf32, #tpu.memory_space<vmem>>, vector<1x128xf32>,
    %934 = arith.index_cast %930 : i32 to index
    %c0_464 = arith.constant 0 : index
    %935 = vector.load %arg4[%934, %c0_464] : memref<50x128xf32, #tpu.memory_space<vmem>>, vector<1x128xf32>
    %c77_465 = arith.constant 77 : index
    %c128_466 = arith.constant 128 : index
    %936 = vector.load %arg10[%c77_465, %c128_466] : memref<128x256xf32, #tpu.memory_space<vmem>>, vector<1x128xf32>
    tpu.vector_store %arg10[%c77_465, %c128_466], %935 {strides = array<i32>} : memref<128x256xf32, #tpu.memory_space<vmem>>, vector<1x128xf32>,
    %c78_i32 = arith.constant 78 : i32
    %937 = arith.addi %0, %c78_i32 : i32
    %938 = arith.index_cast %937 : i32 to index
    %939 = memref.load %arg1[%938] : memref<256xi32, #tpu.memory_space<smem>>
    %c78_i32_467 = arith.constant 78 : i32
    %940 = arith.addi %0, %c78_i32_467 : i32
    %941 = arith.index_cast %940 : i32 to index
    %942 = memref.load %arg2[%941] : memref<256xi32, #tpu.memory_space<smem>>
    %943 = arith.index_cast %939 : i32 to index
    %c0_468 = arith.constant 0 : index
    %944 = vector.load %arg3[%943, %c0_468] : memref<40x128xf32, #tpu.memory_space<vmem>>, vector<1x128xf32>
    %c78 = arith.constant 78 : index
    %c0_469 = arith.constant 0 : index
    %945 = vector.load %arg10[%c78, %c0_469] : memref<128x256xf32, #tpu.memory_space<vmem>>, vector<1x128xf32>
    tpu.vector_store %arg10[%c78, %c0_469], %944 {strides = array<i32>} : memref<128x256xf32, #tpu.memory_space<vmem>>, vector<1x128xf32>,
    %946 = arith.index_cast %942 : i32 to index
    %c0_470 = arith.constant 0 : index
    %947 = vector.load %arg4[%946, %c0_470] : memref<50x128xf32, #tpu.memory_space<vmem>>, vector<1x128xf32>
    %c78_471 = arith.constant 78 : index
    %c128_472 = arith.constant 128 : index
    %948 = vector.load %arg10[%c78_471, %c128_472] : memref<128x256xf32, #tpu.memory_space<vmem>>, vector<1x128xf32>
    tpu.vector_store %arg10[%c78_471, %c128_472], %947 {strides = array<i32>} : memref<128x256xf32, #tpu.memory_space<vmem>>, vector<1x128xf32>,
    %c79_i32 = arith.constant 79 : i32
    %949 = arith.addi %0, %c79_i32 : i32
    %950 = arith.index_cast %949 : i32 to index
    %951 = memref.load %arg1[%950] : memref<256xi32, #tpu.memory_space<smem>>
    %c79_i32_473 = arith.constant 79 : i32
    %952 = arith.addi %0, %c79_i32_473 : i32
    %953 = arith.index_cast %952 : i32 to index
    %954 = memref.load %arg2[%953] : memref<256xi32, #tpu.memory_space<smem>>
    %955 = arith.index_cast %951 : i32 to index
    %c0_474 = arith.constant 0 : index
    %956 = vector.load %arg3[%955, %c0_474] : memref<40x128xf32, #tpu.memory_space<vmem>>, vector<1x128xf32>
    %c79 = arith.constant 79 : index
    %c0_475 = arith.constant 0 : index
    %957 = vector.load %arg10[%c79, %c0_475] : memref<128x256xf32, #tpu.memory_space<vmem>>, vector<1x128xf32>
    tpu.vector_store %arg10[%c79, %c0_475], %956 {strides = array<i32>} : memref<128x256xf32, #tpu.memory_space<vmem>>, vector<1x128xf32>,
    %958 = arith.index_cast %954 : i32 to index
    %c0_476 = arith.constant 0 : index
    %959 = vector.load %arg4[%958, %c0_476] : memref<50x128xf32, #tpu.memory_space<vmem>>, vector<1x128xf32>
    %c79_477 = arith.constant 79 : index
    %c128_478 = arith.constant 128 : index
    %960 = vector.load %arg10[%c79_477, %c128_478] : memref<128x256xf32, #tpu.memory_space<vmem>>, vector<1x128xf32>
    tpu.vector_store %arg10[%c79_477, %c128_478], %959 {strides = array<i32>} : memref<128x256xf32, #tpu.memory_space<vmem>>, vector<1x128xf32>,
    %c80_i32 = arith.constant 80 : i32
    %961 = arith.addi %0, %c80_i32 : i32
    %962 = arith.index_cast %961 : i32 to index
    %963 = memref.load %arg1[%962] : memref<256xi32, #tpu.memory_space<smem>>
    %c80_i32_479 = arith.constant 80 : i32
    %964 = arith.addi %0, %c80_i32_479 : i32
    %965 = arith.index_cast %964 : i32 to index
    %966 = memref.load %arg2[%965] : memref<256xi32, #tpu.memory_space<smem>>
    %967 = arith.index_cast %963 : i32 to index
    %c0_480 = arith.constant 0 : index
    %968 = vector.load %arg3[%967, %c0_480] : memref<40x128xf32, #tpu.memory_space<vmem>>, vector<1x128xf32>
    %c80 = arith.constant 80 : index
    %c0_481 = arith.constant 0 : index
    %969 = vector.load %arg10[%c80, %c0_481] : memref<128x256xf32, #tpu.memory_space<vmem>>, vector<1x128xf32>
    tpu.vector_store %arg10[%c80, %c0_481], %968 {strides = array<i32>} : memref<128x256xf32, #tpu.memory_space<vmem>>, vector<1x128xf32>,
    %970 = arith.index_cast %966 : i32 to index
    %c0_482 = arith.constant 0 : index
    %971 = vector.load %arg4[%970, %c0_482] : memref<50x128xf32, #tpu.memory_space<vmem>>, vector<1x128xf32>
    %c80_483 = arith.constant 80 : index
    %c128_484 = arith.constant 128 : index
    %972 = vector.load %arg10[%c80_483, %c128_484] : memref<128x256xf32, #tpu.memory_space<vmem>>, vector<1x128xf32>
    tpu.vector_store %arg10[%c80_483, %c128_484], %971 {strides = array<i32>} : memref<128x256xf32, #tpu.memory_space<vmem>>, vector<1x128xf32>,
    %c81_i32 = arith.constant 81 : i32
    %973 = arith.addi %0, %c81_i32 : i32
    %974 = arith.index_cast %973 : i32 to index
    %975 = memref.load %arg1[%974] : memref<256xi32, #tpu.memory_space<smem>>
    %c81_i32_485 = arith.constant 81 : i32
    %976 = arith.addi %0, %c81_i32_485 : i32
    %977 = arith.index_cast %976 : i32 to index
    %978 = memref.load %arg2[%977] : memref<256xi32, #tpu.memory_space<smem>>
    %979 = arith.index_cast %975 : i32 to index
    %c0_486 = arith.constant 0 : index
    %980 = vector.load %arg3[%979, %c0_486] : memref<40x128xf32, #tpu.memory_space<vmem>>, vector<1x128xf32>
    %c81 = arith.constant 81 : index
    %c0_487 = arith.constant 0 : index
    %981 = vector.load %arg10[%c81, %c0_487] : memref<128x256xf32, #tpu.memory_space<vmem>>, vector<1x128xf32>
    tpu.vector_store %arg10[%c81, %c0_487], %980 {strides = array<i32>} : memref<128x256xf32, #tpu.memory_space<vmem>>, vector<1x128xf32>,
    %982 = arith.index_cast %978 : i32 to index
    %c0_488 = arith.constant 0 : index
    %983 = vector.load %arg4[%982, %c0_488] : memref<50x128xf32, #tpu.memory_space<vmem>>, vector<1x128xf32>
    %c81_489 = arith.constant 81 : index
    %c128_490 = arith.constant 128 : index
    %984 = vector.load %arg10[%c81_489, %c128_490] : memref<128x256xf32, #tpu.memory_space<vmem>>, vector<1x128xf32>
    tpu.vector_store %arg10[%c81_489, %c128_490], %983 {strides = array<i32>} : memref<128x256xf32, #tpu.memory_space<vmem>>, vector<1x128xf32>,
    %c82_i32 = arith.constant 82 : i32
    %985 = arith.addi %0, %c82_i32 : i32
    %986 = arith.index_cast %985 : i32 to index
    %987 = memref.load %arg1[%986] : memref<256xi32, #tpu.memory_space<smem>>
    %c82_i32_491 = arith.constant 82 : i32
    %988 = arith.addi %0, %c82_i32_491 : i32
    %989 = arith.index_cast %988 : i32 to index
    %990 = memref.load %arg2[%989] : memref<256xi32, #tpu.memory_space<smem>>
    %991 = arith.index_cast %987 : i32 to index
    %c0_492 = arith.constant 0 : index
    %992 = vector.load %arg3[%991, %c0_492] : memref<40x128xf32, #tpu.memory_space<vmem>>, vector<1x128xf32>
    %c82 = arith.constant 82 : index
    %c0_493 = arith.constant 0 : index
    %993 = vector.load %arg10[%c82, %c0_493] : memref<128x256xf32, #tpu.memory_space<vmem>>, vector<1x128xf32>
    tpu.vector_store %arg10[%c82, %c0_493], %992 {strides = array<i32>} : memref<128x256xf32, #tpu.memory_space<vmem>>, vector<1x128xf32>,
    %994 = arith.index_cast %990 : i32 to index
    %c0_494 = arith.constant 0 : index
    %995 = vector.load %arg4[%994, %c0_494] : memref<50x128xf32, #tpu.memory_space<vmem>>, vector<1x128xf32>
    %c82_495 = arith.constant 82 : index
    %c128_496 = arith.constant 128 : index
    %996 = vector.load %arg10[%c82_495, %c128_496] : memref<128x256xf32, #tpu.memory_space<vmem>>, vector<1x128xf32>
    tpu.vector_store %arg10[%c82_495, %c128_496], %995 {strides = array<i32>} : memref<128x256xf32, #tpu.memory_space<vmem>>, vector<1x128xf32>,
    %c83_i32 = arith.constant 83 : i32
    %997 = arith.addi %0, %c83_i32 : i32
    %998 = arith.index_cast %997 : i32 to index
    %999 = memref.load %arg1[%998] : memref<256xi32, #tpu.memory_space<smem>>
    %c83_i32_497 = arith.constant 83 : i32
    %1000 = arith.addi %0, %c83_i32_497 : i32
    %1001 = arith.index_cast %1000 : i32 to index
    %1002 = memref.load %arg2[%1001] : memref<256xi32, #tpu.memory_space<smem>>
    %1003 = arith.index_cast %999 : i32 to index
    %c0_498 = arith.constant 0 : index
    %1004 = vector.load %arg3[%1003, %c0_498] : memref<40x128xf32, #tpu.memory_space<vmem>>, vector<1x128xf32>
    %c83 = arith.constant 83 : index
    %c0_499 = arith.constant 0 : index
    %1005 = vector.load %arg10[%c83, %c0_499] : memref<128x256xf32, #tpu.memory_space<vmem>>, vector<1x128xf32>
    tpu.vector_store %arg10[%c83, %c0_499], %1004 {strides = array<i32>} : memref<128x256xf32, #tpu.memory_space<vmem>>, vector<1x128xf32>,
    %1006 = arith.index_cast %1002 : i32 to index
    %c0_500 = arith.constant 0 : index
    %1007 = vector.load %arg4[%1006, %c0_500] : memref<50x128xf32, #tpu.memory_space<vmem>>, vector<1x128xf32>
    %c83_501 = arith.constant 83 : index
    %c128_502 = arith.constant 128 : index
    %1008 = vector.load %arg10[%c83_501, %c128_502] : memref<128x256xf32, #tpu.memory_space<vmem>>, vector<1x128xf32>
    tpu.vector_store %arg10[%c83_501, %c128_502], %1007 {strides = array<i32>} : memref<128x256xf32, #tpu.memory_space<vmem>>, vector<1x128xf32>,
    %c84_i32 = arith.constant 84 : i32
    %1009 = arith.addi %0, %c84_i32 : i32
    %1010 = arith.index_cast %1009 : i32 to index
    %1011 = memref.load %arg1[%1010] : memref<256xi32, #tpu.memory_space<smem>>
    %c84_i32_503 = arith.constant 84 : i32
    %1012 = arith.addi %0, %c84_i32_503 : i32
    %1013 = arith.index_cast %1012 : i32 to index
    %1014 = memref.load %arg2[%1013] : memref<256xi32, #tpu.memory_space<smem>>
    %1015 = arith.index_cast %1011 : i32 to index
    %c0_504 = arith.constant 0 : index
    %1016 = vector.load %arg3[%1015, %c0_504] : memref<40x128xf32, #tpu.memory_space<vmem>>, vector<1x128xf32>
    %c84 = arith.constant 84 : index
    %c0_505 = arith.constant 0 : index
    %1017 = vector.load %arg10[%c84, %c0_505] : memref<128x256xf32, #tpu.memory_space<vmem>>, vector<1x128xf32>
    tpu.vector_store %arg10[%c84, %c0_505], %1016 {strides = array<i32>} : memref<128x256xf32, #tpu.memory_space<vmem>>, vector<1x128xf32>,
    %1018 = arith.index_cast %1014 : i32 to index
    %c0_506 = arith.constant 0 : index
    %1019 = vector.load %arg4[%1018, %c0_506] : memref<50x128xf32, #tpu.memory_space<vmem>>, vector<1x128xf32>
    %c84_507 = arith.constant 84 : index
    %c128_508 = arith.constant 128 : index
    %1020 = vector.load %arg10[%c84_507, %c128_508] : memref<128x256xf32, #tpu.memory_space<vmem>>, vector<1x128xf32>
    tpu.vector_store %arg10[%c84_507, %c128_508], %1019 {strides = array<i32>} : memref<128x256xf32, #tpu.memory_space<vmem>>, vector<1x128xf32>,
    %c85_i32 = arith.constant 85 : i32
    %1021 = arith.addi %0, %c85_i32 : i32
    %1022 = arith.index_cast %1021 : i32 to index
    %1023 = memref.load %arg1[%1022] : memref<256xi32, #tpu.memory_space<smem>>
    %c85_i32_509 = arith.constant 85 : i32
    %1024 = arith.addi %0, %c85_i32_509 : i32
    %1025 = arith.index_cast %1024 : i32 to index
    %1026 = memref.load %arg2[%1025] : memref<256xi32, #tpu.memory_space<smem>>
    %1027 = arith.index_cast %1023 : i32 to index
    %c0_510 = arith.constant 0 : index
    %1028 = vector.load %arg3[%1027, %c0_510] : memref<40x128xf32, #tpu.memory_space<vmem>>, vector<1x128xf32>
    %c85 = arith.constant 85 : index
    %c0_511 = arith.constant 0 : index
    %1029 = vector.load %arg10[%c85, %c0_511] : memref<128x256xf32, #tpu.memory_space<vmem>>, vector<1x128xf32>
    tpu.vector_store %arg10[%c85, %c0_511], %1028 {strides = array<i32>} : memref<128x256xf32, #tpu.memory_space<vmem>>, vector<1x128xf32>,
    %1030 = arith.index_cast %1026 : i32 to index
    %c0_512 = arith.constant 0 : index
    %1031 = vector.load %arg4[%1030, %c0_512] : memref<50x128xf32, #tpu.memory_space<vmem>>, vector<1x128xf32>
    %c85_513 = arith.constant 85 : index
    %c128_514 = arith.constant 128 : index
    %1032 = vector.load %arg10[%c85_513, %c128_514] : memref<128x256xf32, #tpu.memory_space<vmem>>, vector<1x128xf32>
    tpu.vector_store %arg10[%c85_513, %c128_514], %1031 {strides = array<i32>} : memref<128x256xf32, #tpu.memory_space<vmem>>, vector<1x128xf32>,
    %c86_i32 = arith.constant 86 : i32
    %1033 = arith.addi %0, %c86_i32 : i32
    %1034 = arith.index_cast %1033 : i32 to index
    %1035 = memref.load %arg1[%1034] : memref<256xi32, #tpu.memory_space<smem>>
    %c86_i32_515 = arith.constant 86 : i32
    %1036 = arith.addi %0, %c86_i32_515 : i32
    %1037 = arith.index_cast %1036 : i32 to index
    %1038 = memref.load %arg2[%1037] : memref<256xi32, #tpu.memory_space<smem>>
    %1039 = arith.index_cast %1035 : i32 to index
    %c0_516 = arith.constant 0 : index
    %1040 = vector.load %arg3[%1039, %c0_516] : memref<40x128xf32, #tpu.memory_space<vmem>>, vector<1x128xf32>
    %c86 = arith.constant 86 : index
    %c0_517 = arith.constant 0 : index
    %1041 = vector.load %arg10[%c86, %c0_517] : memref<128x256xf32, #tpu.memory_space<vmem>>, vector<1x128xf32>
    tpu.vector_store %arg10[%c86, %c0_517], %1040 {strides = array<i32>} : memref<128x256xf32, #tpu.memory_space<vmem>>, vector<1x128xf32>,
    %1042 = arith.index_cast %1038 : i32 to index
    %c0_518 = arith.constant 0 : index
    %1043 = vector.load %arg4[%1042, %c0_518] : memref<50x128xf32, #tpu.memory_space<vmem>>, vector<1x128xf32>
    %c86_519 = arith.constant 86 : index
    %c128_520 = arith.constant 128 : index
    %1044 = vector.load %arg10[%c86_519, %c128_520] : memref<128x256xf32, #tpu.memory_space<vmem>>, vector<1x128xf32>
    tpu.vector_store %arg10[%c86_519, %c128_520], %1043 {strides = array<i32>} : memref<128x256xf32, #tpu.memory_space<vmem>>, vector<1x128xf32>,
    %c87_i32 = arith.constant 87 : i32
    %1045 = arith.addi %0, %c87_i32 : i32
    %1046 = arith.index_cast %1045 : i32 to index
    %1047 = memref.load %arg1[%1046] : memref<256xi32, #tpu.memory_space<smem>>
    %c87_i32_521 = arith.constant 87 : i32
    %1048 = arith.addi %0, %c87_i32_521 : i32
    %1049 = arith.index_cast %1048 : i32 to index
    %1050 = memref.load %arg2[%1049] : memref<256xi32, #tpu.memory_space<smem>>
    %1051 = arith.index_cast %1047 : i32 to index
    %c0_522 = arith.constant 0 : index
    %1052 = vector.load %arg3[%1051, %c0_522] : memref<40x128xf32, #tpu.memory_space<vmem>>, vector<1x128xf32>
    %c87 = arith.constant 87 : index
    %c0_523 = arith.constant 0 : index
    %1053 = vector.load %arg10[%c87, %c0_523] : memref<128x256xf32, #tpu.memory_space<vmem>>, vector<1x128xf32>
    tpu.vector_store %arg10[%c87, %c0_523], %1052 {strides = array<i32>} : memref<128x256xf32, #tpu.memory_space<vmem>>, vector<1x128xf32>,
    %1054 = arith.index_cast %1050 : i32 to index
    %c0_524 = arith.constant 0 : index
    %1055 = vector.load %arg4[%1054, %c0_524] : memref<50x128xf32, #tpu.memory_space<vmem>>, vector<1x128xf32>
    %c87_525 = arith.constant 87 : index
    %c128_526 = arith.constant 128 : index
    %1056 = vector.load %arg10[%c87_525, %c128_526] : memref<128x256xf32, #tpu.memory_space<vmem>>, vector<1x128xf32>
    tpu.vector_store %arg10[%c87_525, %c128_526], %1055 {strides = array<i32>} : memref<128x256xf32, #tpu.memory_space<vmem>>, vector<1x128xf32>,
    %c88_i32 = arith.constant 88 : i32
    %1057 = arith.addi %0, %c88_i32 : i32
    %1058 = arith.index_cast %1057 : i32 to index
    %1059 = memref.load %arg1[%1058] : memref<256xi32, #tpu.memory_space<smem>>
    %c88_i32_527 = arith.constant 88 : i32
    %1060 = arith.addi %0, %c88_i32_527 : i32
    %1061 = arith.index_cast %1060 : i32 to index
    %1062 = memref.load %arg2[%1061] : memref<256xi32, #tpu.memory_space<smem>>
    %1063 = arith.index_cast %1059 : i32 to index
    %c0_528 = arith.constant 0 : index
    %1064 = vector.load %arg3[%1063, %c0_528] : memref<40x128xf32, #tpu.memory_space<vmem>>, vector<1x128xf32>
    %c88 = arith.constant 88 : index
    %c0_529 = arith.constant 0 : index
    %1065 = vector.load %arg10[%c88, %c0_529] : memref<128x256xf32, #tpu.memory_space<vmem>>, vector<1x128xf32>
    tpu.vector_store %arg10[%c88, %c0_529], %1064 {strides = array<i32>} : memref<128x256xf32, #tpu.memory_space<vmem>>, vector<1x128xf32>,
    %1066 = arith.index_cast %1062 : i32 to index
    %c0_530 = arith.constant 0 : index
    %1067 = vector.load %arg4[%1066, %c0_530] : memref<50x128xf32, #tpu.memory_space<vmem>>, vector<1x128xf32>
    %c88_531 = arith.constant 88 : index
    %c128_532 = arith.constant 128 : index
    %1068 = vector.load %arg10[%c88_531, %c128_532] : memref<128x256xf32, #tpu.memory_space<vmem>>, vector<1x128xf32>
    tpu.vector_store %arg10[%c88_531, %c128_532], %1067 {strides = array<i32>} : memref<128x256xf32, #tpu.memory_space<vmem>>, vector<1x128xf32>,
    %c89_i32 = arith.constant 89 : i32
    %1069 = arith.addi %0, %c89_i32 : i32
    %1070 = arith.index_cast %1069 : i32 to index
    %1071 = memref.load %arg1[%1070] : memref<256xi32, #tpu.memory_space<smem>>
    %c89_i32_533 = arith.constant 89 : i32
    %1072 = arith.addi %0, %c89_i32_533 : i32
    %1073 = arith.index_cast %1072 : i32 to index
    %1074 = memref.load %arg2[%1073] : memref<256xi32, #tpu.memory_space<smem>>
    %1075 = arith.index_cast %1071 : i32 to index
    %c0_534 = arith.constant 0 : index
    %1076 = vector.load %arg3[%1075, %c0_534] : memref<40x128xf32, #tpu.memory_space<vmem>>, vector<1x128xf32>
    %c89 = arith.constant 89 : index
    %c0_535 = arith.constant 0 : index
    %1077 = vector.load %arg10[%c89, %c0_535] : memref<128x256xf32, #tpu.memory_space<vmem>>, vector<1x128xf32>
    tpu.vector_store %arg10[%c89, %c0_535], %1076 {strides = array<i32>} : memref<128x256xf32, #tpu.memory_space<vmem>>, vector<1x128xf32>,
    %1078 = arith.index_cast %1074 : i32 to index
    %c0_536 = arith.constant 0 : index
    %1079 = vector.load %arg4[%1078, %c0_536] : memref<50x128xf32, #tpu.memory_space<vmem>>, vector<1x128xf32>
    %c89_537 = arith.constant 89 : index
    %c128_538 = arith.constant 128 : index
    %1080 = vector.load %arg10[%c89_537, %c128_538] : memref<128x256xf32, #tpu.memory_space<vmem>>, vector<1x128xf32>
    tpu.vector_store %arg10[%c89_537, %c128_538], %1079 {strides = array<i32>} : memref<128x256xf32, #tpu.memory_space<vmem>>, vector<1x128xf32>,
    %c90_i32 = arith.constant 90 : i32
    %1081 = arith.addi %0, %c90_i32 : i32
    %1082 = arith.index_cast %1081 : i32 to index
    %1083 = memref.load %arg1[%1082] : memref<256xi32, #tpu.memory_space<smem>>
    %c90_i32_539 = arith.constant 90 : i32
    %1084 = arith.addi %0, %c90_i32_539 : i32
    %1085 = arith.index_cast %1084 : i32 to index
    %1086 = memref.load %arg2[%1085] : memref<256xi32, #tpu.memory_space<smem>>
    %1087 = arith.index_cast %1083 : i32 to index
    %c0_540 = arith.constant 0 : index
    %1088 = vector.load %arg3[%1087, %c0_540] : memref<40x128xf32, #tpu.memory_space<vmem>>, vector<1x128xf32>
    %c90 = arith.constant 90 : index
    %c0_541 = arith.constant 0 : index
    %1089 = vector.load %arg10[%c90, %c0_541] : memref<128x256xf32, #tpu.memory_space<vmem>>, vector<1x128xf32>
    tpu.vector_store %arg10[%c90, %c0_541], %1088 {strides = array<i32>} : memref<128x256xf32, #tpu.memory_space<vmem>>, vector<1x128xf32>,
    %1090 = arith.index_cast %1086 : i32 to index
    %c0_542 = arith.constant 0 : index
    %1091 = vector.load %arg4[%1090, %c0_542] : memref<50x128xf32, #tpu.memory_space<vmem>>, vector<1x128xf32>
    %c90_543 = arith.constant 90 : index
    %c128_544 = arith.constant 128 : index
    %1092 = vector.load %arg10[%c90_543, %c128_544] : memref<128x256xf32, #tpu.memory_space<vmem>>, vector<1x128xf32>
    tpu.vector_store %arg10[%c90_543, %c128_544], %1091 {strides = array<i32>} : memref<128x256xf32, #tpu.memory_space<vmem>>, vector<1x128xf32>,
    %c91_i32 = arith.constant 91 : i32
    %1093 = arith.addi %0, %c91_i32 : i32
    %1094 = arith.index_cast %1093 : i32 to index
    %1095 = memref.load %arg1[%1094] : memref<256xi32, #tpu.memory_space<smem>>
    %c91_i32_545 = arith.constant 91 : i32
    %1096 = arith.addi %0, %c91_i32_545 : i32
    %1097 = arith.index_cast %1096 : i32 to index
    %1098 = memref.load %arg2[%1097] : memref<256xi32, #tpu.memory_space<smem>>
    %1099 = arith.index_cast %1095 : i32 to index
    %c0_546 = arith.constant 0 : index
    %1100 = vector.load %arg3[%1099, %c0_546] : memref<40x128xf32, #tpu.memory_space<vmem>>, vector<1x128xf32>
    %c91 = arith.constant 91 : index
    %c0_547 = arith.constant 0 : index
    %1101 = vector.load %arg10[%c91, %c0_547] : memref<128x256xf32, #tpu.memory_space<vmem>>, vector<1x128xf32>
    tpu.vector_store %arg10[%c91, %c0_547], %1100 {strides = array<i32>} : memref<128x256xf32, #tpu.memory_space<vmem>>, vector<1x128xf32>,
    %1102 = arith.index_cast %1098 : i32 to index
    %c0_548 = arith.constant 0 : index
    %1103 = vector.load %arg4[%1102, %c0_548] : memref<50x128xf32, #tpu.memory_space<vmem>>, vector<1x128xf32>
    %c91_549 = arith.constant 91 : index
    %c128_550 = arith.constant 128 : index
    %1104 = vector.load %arg10[%c91_549, %c128_550] : memref<128x256xf32, #tpu.memory_space<vmem>>, vector<1x128xf32>
    tpu.vector_store %arg10[%c91_549, %c128_550], %1103 {strides = array<i32>} : memref<128x256xf32, #tpu.memory_space<vmem>>, vector<1x128xf32>,
    %c92_i32 = arith.constant 92 : i32
    %1105 = arith.addi %0, %c92_i32 : i32
    %1106 = arith.index_cast %1105 : i32 to index
    %1107 = memref.load %arg1[%1106] : memref<256xi32, #tpu.memory_space<smem>>
    %c92_i32_551 = arith.constant 92 : i32
    %1108 = arith.addi %0, %c92_i32_551 : i32
    %1109 = arith.index_cast %1108 : i32 to index
    %1110 = memref.load %arg2[%1109] : memref<256xi32, #tpu.memory_space<smem>>
    %1111 = arith.index_cast %1107 : i32 to index
    %c0_552 = arith.constant 0 : index
    %1112 = vector.load %arg3[%1111, %c0_552] : memref<40x128xf32, #tpu.memory_space<vmem>>, vector<1x128xf32>
    %c92 = arith.constant 92 : index
    %c0_553 = arith.constant 0 : index
    %1113 = vector.load %arg10[%c92, %c0_553] : memref<128x256xf32, #tpu.memory_space<vmem>>, vector<1x128xf32>
    tpu.vector_store %arg10[%c92, %c0_553], %1112 {strides = array<i32>} : memref<128x256xf32, #tpu.memory_space<vmem>>, vector<1x128xf32>,
    %1114 = arith.index_cast %1110 : i32 to index
    %c0_554 = arith.constant 0 : index
    %1115 = vector.load %arg4[%1114, %c0_554] : memref<50x128xf32, #tpu.memory_space<vmem>>, vector<1x128xf32>
    %c92_555 = arith.constant 92 : index
    %c128_556 = arith.constant 128 : index
    %1116 = vector.load %arg10[%c92_555, %c128_556] : memref<128x256xf32, #tpu.memory_space<vmem>>, vector<1x128xf32>
    tpu.vector_store %arg10[%c92_555, %c128_556], %1115 {strides = array<i32>} : memref<128x256xf32, #tpu.memory_space<vmem>>, vector<1x128xf32>,
    %c93_i32 = arith.constant 93 : i32
    %1117 = arith.addi %0, %c93_i32 : i32
    %1118 = arith.index_cast %1117 : i32 to index
    %1119 = memref.load %arg1[%1118] : memref<256xi32, #tpu.memory_space<smem>>
    %c93_i32_557 = arith.constant 93 : i32
    %1120 = arith.addi %0, %c93_i32_557 : i32
    %1121 = arith.index_cast %1120 : i32 to index
    %1122 = memref.load %arg2[%1121] : memref<256xi32, #tpu.memory_space<smem>>
    %1123 = arith.index_cast %1119 : i32 to index
    %c0_558 = arith.constant 0 : index
    %1124 = vector.load %arg3[%1123, %c0_558] : memref<40x128xf32, #tpu.memory_space<vmem>>, vector<1x128xf32>
    %c93 = arith.constant 93 : index
    %c0_559 = arith.constant 0 : index
    %1125 = vector.load %arg10[%c93, %c0_559] : memref<128x256xf32, #tpu.memory_space<vmem>>, vector<1x128xf32>
    tpu.vector_store %arg10[%c93, %c0_559], %1124 {strides = array<i32>} : memref<128x256xf32, #tpu.memory_space<vmem>>, vector<1x128xf32>,
    %1126 = arith.index_cast %1122 : i32 to index
    %c0_560 = arith.constant 0 : index
    %1127 = vector.load %arg4[%1126, %c0_560] : memref<50x128xf32, #tpu.memory_space<vmem>>, vector<1x128xf32>
    %c93_561 = arith.constant 93 : index
    %c128_562 = arith.constant 128 : index
    %1128 = vector.load %arg10[%c93_561, %c128_562] : memref<128x256xf32, #tpu.memory_space<vmem>>, vector<1x128xf32>
    tpu.vector_store %arg10[%c93_561, %c128_562], %1127 {strides = array<i32>} : memref<128x256xf32, #tpu.memory_space<vmem>>, vector<1x128xf32>,
    %c94_i32 = arith.constant 94 : i32
    %1129 = arith.addi %0, %c94_i32 : i32
    %1130 = arith.index_cast %1129 : i32 to index
    %1131 = memref.load %arg1[%1130] : memref<256xi32, #tpu.memory_space<smem>>
    %c94_i32_563 = arith.constant 94 : i32
    %1132 = arith.addi %0, %c94_i32_563 : i32
    %1133 = arith.index_cast %1132 : i32 to index
    %1134 = memref.load %arg2[%1133] : memref<256xi32, #tpu.memory_space<smem>>
    %1135 = arith.index_cast %1131 : i32 to index
    %c0_564 = arith.constant 0 : index
    %1136 = vector.load %arg3[%1135, %c0_564] : memref<40x128xf32, #tpu.memory_space<vmem>>, vector<1x128xf32>
    %c94 = arith.constant 94 : index
    %c0_565 = arith.constant 0 : index
    %1137 = vector.load %arg10[%c94, %c0_565] : memref<128x256xf32, #tpu.memory_space<vmem>>, vector<1x128xf32>
    tpu.vector_store %arg10[%c94, %c0_565], %1136 {strides = array<i32>} : memref<128x256xf32, #tpu.memory_space<vmem>>, vector<1x128xf32>,
    %1138 = arith.index_cast %1134 : i32 to index
    %c0_566 = arith.constant 0 : index
    %1139 = vector.load %arg4[%1138, %c0_566] : memref<50x128xf32, #tpu.memory_space<vmem>>, vector<1x128xf32>
    %c94_567 = arith.constant 94 : index
    %c128_568 = arith.constant 128 : index
    %1140 = vector.load %arg10[%c94_567, %c128_568] : memref<128x256xf32, #tpu.memory_space<vmem>>, vector<1x128xf32>
    tpu.vector_store %arg10[%c94_567, %c128_568], %1139 {strides = array<i32>} : memref<128x256xf32, #tpu.memory_space<vmem>>, vector<1x128xf32>,
    %c95_i32 = arith.constant 95 : i32
    %1141 = arith.addi %0, %c95_i32 : i32
    %1142 = arith.index_cast %1141 : i32 to index
    %1143 = memref.load %arg1[%1142] : memref<256xi32, #tpu.memory_space<smem>>
    %c95_i32_569 = arith.constant 95 : i32
    %1144 = arith.addi %0, %c95_i32_569 : i32
    %1145 = arith.index_cast %1144 : i32 to index
    %1146 = memref.load %arg2[%1145] : memref<256xi32, #tpu.memory_space<smem>>
    %1147 = arith.index_cast %1143 : i32 to index
    %c0_570 = arith.constant 0 : index
    %1148 = vector.load %arg3[%1147, %c0_570] : memref<40x128xf32, #tpu.memory_space<vmem>>, vector<1x128xf32>
    %c95 = arith.constant 95 : index
    %c0_571 = arith.constant 0 : index
    %1149 = vector.load %arg10[%c95, %c0_571] : memref<128x256xf32, #tpu.memory_space<vmem>>, vector<1x128xf32>
    tpu.vector_store %arg10[%c95, %c0_571], %1148 {strides = array<i32>} : memref<128x256xf32, #tpu.memory_space<vmem>>, vector<1x128xf32>,
    %1150 = arith.index_cast %1146 : i32 to index
    %c0_572 = arith.constant 0 : index
    %1151 = vector.load %arg4[%1150, %c0_572] : memref<50x128xf32, #tpu.memory_space<vmem>>, vector<1x128xf32>
    %c95_573 = arith.constant 95 : index
    %c128_574 = arith.constant 128 : index
    %1152 = vector.load %arg10[%c95_573, %c128_574] : memref<128x256xf32, #tpu.memory_space<vmem>>, vector<1x128xf32>
    tpu.vector_store %arg10[%c95_573, %c128_574], %1151 {strides = array<i32>} : memref<128x256xf32, #tpu.memory_space<vmem>>, vector<1x128xf32>,
    %c96_i32 = arith.constant 96 : i32
    %1153 = arith.addi %0, %c96_i32 : i32
    %1154 = arith.index_cast %1153 : i32 to index
    %1155 = memref.load %arg1[%1154] : memref<256xi32, #tpu.memory_space<smem>>
    %c96_i32_575 = arith.constant 96 : i32
    %1156 = arith.addi %0, %c96_i32_575 : i32
    %1157 = arith.index_cast %1156 : i32 to index
    %1158 = memref.load %arg2[%1157] : memref<256xi32, #tpu.memory_space<smem>>
    %1159 = arith.index_cast %1155 : i32 to index
    %c0_576 = arith.constant 0 : index
    %1160 = vector.load %arg3[%1159, %c0_576] : memref<40x128xf32, #tpu.memory_space<vmem>>, vector<1x128xf32>
    %c96 = arith.constant 96 : index
    %c0_577 = arith.constant 0 : index
    %1161 = vector.load %arg10[%c96, %c0_577] : memref<128x256xf32, #tpu.memory_space<vmem>>, vector<1x128xf32>
    tpu.vector_store %arg10[%c96, %c0_577], %1160 {strides = array<i32>} : memref<128x256xf32, #tpu.memory_space<vmem>>, vector<1x128xf32>,
    %1162 = arith.index_cast %1158 : i32 to index
    %c0_578 = arith.constant 0 : index
    %1163 = vector.load %arg4[%1162, %c0_578] : memref<50x128xf32, #tpu.memory_space<vmem>>, vector<1x128xf32>
    %c96_579 = arith.constant 96 : index
    %c128_580 = arith.constant 128 : index
    %1164 = vector.load %arg10[%c96_579, %c128_580] : memref<128x256xf32, #tpu.memory_space<vmem>>, vector<1x128xf32>
    tpu.vector_store %arg10[%c96_579, %c128_580], %1163 {strides = array<i32>} : memref<128x256xf32, #tpu.memory_space<vmem>>, vector<1x128xf32>,
    %c97_i32 = arith.constant 97 : i32
    %1165 = arith.addi %0, %c97_i32 : i32
    %1166 = arith.index_cast %1165 : i32 to index
    %1167 = memref.load %arg1[%1166] : memref<256xi32, #tpu.memory_space<smem>>
    %c97_i32_581 = arith.constant 97 : i32
    %1168 = arith.addi %0, %c97_i32_581 : i32
    %1169 = arith.index_cast %1168 : i32 to index
    %1170 = memref.load %arg2[%1169] : memref<256xi32, #tpu.memory_space<smem>>
    %1171 = arith.index_cast %1167 : i32 to index
    %c0_582 = arith.constant 0 : index
    %1172 = vector.load %arg3[%1171, %c0_582] : memref<40x128xf32, #tpu.memory_space<vmem>>, vector<1x128xf32>
    %c97 = arith.constant 97 : index
    %c0_583 = arith.constant 0 : index
    %1173 = vector.load %arg10[%c97, %c0_583] : memref<128x256xf32, #tpu.memory_space<vmem>>, vector<1x128xf32>
    tpu.vector_store %arg10[%c97, %c0_583], %1172 {strides = array<i32>} : memref<128x256xf32, #tpu.memory_space<vmem>>, vector<1x128xf32>,
    %1174 = arith.index_cast %1170 : i32 to index
    %c0_584 = arith.constant 0 : index
    %1175 = vector.load %arg4[%1174, %c0_584] : memref<50x128xf32, #tpu.memory_space<vmem>>, vector<1x128xf32>
    %c97_585 = arith.constant 97 : index
    %c128_586 = arith.constant 128 : index
    %1176 = vector.load %arg10[%c97_585, %c128_586] : memref<128x256xf32, #tpu.memory_space<vmem>>, vector<1x128xf32>
    tpu.vector_store %arg10[%c97_585, %c128_586], %1175 {strides = array<i32>} : memref<128x256xf32, #tpu.memory_space<vmem>>, vector<1x128xf32>,
    %c98_i32 = arith.constant 98 : i32
    %1177 = arith.addi %0, %c98_i32 : i32
    %1178 = arith.index_cast %1177 : i32 to index
    %1179 = memref.load %arg1[%1178] : memref<256xi32, #tpu.memory_space<smem>>
    %c98_i32_587 = arith.constant 98 : i32
    %1180 = arith.addi %0, %c98_i32_587 : i32
    %1181 = arith.index_cast %1180 : i32 to index
    %1182 = memref.load %arg2[%1181] : memref<256xi32, #tpu.memory_space<smem>>
    %1183 = arith.index_cast %1179 : i32 to index
    %c0_588 = arith.constant 0 : index
    %1184 = vector.load %arg3[%1183, %c0_588] : memref<40x128xf32, #tpu.memory_space<vmem>>, vector<1x128xf32>
    %c98 = arith.constant 98 : index
    %c0_589 = arith.constant 0 : index
    %1185 = vector.load %arg10[%c98, %c0_589] : memref<128x256xf32, #tpu.memory_space<vmem>>, vector<1x128xf32>
    tpu.vector_store %arg10[%c98, %c0_589], %1184 {strides = array<i32>} : memref<128x256xf32, #tpu.memory_space<vmem>>, vector<1x128xf32>,
    %1186 = arith.index_cast %1182 : i32 to index
    %c0_590 = arith.constant 0 : index
    %1187 = vector.load %arg4[%1186, %c0_590] : memref<50x128xf32, #tpu.memory_space<vmem>>, vector<1x128xf32>
    %c98_591 = arith.constant 98 : index
    %c128_592 = arith.constant 128 : index
    %1188 = vector.load %arg10[%c98_591, %c128_592] : memref<128x256xf32, #tpu.memory_space<vmem>>, vector<1x128xf32>
    tpu.vector_store %arg10[%c98_591, %c128_592], %1187 {strides = array<i32>} : memref<128x256xf32, #tpu.memory_space<vmem>>, vector<1x128xf32>,
    %c99_i32 = arith.constant 99 : i32
    %1189 = arith.addi %0, %c99_i32 : i32
    %1190 = arith.index_cast %1189 : i32 to index
    %1191 = memref.load %arg1[%1190] : memref<256xi32, #tpu.memory_space<smem>>
    %c99_i32_593 = arith.constant 99 : i32
    %1192 = arith.addi %0, %c99_i32_593 : i32
    %1193 = arith.index_cast %1192 : i32 to index
    %1194 = memref.load %arg2[%1193] : memref<256xi32, #tpu.memory_space<smem>>
    %1195 = arith.index_cast %1191 : i32 to index
    %c0_594 = arith.constant 0 : index
    %1196 = vector.load %arg3[%1195, %c0_594] : memref<40x128xf32, #tpu.memory_space<vmem>>, vector<1x128xf32>
    %c99 = arith.constant 99 : index
    %c0_595 = arith.constant 0 : index
    %1197 = vector.load %arg10[%c99, %c0_595] : memref<128x256xf32, #tpu.memory_space<vmem>>, vector<1x128xf32>
    tpu.vector_store %arg10[%c99, %c0_595], %1196 {strides = array<i32>} : memref<128x256xf32, #tpu.memory_space<vmem>>, vector<1x128xf32>,
    %1198 = arith.index_cast %1194 : i32 to index
    %c0_596 = arith.constant 0 : index
    %1199 = vector.load %arg4[%1198, %c0_596] : memref<50x128xf32, #tpu.memory_space<vmem>>, vector<1x128xf32>
    %c99_597 = arith.constant 99 : index
    %c128_598 = arith.constant 128 : index
    %1200 = vector.load %arg10[%c99_597, %c128_598] : memref<128x256xf32, #tpu.memory_space<vmem>>, vector<1x128xf32>
    tpu.vector_store %arg10[%c99_597, %c128_598], %1199 {strides = array<i32>} : memref<128x256xf32, #tpu.memory_space<vmem>>, vector<1x128xf32>,
    %c100_i32 = arith.constant 100 : i32
    %1201 = arith.addi %0, %c100_i32 : i32
    %1202 = arith.index_cast %1201 : i32 to index
    %1203 = memref.load %arg1[%1202] : memref<256xi32, #tpu.memory_space<smem>>
    %c100_i32_599 = arith.constant 100 : i32
    %1204 = arith.addi %0, %c100_i32_599 : i32
    %1205 = arith.index_cast %1204 : i32 to index
    %1206 = memref.load %arg2[%1205] : memref<256xi32, #tpu.memory_space<smem>>
    %1207 = arith.index_cast %1203 : i32 to index
    %c0_600 = arith.constant 0 : index
    %1208 = vector.load %arg3[%1207, %c0_600] : memref<40x128xf32, #tpu.memory_space<vmem>>, vector<1x128xf32>
    %c100 = arith.constant 100 : index
    %c0_601 = arith.constant 0 : index
    %1209 = vector.load %arg10[%c100, %c0_601] : memref<128x256xf32, #tpu.memory_space<vmem>>, vector<1x128xf32>
    tpu.vector_store %arg10[%c100, %c0_601], %1208 {strides = array<i32>} : memref<128x256xf32, #tpu.memory_space<vmem>>, vector<1x128xf32>,
    %1210 = arith.index_cast %1206 : i32 to index
    %c0_602 = arith.constant 0 : index
    %1211 = vector.load %arg4[%1210, %c0_602] : memref<50x128xf32, #tpu.memory_space<vmem>>, vector<1x128xf32>
    %c100_603 = arith.constant 100 : index
    %c128_604 = arith.constant 128 : index
    %1212 = vector.load %arg10[%c100_603, %c128_604] : memref<128x256xf32, #tpu.memory_space<vmem>>, vector<1x128xf32>
    tpu.vector_store %arg10[%c100_603, %c128_604], %1211 {strides = array<i32>} : memref<128x256xf32, #tpu.memory_space<vmem>>, vector<1x128xf32>,
    %c101_i32 = arith.constant 101 : i32
    %1213 = arith.addi %0, %c101_i32 : i32
    %1214 = arith.index_cast %1213 : i32 to index
    %1215 = memref.load %arg1[%1214] : memref<256xi32, #tpu.memory_space<smem>>
    %c101_i32_605 = arith.constant 101 : i32
    %1216 = arith.addi %0, %c101_i32_605 : i32
    %1217 = arith.index_cast %1216 : i32 to index
    %1218 = memref.load %arg2[%1217] : memref<256xi32, #tpu.memory_space<smem>>
    %1219 = arith.index_cast %1215 : i32 to index
    %c0_606 = arith.constant 0 : index
    %1220 = vector.load %arg3[%1219, %c0_606] : memref<40x128xf32, #tpu.memory_space<vmem>>, vector<1x128xf32>
    %c101 = arith.constant 101 : index
    %c0_607 = arith.constant 0 : index
    %1221 = vector.load %arg10[%c101, %c0_607] : memref<128x256xf32, #tpu.memory_space<vmem>>, vector<1x128xf32>
    tpu.vector_store %arg10[%c101, %c0_607], %1220 {strides = array<i32>} : memref<128x256xf32, #tpu.memory_space<vmem>>, vector<1x128xf32>,
    %1222 = arith.index_cast %1218 : i32 to index
    %c0_608 = arith.constant 0 : index
    %1223 = vector.load %arg4[%1222, %c0_608] : memref<50x128xf32, #tpu.memory_space<vmem>>, vector<1x128xf32>
    %c101_609 = arith.constant 101 : index
    %c128_610 = arith.constant 128 : index
    %1224 = vector.load %arg10[%c101_609, %c128_610] : memref<128x256xf32, #tpu.memory_space<vmem>>, vector<1x128xf32>
    tpu.vector_store %arg10[%c101_609, %c128_610], %1223 {strides = array<i32>} : memref<128x256xf32, #tpu.memory_space<vmem>>, vector<1x128xf32>,
    %c102_i32 = arith.constant 102 : i32
    %1225 = arith.addi %0, %c102_i32 : i32
    %1226 = arith.index_cast %1225 : i32 to index
    %1227 = memref.load %arg1[%1226] : memref<256xi32, #tpu.memory_space<smem>>
    %c102_i32_611 = arith.constant 102 : i32
    %1228 = arith.addi %0, %c102_i32_611 : i32
    %1229 = arith.index_cast %1228 : i32 to index
    %1230 = memref.load %arg2[%1229] : memref<256xi32, #tpu.memory_space<smem>>
    %1231 = arith.index_cast %1227 : i32 to index
    %c0_612 = arith.constant 0 : index
    %1232 = vector.load %arg3[%1231, %c0_612] : memref<40x128xf32, #tpu.memory_space<vmem>>, vector<1x128xf32>
    %c102 = arith.constant 102 : index
    %c0_613 = arith.constant 0 : index
    %1233 = vector.load %arg10[%c102, %c0_613] : memref<128x256xf32, #tpu.memory_space<vmem>>, vector<1x128xf32>
    tpu.vector_store %arg10[%c102, %c0_613], %1232 {strides = array<i32>} : memref<128x256xf32, #tpu.memory_space<vmem>>, vector<1x128xf32>,
    %1234 = arith.index_cast %1230 : i32 to index
    %c0_614 = arith.constant 0 : index
    %1235 = vector.load %arg4[%1234, %c0_614] : memref<50x128xf32, #tpu.memory_space<vmem>>, vector<1x128xf32>
    %c102_615 = arith.constant 102 : index
    %c128_616 = arith.constant 128 : index
    %1236 = vector.load %arg10[%c102_615, %c128_616] : memref<128x256xf32, #tpu.memory_space<vmem>>, vector<1x128xf32>
    tpu.vector_store %arg10[%c102_615, %c128_616], %1235 {strides = array<i32>} : memref<128x256xf32, #tpu.memory_space<vmem>>, vector<1x128xf32>,
    %c103_i32 = arith.constant 103 : i32
    %1237 = arith.addi %0, %c103_i32 : i32
    %1238 = arith.index_cast %1237 : i32 to index
    %1239 = memref.load %arg1[%1238] : memref<256xi32, #tpu.memory_space<smem>>
    %c103_i32_617 = arith.constant 103 : i32
    %1240 = arith.addi %0, %c103_i32_617 : i32
    %1241 = arith.index_cast %1240 : i32 to index
    %1242 = memref.load %arg2[%1241] : memref<256xi32, #tpu.memory_space<smem>>
    %1243 = arith.index_cast %1239 : i32 to index
    %c0_618 = arith.constant 0 : index
    %1244 = vector.load %arg3[%1243, %c0_618] : memref<40x128xf32, #tpu.memory_space<vmem>>, vector<1x128xf32>
    %c103 = arith.constant 103 : index
    %c0_619 = arith.constant 0 : index
    %1245 = vector.load %arg10[%c103, %c0_619] : memref<128x256xf32, #tpu.memory_space<vmem>>, vector<1x128xf32>
    tpu.vector_store %arg10[%c103, %c0_619], %1244 {strides = array<i32>} : memref<128x256xf32, #tpu.memory_space<vmem>>, vector<1x128xf32>,
    %1246 = arith.index_cast %1242 : i32 to index
    %c0_620 = arith.constant 0 : index
    %1247 = vector.load %arg4[%1246, %c0_620] : memref<50x128xf32, #tpu.memory_space<vmem>>, vector<1x128xf32>
    %c103_621 = arith.constant 103 : index
    %c128_622 = arith.constant 128 : index
    %1248 = vector.load %arg10[%c103_621, %c128_622] : memref<128x256xf32, #tpu.memory_space<vmem>>, vector<1x128xf32>
    tpu.vector_store %arg10[%c103_621, %c128_622], %1247 {strides = array<i32>} : memref<128x256xf32, #tpu.memory_space<vmem>>, vector<1x128xf32>,
    %c104_i32 = arith.constant 104 : i32
    %1249 = arith.addi %0, %c104_i32 : i32
    %1250 = arith.index_cast %1249 : i32 to index
    %1251 = memref.load %arg1[%1250] : memref<256xi32, #tpu.memory_space<smem>>
    %c104_i32_623 = arith.constant 104 : i32
    %1252 = arith.addi %0, %c104_i32_623 : i32
    %1253 = arith.index_cast %1252 : i32 to index
    %1254 = memref.load %arg2[%1253] : memref<256xi32, #tpu.memory_space<smem>>
    %1255 = arith.index_cast %1251 : i32 to index
    %c0_624 = arith.constant 0 : index
    %1256 = vector.load %arg3[%1255, %c0_624] : memref<40x128xf32, #tpu.memory_space<vmem>>, vector<1x128xf32>
    %c104 = arith.constant 104 : index
    %c0_625 = arith.constant 0 : index
    %1257 = vector.load %arg10[%c104, %c0_625] : memref<128x256xf32, #tpu.memory_space<vmem>>, vector<1x128xf32>
    tpu.vector_store %arg10[%c104, %c0_625], %1256 {strides = array<i32>} : memref<128x256xf32, #tpu.memory_space<vmem>>, vector<1x128xf32>,
    %1258 = arith.index_cast %1254 : i32 to index
    %c0_626 = arith.constant 0 : index
    %1259 = vector.load %arg4[%1258, %c0_626] : memref<50x128xf32, #tpu.memory_space<vmem>>, vector<1x128xf32>
    %c104_627 = arith.constant 104 : index
    %c128_628 = arith.constant 128 : index
    %1260 = vector.load %arg10[%c104_627, %c128_628] : memref<128x256xf32, #tpu.memory_space<vmem>>, vector<1x128xf32>
    tpu.vector_store %arg10[%c104_627, %c128_628], %1259 {strides = array<i32>} : memref<128x256xf32, #tpu.memory_space<vmem>>, vector<1x128xf32>,
    %c105_i32 = arith.constant 105 : i32
    %1261 = arith.addi %0, %c105_i32 : i32
    %1262 = arith.index_cast %1261 : i32 to index
    %1263 = memref.load %arg1[%1262] : memref<256xi32, #tpu.memory_space<smem>>
    %c105_i32_629 = arith.constant 105 : i32
    %1264 = arith.addi %0, %c105_i32_629 : i32
    %1265 = arith.index_cast %1264 : i32 to index
    %1266 = memref.load %arg2[%1265] : memref<256xi32, #tpu.memory_space<smem>>
    %1267 = arith.index_cast %1263 : i32 to index
    %c0_630 = arith.constant 0 : index
    %1268 = vector.load %arg3[%1267, %c0_630] : memref<40x128xf32, #tpu.memory_space<vmem>>, vector<1x128xf32>
    %c105 = arith.constant 105 : index
    %c0_631 = arith.constant 0 : index
    %1269 = vector.load %arg10[%c105, %c0_631] : memref<128x256xf32, #tpu.memory_space<vmem>>, vector<1x128xf32>
    tpu.vector_store %arg10[%c105, %c0_631], %1268 {strides = array<i32>} : memref<128x256xf32, #tpu.memory_space<vmem>>, vector<1x128xf32>,
    %1270 = arith.index_cast %1266 : i32 to index
    %c0_632 = arith.constant 0 : index
    %1271 = vector.load %arg4[%1270, %c0_632] : memref<50x128xf32, #tpu.memory_space<vmem>>, vector<1x128xf32>
    %c105_633 = arith.constant 105 : index
    %c128_634 = arith.constant 128 : index
    %1272 = vector.load %arg10[%c105_633, %c128_634] : memref<128x256xf32, #tpu.memory_space<vmem>>, vector<1x128xf32>
    tpu.vector_store %arg10[%c105_633, %c128_634], %1271 {strides = array<i32>} : memref<128x256xf32, #tpu.memory_space<vmem>>, vector<1x128xf32>,
    %c106_i32 = arith.constant 106 : i32
    %1273 = arith.addi %0, %c106_i32 : i32
    %1274 = arith.index_cast %1273 : i32 to index
    %1275 = memref.load %arg1[%1274] : memref<256xi32, #tpu.memory_space<smem>>
    %c106_i32_635 = arith.constant 106 : i32
    %1276 = arith.addi %0, %c106_i32_635 : i32
    %1277 = arith.index_cast %1276 : i32 to index
    %1278 = memref.load %arg2[%1277] : memref<256xi32, #tpu.memory_space<smem>>
    %1279 = arith.index_cast %1275 : i32 to index
    %c0_636 = arith.constant 0 : index
    %1280 = vector.load %arg3[%1279, %c0_636] : memref<40x128xf32, #tpu.memory_space<vmem>>, vector<1x128xf32>
    %c106 = arith.constant 106 : index
    %c0_637 = arith.constant 0 : index
    %1281 = vector.load %arg10[%c106, %c0_637] : memref<128x256xf32, #tpu.memory_space<vmem>>, vector<1x128xf32>
    tpu.vector_store %arg10[%c106, %c0_637], %1280 {strides = array<i32>} : memref<128x256xf32, #tpu.memory_space<vmem>>, vector<1x128xf32>,
    %1282 = arith.index_cast %1278 : i32 to index
    %c0_638 = arith.constant 0 : index
    %1283 = vector.load %arg4[%1282, %c0_638] : memref<50x128xf32, #tpu.memory_space<vmem>>, vector<1x128xf32>
    %c106_639 = arith.constant 106 : index
    %c128_640 = arith.constant 128 : index
    %1284 = vector.load %arg10[%c106_639, %c128_640] : memref<128x256xf32, #tpu.memory_space<vmem>>, vector<1x128xf32>
    tpu.vector_store %arg10[%c106_639, %c128_640], %1283 {strides = array<i32>} : memref<128x256xf32, #tpu.memory_space<vmem>>, vector<1x128xf32>,
    %c107_i32 = arith.constant 107 : i32
    %1285 = arith.addi %0, %c107_i32 : i32
    %1286 = arith.index_cast %1285 : i32 to index
    %1287 = memref.load %arg1[%1286] : memref<256xi32, #tpu.memory_space<smem>>
    %c107_i32_641 = arith.constant 107 : i32
    %1288 = arith.addi %0, %c107_i32_641 : i32
    %1289 = arith.index_cast %1288 : i32 to index
    %1290 = memref.load %arg2[%1289] : memref<256xi32, #tpu.memory_space<smem>>
    %1291 = arith.index_cast %1287 : i32 to index
    %c0_642 = arith.constant 0 : index
    %1292 = vector.load %arg3[%1291, %c0_642] : memref<40x128xf32, #tpu.memory_space<vmem>>, vector<1x128xf32>
    %c107 = arith.constant 107 : index
    %c0_643 = arith.constant 0 : index
    %1293 = vector.load %arg10[%c107, %c0_643] : memref<128x256xf32, #tpu.memory_space<vmem>>, vector<1x128xf32>
    tpu.vector_store %arg10[%c107, %c0_643], %1292 {strides = array<i32>} : memref<128x256xf32, #tpu.memory_space<vmem>>, vector<1x128xf32>,
    %1294 = arith.index_cast %1290 : i32 to index
    %c0_644 = arith.constant 0 : index
    %1295 = vector.load %arg4[%1294, %c0_644] : memref<50x128xf32, #tpu.memory_space<vmem>>, vector<1x128xf32>
    %c107_645 = arith.constant 107 : index
    %c128_646 = arith.constant 128 : index
    %1296 = vector.load %arg10[%c107_645, %c128_646] : memref<128x256xf32, #tpu.memory_space<vmem>>, vector<1x128xf32>
    tpu.vector_store %arg10[%c107_645, %c128_646], %1295 {strides = array<i32>} : memref<128x256xf32, #tpu.memory_space<vmem>>, vector<1x128xf32>,
    %c108_i32 = arith.constant 108 : i32
    %1297 = arith.addi %0, %c108_i32 : i32
    %1298 = arith.index_cast %1297 : i32 to index
    %1299 = memref.load %arg1[%1298] : memref<256xi32, #tpu.memory_space<smem>>
    %c108_i32_647 = arith.constant 108 : i32
    %1300 = arith.addi %0, %c108_i32_647 : i32
    %1301 = arith.index_cast %1300 : i32 to index
    %1302 = memref.load %arg2[%1301] : memref<256xi32, #tpu.memory_space<smem>>
    %1303 = arith.index_cast %1299 : i32 to index
    %c0_648 = arith.constant 0 : index
    %1304 = vector.load %arg3[%1303, %c0_648] : memref<40x128xf32, #tpu.memory_space<vmem>>, vector<1x128xf32>
    %c108 = arith.constant 108 : index
    %c0_649 = arith.constant 0 : index
    %1305 = vector.load %arg10[%c108, %c0_649] : memref<128x256xf32, #tpu.memory_space<vmem>>, vector<1x128xf32>
    tpu.vector_store %arg10[%c108, %c0_649], %1304 {strides = array<i32>} : memref<128x256xf32, #tpu.memory_space<vmem>>, vector<1x128xf32>,
    %1306 = arith.index_cast %1302 : i32 to index
    %c0_650 = arith.constant 0 : index
    %1307 = vector.load %arg4[%1306, %c0_650] : memref<50x128xf32, #tpu.memory_space<vmem>>, vector<1x128xf32>
    %c108_651 = arith.constant 108 : index
    %c128_652 = arith.constant 128 : index
    %1308 = vector.load %arg10[%c108_651, %c128_652] : memref<128x256xf32, #tpu.memory_space<vmem>>, vector<1x128xf32>
    tpu.vector_store %arg10[%c108_651, %c128_652], %1307 {strides = array<i32>} : memref<128x256xf32, #tpu.memory_space<vmem>>, vector<1x128xf32>,
    %c109_i32 = arith.constant 109 : i32
    %1309 = arith.addi %0, %c109_i32 : i32
    %1310 = arith.index_cast %1309 : i32 to index
    %1311 = memref.load %arg1[%1310] : memref<256xi32, #tpu.memory_space<smem>>
    %c109_i32_653 = arith.constant 109 : i32
    %1312 = arith.addi %0, %c109_i32_653 : i32
    %1313 = arith.index_cast %1312 : i32 to index
    %1314 = memref.load %arg2[%1313] : memref<256xi32, #tpu.memory_space<smem>>
    %1315 = arith.index_cast %1311 : i32 to index
    %c0_654 = arith.constant 0 : index
    %1316 = vector.load %arg3[%1315, %c0_654] : memref<40x128xf32, #tpu.memory_space<vmem>>, vector<1x128xf32>
    %c109 = arith.constant 109 : index
    %c0_655 = arith.constant 0 : index
    %1317 = vector.load %arg10[%c109, %c0_655] : memref<128x256xf32, #tpu.memory_space<vmem>>, vector<1x128xf32>
    tpu.vector_store %arg10[%c109, %c0_655], %1316 {strides = array<i32>} : memref<128x256xf32, #tpu.memory_space<vmem>>, vector<1x128xf32>,
    %1318 = arith.index_cast %1314 : i32 to index
    %c0_656 = arith.constant 0 : index
    %1319 = vector.load %arg4[%1318, %c0_656] : memref<50x128xf32, #tpu.memory_space<vmem>>, vector<1x128xf32>
    %c109_657 = arith.constant 109 : index
    %c128_658 = arith.constant 128 : index
    %1320 = vector.load %arg10[%c109_657, %c128_658] : memref<128x256xf32, #tpu.memory_space<vmem>>, vector<1x128xf32>
    tpu.vector_store %arg10[%c109_657, %c128_658], %1319 {strides = array<i32>} : memref<128x256xf32, #tpu.memory_space<vmem>>, vector<1x128xf32>,
    %c110_i32 = arith.constant 110 : i32
    %1321 = arith.addi %0, %c110_i32 : i32
    %1322 = arith.index_cast %1321 : i32 to index
    %1323 = memref.load %arg1[%1322] : memref<256xi32, #tpu.memory_space<smem>>
    %c110_i32_659 = arith.constant 110 : i32
    %1324 = arith.addi %0, %c110_i32_659 : i32
    %1325 = arith.index_cast %1324 : i32 to index
    %1326 = memref.load %arg2[%1325] : memref<256xi32, #tpu.memory_space<smem>>
    %1327 = arith.index_cast %1323 : i32 to index
    %c0_660 = arith.constant 0 : index
    %1328 = vector.load %arg3[%1327, %c0_660] : memref<40x128xf32, #tpu.memory_space<vmem>>, vector<1x128xf32>
    %c110 = arith.constant 110 : index
    %c0_661 = arith.constant 0 : index
    %1329 = vector.load %arg10[%c110, %c0_661] : memref<128x256xf32, #tpu.memory_space<vmem>>, vector<1x128xf32>
    tpu.vector_store %arg10[%c110, %c0_661], %1328 {strides = array<i32>} : memref<128x256xf32, #tpu.memory_space<vmem>>, vector<1x128xf32>,
    %1330 = arith.index_cast %1326 : i32 to index
    %c0_662 = arith.constant 0 : index
    %1331 = vector.load %arg4[%1330, %c0_662] : memref<50x128xf32, #tpu.memory_space<vmem>>, vector<1x128xf32>
    %c110_663 = arith.constant 110 : index
    %c128_664 = arith.constant 128 : index
    %1332 = vector.load %arg10[%c110_663, %c128_664] : memref<128x256xf32, #tpu.memory_space<vmem>>, vector<1x128xf32>
    tpu.vector_store %arg10[%c110_663, %c128_664], %1331 {strides = array<i32>} : memref<128x256xf32, #tpu.memory_space<vmem>>, vector<1x128xf32>,
    %c111_i32 = arith.constant 111 : i32
    %1333 = arith.addi %0, %c111_i32 : i32
    %1334 = arith.index_cast %1333 : i32 to index
    %1335 = memref.load %arg1[%1334] : memref<256xi32, #tpu.memory_space<smem>>
    %c111_i32_665 = arith.constant 111 : i32
    %1336 = arith.addi %0, %c111_i32_665 : i32
    %1337 = arith.index_cast %1336 : i32 to index
    %1338 = memref.load %arg2[%1337] : memref<256xi32, #tpu.memory_space<smem>>
    %1339 = arith.index_cast %1335 : i32 to index
    %c0_666 = arith.constant 0 : index
    %1340 = vector.load %arg3[%1339, %c0_666] : memref<40x128xf32, #tpu.memory_space<vmem>>, vector<1x128xf32>
    %c111 = arith.constant 111 : index
    %c0_667 = arith.constant 0 : index
    %1341 = vector.load %arg10[%c111, %c0_667] : memref<128x256xf32, #tpu.memory_space<vmem>>, vector<1x128xf32>
    tpu.vector_store %arg10[%c111, %c0_667], %1340 {strides = array<i32>} : memref<128x256xf32, #tpu.memory_space<vmem>>, vector<1x128xf32>,
    %1342 = arith.index_cast %1338 : i32 to index
    %c0_668 = arith.constant 0 : index
    %1343 = vector.load %arg4[%1342, %c0_668] : memref<50x128xf32, #tpu.memory_space<vmem>>, vector<1x128xf32>
    %c111_669 = arith.constant 111 : index
    %c128_670 = arith.constant 128 : index
    %1344 = vector.load %arg10[%c111_669, %c128_670] : memref<128x256xf32, #tpu.memory_space<vmem>>, vector<1x128xf32>
    tpu.vector_store %arg10[%c111_669, %c128_670], %1343 {strides = array<i32>} : memref<128x256xf32, #tpu.memory_space<vmem>>, vector<1x128xf32>,
    %c112_i32 = arith.constant 112 : i32
    %1345 = arith.addi %0, %c112_i32 : i32
    %1346 = arith.index_cast %1345 : i32 to index
    %1347 = memref.load %arg1[%1346] : memref<256xi32, #tpu.memory_space<smem>>
    %c112_i32_671 = arith.constant 112 : i32
    %1348 = arith.addi %0, %c112_i32_671 : i32
    %1349 = arith.index_cast %1348 : i32 to index
    %1350 = memref.load %arg2[%1349] : memref<256xi32, #tpu.memory_space<smem>>
    %1351 = arith.index_cast %1347 : i32 to index
    %c0_672 = arith.constant 0 : index
    %1352 = vector.load %arg3[%1351, %c0_672] : memref<40x128xf32, #tpu.memory_space<vmem>>, vector<1x128xf32>
    %c112 = arith.constant 112 : index
    %c0_673 = arith.constant 0 : index
    %1353 = vector.load %arg10[%c112, %c0_673] : memref<128x256xf32, #tpu.memory_space<vmem>>, vector<1x128xf32>
    tpu.vector_store %arg10[%c112, %c0_673], %1352 {strides = array<i32>} : memref<128x256xf32, #tpu.memory_space<vmem>>, vector<1x128xf32>,
    %1354 = arith.index_cast %1350 : i32 to index
    %c0_674 = arith.constant 0 : index
    %1355 = vector.load %arg4[%1354, %c0_674] : memref<50x128xf32, #tpu.memory_space<vmem>>, vector<1x128xf32>
    %c112_675 = arith.constant 112 : index
    %c128_676 = arith.constant 128 : index
    %1356 = vector.load %arg10[%c112_675, %c128_676] : memref<128x256xf32, #tpu.memory_space<vmem>>, vector<1x128xf32>
    tpu.vector_store %arg10[%c112_675, %c128_676], %1355 {strides = array<i32>} : memref<128x256xf32, #tpu.memory_space<vmem>>, vector<1x128xf32>,
    %c113_i32 = arith.constant 113 : i32
    %1357 = arith.addi %0, %c113_i32 : i32
    %1358 = arith.index_cast %1357 : i32 to index
    %1359 = memref.load %arg1[%1358] : memref<256xi32, #tpu.memory_space<smem>>
    %c113_i32_677 = arith.constant 113 : i32
    %1360 = arith.addi %0, %c113_i32_677 : i32
    %1361 = arith.index_cast %1360 : i32 to index
    %1362 = memref.load %arg2[%1361] : memref<256xi32, #tpu.memory_space<smem>>
    %1363 = arith.index_cast %1359 : i32 to index
    %c0_678 = arith.constant 0 : index
    %1364 = vector.load %arg3[%1363, %c0_678] : memref<40x128xf32, #tpu.memory_space<vmem>>, vector<1x128xf32>
    %c113 = arith.constant 113 : index
    %c0_679 = arith.constant 0 : index
    %1365 = vector.load %arg10[%c113, %c0_679] : memref<128x256xf32, #tpu.memory_space<vmem>>, vector<1x128xf32>
    tpu.vector_store %arg10[%c113, %c0_679], %1364 {strides = array<i32>} : memref<128x256xf32, #tpu.memory_space<vmem>>, vector<1x128xf32>,
    %1366 = arith.index_cast %1362 : i32 to index
    %c0_680 = arith.constant 0 : index
    %1367 = vector.load %arg4[%1366, %c0_680] : memref<50x128xf32, #tpu.memory_space<vmem>>, vector<1x128xf32>
    %c113_681 = arith.constant 113 : index
    %c128_682 = arith.constant 128 : index
    %1368 = vector.load %arg10[%c113_681, %c128_682] : memref<128x256xf32, #tpu.memory_space<vmem>>, vector<1x128xf32>
    tpu.vector_store %arg10[%c113_681, %c128_682], %1367 {strides = array<i32>} : memref<128x256xf32, #tpu.memory_space<vmem>>, vector<1x128xf32>,
    %c114_i32 = arith.constant 114 : i32
    %1369 = arith.addi %0, %c114_i32 : i32
    %1370 = arith.index_cast %1369 : i32 to index
    %1371 = memref.load %arg1[%1370] : memref<256xi32, #tpu.memory_space<smem>>
    %c114_i32_683 = arith.constant 114 : i32
    %1372 = arith.addi %0, %c114_i32_683 : i32
    %1373 = arith.index_cast %1372 : i32 to index
    %1374 = memref.load %arg2[%1373] : memref<256xi32, #tpu.memory_space<smem>>
    %1375 = arith.index_cast %1371 : i32 to index
    %c0_684 = arith.constant 0 : index
    %1376 = vector.load %arg3[%1375, %c0_684] : memref<40x128xf32, #tpu.memory_space<vmem>>, vector<1x128xf32>
    %c114 = arith.constant 114 : index
    %c0_685 = arith.constant 0 : index
    %1377 = vector.load %arg10[%c114, %c0_685] : memref<128x256xf32, #tpu.memory_space<vmem>>, vector<1x128xf32>
    tpu.vector_store %arg10[%c114, %c0_685], %1376 {strides = array<i32>} : memref<128x256xf32, #tpu.memory_space<vmem>>, vector<1x128xf32>,
    %1378 = arith.index_cast %1374 : i32 to index
    %c0_686 = arith.constant 0 : index
    %1379 = vector.load %arg4[%1378, %c0_686] : memref<50x128xf32, #tpu.memory_space<vmem>>, vector<1x128xf32>
    %c114_687 = arith.constant 114 : index
    %c128_688 = arith.constant 128 : index
    %1380 = vector.load %arg10[%c114_687, %c128_688] : memref<128x256xf32, #tpu.memory_space<vmem>>, vector<1x128xf32>
    tpu.vector_store %arg10[%c114_687, %c128_688], %1379 {strides = array<i32>} : memref<128x256xf32, #tpu.memory_space<vmem>>, vector<1x128xf32>,
    %c115_i32 = arith.constant 115 : i32
    %1381 = arith.addi %0, %c115_i32 : i32
    %1382 = arith.index_cast %1381 : i32 to index
    %1383 = memref.load %arg1[%1382] : memref<256xi32, #tpu.memory_space<smem>>
    %c115_i32_689 = arith.constant 115 : i32
    %1384 = arith.addi %0, %c115_i32_689 : i32
    %1385 = arith.index_cast %1384 : i32 to index
    %1386 = memref.load %arg2[%1385] : memref<256xi32, #tpu.memory_space<smem>>
    %1387 = arith.index_cast %1383 : i32 to index
    %c0_690 = arith.constant 0 : index
    %1388 = vector.load %arg3[%1387, %c0_690] : memref<40x128xf32, #tpu.memory_space<vmem>>, vector<1x128xf32>
    %c115 = arith.constant 115 : index
    %c0_691 = arith.constant 0 : index
    %1389 = vector.load %arg10[%c115, %c0_691] : memref<128x256xf32, #tpu.memory_space<vmem>>, vector<1x128xf32>
    tpu.vector_store %arg10[%c115, %c0_691], %1388 {strides = array<i32>} : memref<128x256xf32, #tpu.memory_space<vmem>>, vector<1x128xf32>,
    %1390 = arith.index_cast %1386 : i32 to index
    %c0_692 = arith.constant 0 : index
    %1391 = vector.load %arg4[%1390, %c0_692] : memref<50x128xf32, #tpu.memory_space<vmem>>, vector<1x128xf32>
    %c115_693 = arith.constant 115 : index
    %c128_694 = arith.constant 128 : index
    %1392 = vector.load %arg10[%c115_693, %c128_694] : memref<128x256xf32, #tpu.memory_space<vmem>>, vector<1x128xf32>
    tpu.vector_store %arg10[%c115_693, %c128_694], %1391 {strides = array<i32>} : memref<128x256xf32, #tpu.memory_space<vmem>>, vector<1x128xf32>,
    %c116_i32 = arith.constant 116 : i32
    %1393 = arith.addi %0, %c116_i32 : i32
    %1394 = arith.index_cast %1393 : i32 to index
    %1395 = memref.load %arg1[%1394] : memref<256xi32, #tpu.memory_space<smem>>
    %c116_i32_695 = arith.constant 116 : i32
    %1396 = arith.addi %0, %c116_i32_695 : i32
    %1397 = arith.index_cast %1396 : i32 to index
    %1398 = memref.load %arg2[%1397] : memref<256xi32, #tpu.memory_space<smem>>
    %1399 = arith.index_cast %1395 : i32 to index
    %c0_696 = arith.constant 0 : index
    %1400 = vector.load %arg3[%1399, %c0_696] : memref<40x128xf32, #tpu.memory_space<vmem>>, vector<1x128xf32>
    %c116 = arith.constant 116 : index
    %c0_697 = arith.constant 0 : index
    %1401 = vector.load %arg10[%c116, %c0_697] : memref<128x256xf32, #tpu.memory_space<vmem>>, vector<1x128xf32>
    tpu.vector_store %arg10[%c116, %c0_697], %1400 {strides = array<i32>} : memref<128x256xf32, #tpu.memory_space<vmem>>, vector<1x128xf32>,
    %1402 = arith.index_cast %1398 : i32 to index
    %c0_698 = arith.constant 0 : index
    %1403 = vector.load %arg4[%1402, %c0_698] : memref<50x128xf32, #tpu.memory_space<vmem>>, vector<1x128xf32>
    %c116_699 = arith.constant 116 : index
    %c128_700 = arith.constant 128 : index
    %1404 = vector.load %arg10[%c116_699, %c128_700] : memref<128x256xf32, #tpu.memory_space<vmem>>, vector<1x128xf32>
    tpu.vector_store %arg10[%c116_699, %c128_700], %1403 {strides = array<i32>} : memref<128x256xf32, #tpu.memory_space<vmem>>, vector<1x128xf32>,
    %c117_i32 = arith.constant 117 : i32
    %1405 = arith.addi %0, %c117_i32 : i32
    %1406 = arith.index_cast %1405 : i32 to index
    %1407 = memref.load %arg1[%1406] : memref<256xi32, #tpu.memory_space<smem>>
    %c117_i32_701 = arith.constant 117 : i32
    %1408 = arith.addi %0, %c117_i32_701 : i32
    %1409 = arith.index_cast %1408 : i32 to index
    %1410 = memref.load %arg2[%1409] : memref<256xi32, #tpu.memory_space<smem>>
    %1411 = arith.index_cast %1407 : i32 to index
    %c0_702 = arith.constant 0 : index
    %1412 = vector.load %arg3[%1411, %c0_702] : memref<40x128xf32, #tpu.memory_space<vmem>>, vector<1x128xf32>
    %c117 = arith.constant 117 : index
    %c0_703 = arith.constant 0 : index
    %1413 = vector.load %arg10[%c117, %c0_703] : memref<128x256xf32, #tpu.memory_space<vmem>>, vector<1x128xf32>
    tpu.vector_store %arg10[%c117, %c0_703], %1412 {strides = array<i32>} : memref<128x256xf32, #tpu.memory_space<vmem>>, vector<1x128xf32>,
    %1414 = arith.index_cast %1410 : i32 to index
    %c0_704 = arith.constant 0 : index
    %1415 = vector.load %arg4[%1414, %c0_704] : memref<50x128xf32, #tpu.memory_space<vmem>>, vector<1x128xf32>
    %c117_705 = arith.constant 117 : index
    %c128_706 = arith.constant 128 : index
    %1416 = vector.load %arg10[%c117_705, %c128_706] : memref<128x256xf32, #tpu.memory_space<vmem>>, vector<1x128xf32>
    tpu.vector_store %arg10[%c117_705, %c128_706], %1415 {strides = array<i32>} : memref<128x256xf32, #tpu.memory_space<vmem>>, vector<1x128xf32>,
    %c118_i32 = arith.constant 118 : i32
    %1417 = arith.addi %0, %c118_i32 : i32
    %1418 = arith.index_cast %1417 : i32 to index
    %1419 = memref.load %arg1[%1418] : memref<256xi32, #tpu.memory_space<smem>>
    %c118_i32_707 = arith.constant 118 : i32
    %1420 = arith.addi %0, %c118_i32_707 : i32
    %1421 = arith.index_cast %1420 : i32 to index
    %1422 = memref.load %arg2[%1421] : memref<256xi32, #tpu.memory_space<smem>>
    %1423 = arith.index_cast %1419 : i32 to index
    %c0_708 = arith.constant 0 : index
    %1424 = vector.load %arg3[%1423, %c0_708] : memref<40x128xf32, #tpu.memory_space<vmem>>, vector<1x128xf32>
    %c118 = arith.constant 118 : index
    %c0_709 = arith.constant 0 : index
    %1425 = vector.load %arg10[%c118, %c0_709] : memref<128x256xf32, #tpu.memory_space<vmem>>, vector<1x128xf32>
    tpu.vector_store %arg10[%c118, %c0_709], %1424 {strides = array<i32>} : memref<128x256xf32, #tpu.memory_space<vmem>>, vector<1x128xf32>,
    %1426 = arith.index_cast %1422 : i32 to index
    %c0_710 = arith.constant 0 : index
    %1427 = vector.load %arg4[%1426, %c0_710] : memref<50x128xf32, #tpu.memory_space<vmem>>, vector<1x128xf32>
    %c118_711 = arith.constant 118 : index
    %c128_712 = arith.constant 128 : index
    %1428 = vector.load %arg10[%c118_711, %c128_712] : memref<128x256xf32, #tpu.memory_space<vmem>>, vector<1x128xf32>
    tpu.vector_store %arg10[%c118_711, %c128_712], %1427 {strides = array<i32>} : memref<128x256xf32, #tpu.memory_space<vmem>>, vector<1x128xf32>,
    %c119_i32 = arith.constant 119 : i32
    %1429 = arith.addi %0, %c119_i32 : i32
    %1430 = arith.index_cast %1429 : i32 to index
    %1431 = memref.load %arg1[%1430] : memref<256xi32, #tpu.memory_space<smem>>
    %c119_i32_713 = arith.constant 119 : i32
    %1432 = arith.addi %0, %c119_i32_713 : i32
    %1433 = arith.index_cast %1432 : i32 to index
    %1434 = memref.load %arg2[%1433] : memref<256xi32, #tpu.memory_space<smem>>
    %1435 = arith.index_cast %1431 : i32 to index
    %c0_714 = arith.constant 0 : index
    %1436 = vector.load %arg3[%1435, %c0_714] : memref<40x128xf32, #tpu.memory_space<vmem>>, vector<1x128xf32>
    %c119 = arith.constant 119 : index
    %c0_715 = arith.constant 0 : index
    %1437 = vector.load %arg10[%c119, %c0_715] : memref<128x256xf32, #tpu.memory_space<vmem>>, vector<1x128xf32>
    tpu.vector_store %arg10[%c119, %c0_715], %1436 {strides = array<i32>} : memref<128x256xf32, #tpu.memory_space<vmem>>, vector<1x128xf32>,
    %1438 = arith.index_cast %1434 : i32 to index
    %c0_716 = arith.constant 0 : index
    %1439 = vector.load %arg4[%1438, %c0_716] : memref<50x128xf32, #tpu.memory_space<vmem>>, vector<1x128xf32>
    %c119_717 = arith.constant 119 : index
    %c128_718 = arith.constant 128 : index
    %1440 = vector.load %arg10[%c119_717, %c128_718] : memref<128x256xf32, #tpu.memory_space<vmem>>, vector<1x128xf32>
    tpu.vector_store %arg10[%c119_717, %c128_718], %1439 {strides = array<i32>} : memref<128x256xf32, #tpu.memory_space<vmem>>, vector<1x128xf32>,
    %c120_i32 = arith.constant 120 : i32
    %1441 = arith.addi %0, %c120_i32 : i32
    %1442 = arith.index_cast %1441 : i32 to index
    %1443 = memref.load %arg1[%1442] : memref<256xi32, #tpu.memory_space<smem>>
    %c120_i32_719 = arith.constant 120 : i32
    %1444 = arith.addi %0, %c120_i32_719 : i32
    %1445 = arith.index_cast %1444 : i32 to index
    %1446 = memref.load %arg2[%1445] : memref<256xi32, #tpu.memory_space<smem>>
    %1447 = arith.index_cast %1443 : i32 to index
    %c0_720 = arith.constant 0 : index
    %1448 = vector.load %arg3[%1447, %c0_720] : memref<40x128xf32, #tpu.memory_space<vmem>>, vector<1x128xf32>
    %c120 = arith.constant 120 : index
    %c0_721 = arith.constant 0 : index
    %1449 = vector.load %arg10[%c120, %c0_721] : memref<128x256xf32, #tpu.memory_space<vmem>>, vector<1x128xf32>
    tpu.vector_store %arg10[%c120, %c0_721], %1448 {strides = array<i32>} : memref<128x256xf32, #tpu.memory_space<vmem>>, vector<1x128xf32>,
    %1450 = arith.index_cast %1446 : i32 to index
    %c0_722 = arith.constant 0 : index
    %1451 = vector.load %arg4[%1450, %c0_722] : memref<50x128xf32, #tpu.memory_space<vmem>>, vector<1x128xf32>
    %c120_723 = arith.constant 120 : index
    %c128_724 = arith.constant 128 : index
    %1452 = vector.load %arg10[%c120_723, %c128_724] : memref<128x256xf32, #tpu.memory_space<vmem>>, vector<1x128xf32>
    tpu.vector_store %arg10[%c120_723, %c128_724], %1451 {strides = array<i32>} : memref<128x256xf32, #tpu.memory_space<vmem>>, vector<1x128xf32>,
    %c121_i32 = arith.constant 121 : i32
    %1453 = arith.addi %0, %c121_i32 : i32
    %1454 = arith.index_cast %1453 : i32 to index
    %1455 = memref.load %arg1[%1454] : memref<256xi32, #tpu.memory_space<smem>>
    %c121_i32_725 = arith.constant 121 : i32
    %1456 = arith.addi %0, %c121_i32_725 : i32
    %1457 = arith.index_cast %1456 : i32 to index
    %1458 = memref.load %arg2[%1457] : memref<256xi32, #tpu.memory_space<smem>>
    %1459 = arith.index_cast %1455 : i32 to index
    %c0_726 = arith.constant 0 : index
    %1460 = vector.load %arg3[%1459, %c0_726] : memref<40x128xf32, #tpu.memory_space<vmem>>, vector<1x128xf32>
    %c121 = arith.constant 121 : index
    %c0_727 = arith.constant 0 : index
    %1461 = vector.load %arg10[%c121, %c0_727] : memref<128x256xf32, #tpu.memory_space<vmem>>, vector<1x128xf32>
    tpu.vector_store %arg10[%c121, %c0_727], %1460 {strides = array<i32>} : memref<128x256xf32, #tpu.memory_space<vmem>>, vector<1x128xf32>,
    %1462 = arith.index_cast %1458 : i32 to index
    %c0_728 = arith.constant 0 : index
    %1463 = vector.load %arg4[%1462, %c0_728] : memref<50x128xf32, #tpu.memory_space<vmem>>, vector<1x128xf32>
    %c121_729 = arith.constant 121 : index
    %c128_730 = arith.constant 128 : index
    %1464 = vector.load %arg10[%c121_729, %c128_730] : memref<128x256xf32, #tpu.memory_space<vmem>>, vector<1x128xf32>
    tpu.vector_store %arg10[%c121_729, %c128_730], %1463 {strides = array<i32>} : memref<128x256xf32, #tpu.memory_space<vmem>>, vector<1x128xf32>,
    %c122_i32 = arith.constant 122 : i32
    %1465 = arith.addi %0, %c122_i32 : i32
    %1466 = arith.index_cast %1465 : i32 to index
    %1467 = memref.load %arg1[%1466] : memref<256xi32, #tpu.memory_space<smem>>
    %c122_i32_731 = arith.constant 122 : i32
    %1468 = arith.addi %0, %c122_i32_731 : i32
    %1469 = arith.index_cast %1468 : i32 to index
    %1470 = memref.load %arg2[%1469] : memref<256xi32, #tpu.memory_space<smem>>
    %1471 = arith.index_cast %1467 : i32 to index
    %c0_732 = arith.constant 0 : index
    %1472 = vector.load %arg3[%1471, %c0_732] : memref<40x128xf32, #tpu.memory_space<vmem>>, vector<1x128xf32>
    %c122 = arith.constant 122 : index
    %c0_733 = arith.constant 0 : index
    %1473 = vector.load %arg10[%c122, %c0_733] : memref<128x256xf32, #tpu.memory_space<vmem>>, vector<1x128xf32>
    tpu.vector_store %arg10[%c122, %c0_733], %1472 {strides = array<i32>} : memref<128x256xf32, #tpu.memory_space<vmem>>, vector<1x128xf32>,
    %1474 = arith.index_cast %1470 : i32 to index
    %c0_734 = arith.constant 0 : index
    %1475 = vector.load %arg4[%1474, %c0_734] : memref<50x128xf32, #tpu.memory_space<vmem>>, vector<1x128xf32>
    %c122_735 = arith.constant 122 : index
    %c128_736 = arith.constant 128 : index
    %1476 = vector.load %arg10[%c122_735, %c128_736] : memref<128x256xf32, #tpu.memory_space<vmem>>, vector<1x128xf32>
    tpu.vector_store %arg10[%c122_735, %c128_736], %1475 {strides = array<i32>} : memref<128x256xf32, #tpu.memory_space<vmem>>, vector<1x128xf32>,
    %c123_i32 = arith.constant 123 : i32
    %1477 = arith.addi %0, %c123_i32 : i32
    %1478 = arith.index_cast %1477 : i32 to index
    %1479 = memref.load %arg1[%1478] : memref<256xi32, #tpu.memory_space<smem>>
    %c123_i32_737 = arith.constant 123 : i32
    %1480 = arith.addi %0, %c123_i32_737 : i32
    %1481 = arith.index_cast %1480 : i32 to index
    %1482 = memref.load %arg2[%1481] : memref<256xi32, #tpu.memory_space<smem>>
    %1483 = arith.index_cast %1479 : i32 to index
    %c0_738 = arith.constant 0 : index
    %1484 = vector.load %arg3[%1483, %c0_738] : memref<40x128xf32, #tpu.memory_space<vmem>>, vector<1x128xf32>
    %c123 = arith.constant 123 : index
    %c0_739 = arith.constant 0 : index
    %1485 = vector.load %arg10[%c123, %c0_739] : memref<128x256xf32, #tpu.memory_space<vmem>>, vector<1x128xf32>
    tpu.vector_store %arg10[%c123, %c0_739], %1484 {strides = array<i32>} : memref<128x256xf32, #tpu.memory_space<vmem>>, vector<1x128xf32>,
    %1486 = arith.index_cast %1482 : i32 to index
    %c0_740 = arith.constant 0 : index
    %1487 = vector.load %arg4[%1486, %c0_740] : memref<50x128xf32, #tpu.memory_space<vmem>>, vector<1x128xf32>
    %c123_741 = arith.constant 123 : index
    %c128_742 = arith.constant 128 : index
    %1488 = vector.load %arg10[%c123_741, %c128_742] : memref<128x256xf32, #tpu.memory_space<vmem>>, vector<1x128xf32>
    tpu.vector_store %arg10[%c123_741, %c128_742], %1487 {strides = array<i32>} : memref<128x256xf32, #tpu.memory_space<vmem>>, vector<1x128xf32>,
    %c124_i32 = arith.constant 124 : i32
    %1489 = arith.addi %0, %c124_i32 : i32
    %1490 = arith.index_cast %1489 : i32 to index
    %1491 = memref.load %arg1[%1490] : memref<256xi32, #tpu.memory_space<smem>>
    %c124_i32_743 = arith.constant 124 : i32
    %1492 = arith.addi %0, %c124_i32_743 : i32
    %1493 = arith.index_cast %1492 : i32 to index
    %1494 = memref.load %arg2[%1493] : memref<256xi32, #tpu.memory_space<smem>>
    %1495 = arith.index_cast %1491 : i32 to index
    %c0_744 = arith.constant 0 : index
    %1496 = vector.load %arg3[%1495, %c0_744] : memref<40x128xf32, #tpu.memory_space<vmem>>, vector<1x128xf32>
    %c124 = arith.constant 124 : index
    %c0_745 = arith.constant 0 : index
    %1497 = vector.load %arg10[%c124, %c0_745] : memref<128x256xf32, #tpu.memory_space<vmem>>, vector<1x128xf32>
    tpu.vector_store %arg10[%c124, %c0_745], %1496 {strides = array<i32>} : memref<128x256xf32, #tpu.memory_space<vmem>>, vector<1x128xf32>,
    %1498 = arith.index_cast %1494 : i32 to index
    %c0_746 = arith.constant 0 : index
    %1499 = vector.load %arg4[%1498, %c0_746] : memref<50x128xf32, #tpu.memory_space<vmem>>, vector<1x128xf32>
    %c124_747 = arith.constant 124 : index
    %c128_748 = arith.constant 128 : index
    %1500 = vector.load %arg10[%c124_747, %c128_748] : memref<128x256xf32, #tpu.memory_space<vmem>>, vector<1x128xf32>
    tpu.vector_store %arg10[%c124_747, %c128_748], %1499 {strides = array<i32>} : memref<128x256xf32, #tpu.memory_space<vmem>>, vector<1x128xf32>,
    %c125_i32 = arith.constant 125 : i32
    %1501 = arith.addi %0, %c125_i32 : i32
    %1502 = arith.index_cast %1501 : i32 to index
    %1503 = memref.load %arg1[%1502] : memref<256xi32, #tpu.memory_space<smem>>
    %c125_i32_749 = arith.constant 125 : i32
    %1504 = arith.addi %0, %c125_i32_749 : i32
    %1505 = arith.index_cast %1504 : i32 to index
    %1506 = memref.load %arg2[%1505] : memref<256xi32, #tpu.memory_space<smem>>
    %1507 = arith.index_cast %1503 : i32 to index
    %c0_750 = arith.constant 0 : index
    %1508 = vector.load %arg3[%1507, %c0_750] : memref<40x128xf32, #tpu.memory_space<vmem>>, vector<1x128xf32>
    %c125 = arith.constant 125 : index
    %c0_751 = arith.constant 0 : index
    %1509 = vector.load %arg10[%c125, %c0_751] : memref<128x256xf32, #tpu.memory_space<vmem>>, vector<1x128xf32>
    tpu.vector_store %arg10[%c125, %c0_751], %1508 {strides = array<i32>} : memref<128x256xf32, #tpu.memory_space<vmem>>, vector<1x128xf32>,
    %1510 = arith.index_cast %1506 : i32 to index
    %c0_752 = arith.constant 0 : index
    %1511 = vector.load %arg4[%1510, %c0_752] : memref<50x128xf32, #tpu.memory_space<vmem>>, vector<1x128xf32>
    %c125_753 = arith.constant 125 : index
    %c128_754 = arith.constant 128 : index
    %1512 = vector.load %arg10[%c125_753, %c128_754] : memref<128x256xf32, #tpu.memory_space<vmem>>, vector<1x128xf32>
    tpu.vector_store %arg10[%c125_753, %c128_754], %1511 {strides = array<i32>} : memref<128x256xf32, #tpu.memory_space<vmem>>, vector<1x128xf32>,
    %c126_i32 = arith.constant 126 : i32
    %1513 = arith.addi %0, %c126_i32 : i32
    %1514 = arith.index_cast %1513 : i32 to index
    %1515 = memref.load %arg1[%1514] : memref<256xi32, #tpu.memory_space<smem>>
    %c126_i32_755 = arith.constant 126 : i32
    %1516 = arith.addi %0, %c126_i32_755 : i32
    %1517 = arith.index_cast %1516 : i32 to index
    %1518 = memref.load %arg2[%1517] : memref<256xi32, #tpu.memory_space<smem>>
    %1519 = arith.index_cast %1515 : i32 to index
    %c0_756 = arith.constant 0 : index
    %1520 = vector.load %arg3[%1519, %c0_756] : memref<40x128xf32, #tpu.memory_space<vmem>>, vector<1x128xf32>
    %c126 = arith.constant 126 : index
    %c0_757 = arith.constant 0 : index
    %1521 = vector.load %arg10[%c126, %c0_757] : memref<128x256xf32, #tpu.memory_space<vmem>>, vector<1x128xf32>
    tpu.vector_store %arg10[%c126, %c0_757], %1520 {strides = array<i32>} : memref<128x256xf32, #tpu.memory_space<vmem>>, vector<1x128xf32>,
    %1522 = arith.index_cast %1518 : i32 to index
    %c0_758 = arith.constant 0 : index
    %1523 = vector.load %arg4[%1522, %c0_758] : memref<50x128xf32, #tpu.memory_space<vmem>>, vector<1x128xf32>
    %c126_759 = arith.constant 126 : index
    %c128_760 = arith.constant 128 : index
    %1524 = vector.load %arg10[%c126_759, %c128_760] : memref<128x256xf32, #tpu.memory_space<vmem>>, vector<1x128xf32>
    tpu.vector_store %arg10[%c126_759, %c128_760], %1523 {strides = array<i32>} : memref<128x256xf32, #tpu.memory_space<vmem>>, vector<1x128xf32>,
    %c127_i32 = arith.constant 127 : i32
    %1525 = arith.addi %0, %c127_i32 : i32
    %1526 = arith.index_cast %1525 : i32 to index
    %1527 = memref.load %arg1[%1526] : memref<256xi32, #tpu.memory_space<smem>>
    %c127_i32_761 = arith.constant 127 : i32
    %1528 = arith.addi %0, %c127_i32_761 : i32
    %1529 = arith.index_cast %1528 : i32 to index
    %1530 = memref.load %arg2[%1529] : memref<256xi32, #tpu.memory_space<smem>>
    %1531 = arith.index_cast %1527 : i32 to index
    %c0_762 = arith.constant 0 : index
    %1532 = vector.load %arg3[%1531, %c0_762] : memref<40x128xf32, #tpu.memory_space<vmem>>, vector<1x128xf32>
    %c127 = arith.constant 127 : index
    %c0_763 = arith.constant 0 : index
    %1533 = vector.load %arg10[%c127, %c0_763] : memref<128x256xf32, #tpu.memory_space<vmem>>, vector<1x128xf32>
    tpu.vector_store %arg10[%c127, %c0_763], %1532 {strides = array<i32>} : memref<128x256xf32, #tpu.memory_space<vmem>>, vector<1x128xf32>,
    %1534 = arith.index_cast %1530 : i32 to index
    %c0_764 = arith.constant 0 : index
    %1535 = vector.load %arg4[%1534, %c0_764] : memref<50x128xf32, #tpu.memory_space<vmem>>, vector<1x128xf32>
    %c127_765 = arith.constant 127 : index
    %c128_766 = arith.constant 128 : index
    %1536 = vector.load %arg10[%c127_765, %c128_766] : memref<128x256xf32, #tpu.memory_space<vmem>>, vector<1x128xf32>
    tpu.vector_store %arg10[%c127_765, %c128_766], %1535 {strides = array<i32>} : memref<128x256xf32, #tpu.memory_space<vmem>>, vector<1x128xf32>,
    %c0_767 = arith.constant 0 : index
    %c0_768 = arith.constant 0 : index
    %1537 = vector.load %arg10[%c0_767, %c0_768] : memref<128x256xf32, #tpu.memory_space<vmem>>, vector<128x256xf32>
    %cst = arith.constant 0.000000e+00 : f32
    %1538 = vector.broadcast %cst : f32 to vector<128x256xf32>
    %1539 = arith.maximumf %1537, %1538 : vector<128x256xf32>
    %1540 = arith.truncf %1539 : vector<128x256xf32> to vector<128x256xbf16>
    %c0_769 = arith.constant 0 : index
    %c0_770 = arith.constant 0 : index
    %1541 = vector.load %arg5[%c0_769, %c0_770] : memref<256x128xbf16, #tpu.memory_space<vmem>>, vector<256x128xbf16>
    %cst_771 = arith.constant dense<0.000000e+00> : vector<128x128xf32>
    %1542 = tpu.matmul %1540, %1541, %cst_771 {dimension_numbers = #tpu.dot_dimension_numbers<[1], [0], [0], [1], [0, 0, 1, 1], [], []>} : vector<128x256xbf16>, vector<256x128xbf16>, vector<128x128xf32> -> vector<128x128xf32>
    %c0_772 = arith.constant 0 : index
    %c0_773 = arith.constant 0 : index
    %1543 = vector.load %arg6[%c0_772, %c0_773] : memref<1x128xf32, #tpu.memory_space<vmem>>, vector<1x128xf32>
    %1544 = vector.broadcast %1543 : vector<1x128xf32> to vector<128x128xf32>
    %1545 = arith.addf %1542, %1544 : vector<128x128xf32>
    %cst_774 = arith.constant 0.000000e+00 : f32
    %1546 = vector.broadcast %cst_774 : f32 to vector<128x128xf32>
    %1547 = arith.maximumf %1545, %1546 : vector<128x128xf32>
    %c0_775 = arith.constant 0 : index
    %c0_776 = arith.constant 0 : index
    %1548 = vector.load %arg7[%c0_775, %c0_776] : memref<1x128xf32, #tpu.memory_space<vmem>>, vector<1x128xf32>
    %1549 = vector.broadcast %1548 : vector<1x128xf32> to vector<128x128xf32>
    %1550 = arith.mulf %1547, %1549 : vector<128x128xf32>
    %cst_777 = arith.constant dense<0.000000e+00> : vector<128xf32>
    %1551 = vector.multi_reduction <add>, %1550, %cst_777 [1] : vector<128x128xf32> to vector<128xf32>
    %c0_778 = arith.constant 0 : index
    %1552 = memref.load %arg8[%c0_778] : memref<1xf32, #tpu.memory_space<smem>>
    %1553 = vector.broadcast %1552 : f32 to vector<128xf32>
    %1554 = arith.addf %1551, %1553 : vector<128xf32>
    %1555 = vector.shape_cast %1554 : vector<128xf32> to vector<1x128xf32>
    %c0_779 = arith.constant 0 : index
    %c0_780 = arith.constant 0 : index
    %1556 = vector.load %arg9[%c0_779, %c0_780] : memref<1x128xf32, #tpu.memory_space<vmem>>, vector<1x128xf32>
    tpu.vector_store %arg9[%c0_779, %c0_780], %1555 {strides = array<i32>} : memref<1x128xf32, #tpu.memory_space<vmem>>, vector<1x128xf32>,
    return
  }
  func.func @transform_0(%arg0: i32, %arg1: memref<256xi32, #tpu.memory_space<smem>>, %arg2: memref<256xi32, #tpu.memory_space<smem>>) -> (i32, i32) {
    %c0_i32 = arith.constant 0 : i32
    %c0_i32_0 = arith.constant 0 : i32
    %c0_i32_1 = arith.constant 0 : i32
    return %c0_i32, %c0_i32_0 : i32, i32
  }
  func.func @transform_1(%arg0: i32, %arg1: memref<256xi32, #tpu.memory_space<smem>>, %arg2: memref<256xi32, #tpu.memory_space<smem>>) -> (i32, i32) {
    %c0_i32 = arith.constant 0 : i32
    %c0_i32_0 = arith.constant 0 : i32
    %c0_i32_1 = arith.constant 0 : i32
    return %c0_i32, %c0_i32_0 : i32, i32
  }
  func.func @transform_2(%arg0: i32, %arg1: memref<256xi32, #tpu.memory_space<smem>>, %arg2: memref<256xi32, #tpu.memory_space<smem>>) -> (i32, i32) {
    %c0_i32 = arith.constant 0 : i32
    %c0_i32_0 = arith.constant 0 : i32
    %c0_i32_1 = arith.constant 0 : i32
    return %c0_i32, %c0_i32_0 : i32, i32
  }
  func.func @transform_3(%arg0: i32, %arg1: memref<256xi32, #tpu.memory_space<smem>>, %arg2: memref<256xi32, #tpu.memory_space<smem>>) -> (i32, i32) {
    %c0_i32 = arith.constant 0 : i32
    %c0_i32_0 = arith.constant 0 : i32
    %c0_i32_1 = arith.constant 0 : i32
    return %c0_i32, %c0_i32_0 : i32, i32
  }
  func.func @transform_4(%arg0: i32, %arg1: memref<256xi32, #tpu.memory_space<smem>>, %arg2: memref<256xi32, #tpu.memory_space<smem>>) -> (i32, i32) {
    %c0_i32 = arith.constant 0 : i32
    %c0_i32_0 = arith.constant 0 : i32
    %c0_i32_1 = arith.constant 0 : i32
    return %c0_i32, %c0_i32_0 : i32, i32
  }
  func.func @transform_5(%arg0: i32, %arg1: memref<256xi32, #tpu.memory_space<smem>>, %arg2: memref<256xi32, #tpu.memory_space<smem>>) -> i32 {
    %c0_i32 = arith.constant 0 : i32
    %c0_i32_0 = arith.constant 0 : i32
    return %c0_i32 : i32
  }
  func.func @transform_6(%arg0: i32, %arg1: memref<256xi32, #tpu.memory_space<smem>>, %arg2: memref<256xi32, #tpu.memory_space<smem>>) -> (i32, i32) {
    %c0_i32 = arith.constant 0 : i32
    %c0_i32_0 = arith.constant 0 : i32
    return %c0_i32, %arg0 : i32, i32
  }
}

</mosaic_0001>

<llo_original>
// kernel: collab_filter_net.1
$region0: #{collab_filter_net.1}
  #allocation0 [shape = 'u32[]', space=smem, size = 0x4, offset = 0x4, fixed_abs, tag = 'smem constant byte address 0x4 - core index']
  #allocation1 [shape = 'u32[144,128]{1,0:T(1,128)}', space=vmem, size = 0x12000, scoped, tag = 'internal scratch']
  #allocation2 [shape = 'f32[128,256]{1,0:T(8,128)}', space=vmem, size = 0x20000, scoped, tag = 'scratch operand']
  #allocation3 [shape = 's32[1]{0}', space=sflag, size = 0x4, scoped, tag = 'scoped memory for collab_filter_net.1']
  #allocation4 [shape = 'u8[1024]{0}', space=smem, size = 0x400, scoped, tag = 'prefetched SMEM operand 0']
  #allocation5 [shape = 'u8[1024]{0}', space=smem, size = 0x400, scoped, tag = 'prefetched SMEM operand 1']
  #allocation6 [shape = 'f32[1]{0:T(128)S(6)}', space=smem, size = 0x200, scoped, tag = 'scoped memory for collab_filter_net.1']
  %s0 = inlined_call_operand.vmem [shape: s32[256], index: 0, kind: input, shape index: {}]
  %s1 = inlined_call_operand.vmem [shape: s32[256], index: 1, kind: input, shape index: {}]
  %s2 = inlined_call_operand.vmem [shape: f32[40,128], index: 2, kind: input, shape index: {}]
  %s3 = inlined_call_operand.vmem [shape: f32[50,128], index: 3, kind: input, shape index: {}]
  %s4 = inlined_call_operand.vmem [shape: bf16[256,128], index: 4, kind: input, shape index: {}]
  %s5 = inlined_call_operand.vmem [shape: f32[1,128], index: 5, kind: input, shape index: {}]
  %s6 = inlined_call_operand.vmem [shape: f32[1,128], index: 6, kind: input, shape index: {}]
  %s7 = inlined_call_operand.<no memory space> [shape: f32[1], index: 7, kind: input, shape index: {}]
  %s8 = inlined_call_operand.vmem [shape: f32[1,256], index: 8, kind: output, shape index: {}]
  %s9 = sld [smem:[#allocation0]]
  $region57: #{collab_filter_net.1} parent=0
    _
  %s11 = ssub.s32 1, %s9
  %s12 = scalar_select 0, %s11, %s9
  %s13 = sshll.u32 %s0, 4
  %s14 = int_to_ptr.vmem [resolvable:$true] %s13
  %16 = dma.vmem_to_smem %s14, 32, [#allocation4], [#allocation3]
  %s17 = sshll.u32 %s1, 4
  %s18 = int_to_ptr.vmem [resolvable:$true] %s17
  %20 = dma.vmem_to_smem %s18, 32, [#allocation5], [#allocation3]
  %21 = sst [smem:[#allocation6]] %s7
  %22 = dma.done [#allocation3], 64
  %23 = sfence
  loop: start=0, step=1, limit=4
  $region2: #{collab_filter_net.1} parent=0 // loop_pre_header
    _
  $region3: #{collab_filter_net.1} parent=0 // loop_header
    %s25 = sphi 0, %s29
    %p26 = scmp.ge.s32.totalorder %s25, 4
    %s33 = sphi 0, %s33
    %s35 = sphi 0, %s33
    %s36 = sphi 0, %s35
    %s50 = sphi 0, %s36
    %s54 = sphi 0, %s54
    %s56 = sphi 0, %s54
    %s57 = sphi 0, %s56
    %s71 = sphi 0, %s57
    %s75 = sphi 0, %s75
    %s77 = sphi 0, %s75
    %s78 = sphi 0, %s77
    %s92 = sphi 0, %s78
    %s96 = sphi 0, %s96
    %s98 = sphi 0, %s96
    %s99 = sphi 0, %s98
    %s113 = sphi 0, %s99
    %s117 = sphi 0, %s117
    %s119 = sphi 0, %s117
    %s120 = sphi 0, %s119
    %s134 = sphi 0, %s120
    %s138 = sphi 0, %s138
    %s140 = sphi 0, %s138
    %s141 = sphi 0, %s140
    %s155 = sphi 0, %s141
    %s161 = sphi 0, %s163
    %s164 = sphi 0, %s161
    %s165 = sphi 0, %s164
    %s181 = sphi 0, %s165
  $region4: #{collab_filter_net.1} parent=0 // loop_header_branch
    %28 = sbr.rel (%p26) target = $region8
  $region5: #{collab_filter_net.1} parent=0 // loop_body
    %s30 = ssub.s32 %s25, 1
    %s31 = ssub.s32 %s25, 2
    %s32 = sadd.s32 %s25, 1
    %s34 = sadd.s32 %s33, 1
    %p37 = scmp.eq.s32.totalorder %s25, 1
    %p38 = scmp.ne.s32.totalorder %s33, %s35
    %p39 = scmp.eq.s32.totalorder %s25, 0
    %p40 = por %p38, %p39
    %p41 = scmp.ne.s32.totalorder %s33, %s35
    %p42 = scmp.eq.s32.totalorder %s30, 1
    %p43 = por %p41, %p42
    %p44 = scmp.ne.s32.totalorder %s35, %s36
    %p45 = scmp.eq.s32.totalorder %s30, 0
    %p46 = por %p44, %p45
    %p47 = scmp.ne.s32.totalorder %s35, %s36
    %p48 = scmp.eq.s32.totalorder %s31, 1
    %p49 = por %p47, %p48
    %p51 = scmp.ne.s32.totalorder %s36, %s50
    %p52 = scmp.eq.s32.totalorder %s31, 0
    %p53 = por %p51, %p52
    %s55 = sadd.s32 %s54, 1
    %p58 = scmp.eq.s32.totalorder %s25, 1
    %p59 = scmp.ne.s32.totalorder %s54, %s56
    %p60 = scmp.eq.s32.totalorder %s25, 0
    %p61 = por %p59, %p60
    %p62 = scmp.ne.s32.totalorder %s54, %s56
    %p63 = scmp.eq.s32.totalorder %s30, 1
    %p64 = por %p62, %p63
    %p65 = scmp.ne.s32.totalorder %s56, %s57
    %p66 = scmp.eq.s32.totalorder %s30, 0
    %p67 = por %p65, %p66
    %p68 = scmp.ne.s32.totalorder %s56, %s57
    %p69 = scmp.eq.s32.totalorder %s31, 1
    %p70 = por %p68, %p69
    %p72 = scmp.ne.s32.totalorder %s57, %s71
    %p73 = scmp.eq.s32.totalorder %s31, 0
    %p74 = por %p72, %p73
    %s76 = sadd.s32 %s75, 1
    %p79 = scmp.eq.s32.totalorder %s25, 1
    %p80 = scmp.ne.s32.totalorder %s75, %s77
    %p81 = scmp.eq.s32.totalorder %s25, 0
    %p82 = por %p80, %p81
    %p83 = scmp.ne.s32.totalorder %s75, %s77
    %p84 = scmp.eq.s32.totalorder %s30, 1
    %p85 = por %p83, %p84
    %p86 = scmp.ne.s32.totalorder %s77, %s78
    %p87 = scmp.eq.s32.totalorder %s30, 0
    %p88 = por %p86, %p87
    %p89 = scmp.ne.s32.totalorder %s77, %s78
    %p90 = scmp.eq.s32.totalorder %s31, 1
    %p91 = por %p89, %p90
    %p93 = scmp.ne.s32.totalorder %s78, %s92
    %p94 = scmp.eq.s32.totalorder %s31, 0
    %p95 = por %p93, %p94
    %s97 = sadd.s32 %s96, 1
    %p100 = scmp.eq.s32.totalorder %s25, 1
    %p101 = scmp.ne.s32.totalorder %s96, %s98
    %p102 = scmp.eq.s32.totalorder %s25, 0
    %p103 = por %p101, %p102
    %p104 = scmp.ne.s32.totalorder %s96, %s98
    %p105 = scmp.eq.s32.totalorder %s30, 1
    %p106 = por %p104, %p105
    %p107 = scmp.ne.s32.totalorder %s98, %s99
    %p108 = scmp.eq.s32.totalorder %s30, 0
    %p109 = por %p107, %p108
    %p110 = scmp.ne.s32.totalorder %s98, %s99
    %p111 = scmp.eq.s32.totalorder %s31, 1
    %p112 = por %p110, %p111
    %p114 = scmp.ne.s32.totalorder %s99, %s113
    %p115 = scmp.eq.s32.totalorder %s31, 0
    %p116 = por %p114, %p115
    %s118 = sadd.s32 %s117, 1
    %p121 = scmp.eq.s32.totalorder %s25, 1
    %p122 = scmp.ne.s32.totalorder %s117, %s119
    %p123 = scmp.eq.s32.totalorder %s25, 0
    %p124 = por %p122, %p123
    %p125 = scmp.ne.s32.totalorder %s117, %s119
    %p126 = scmp.eq.s32.totalorder %s30, 1
    %p127 = por %p125, %p126
    %p128 = scmp.ne.s32.totalorder %s119, %s120
    %p129 = scmp.eq.s32.totalorder %s30, 0
    %p130 = por %p128, %p129
    %p131 = scmp.ne.s32.totalorder %s119, %s120
    %p132 = scmp.eq.s32.totalorder %s31, 1
    %p133 = por %p131, %p132
    %p135 = scmp.ne.s32.totalorder %s120, %s134
    %p136 = scmp.eq.s32.totalorder %s31, 0
    %p137 = por %p135, %p136
    %s139 = sadd.s32 %s138, 1
    %p142 = scmp.eq.s32.totalorder %s25, 1
    %p143 = scmp.ne.s32.totalorder %s138, %s140
    %p144 = scmp.eq.s32.totalorder %s25, 0
    %p145 = por %p143, %p144
    %p146 = scmp.ne.s32.totalorder %s138, %s140
    %p147 = scmp.eq.s32.totalorder %s30, 1
    %p148 = por %p146, %p147
    %p149 = scmp.ne.s32.totalorder %s140, %s141
    %p150 = scmp.eq.s32.totalorder %s30, 0
    %p151 = por %p149, %p150
    %p152 = scmp.ne.s32.totalorder %s140, %s141
    %p153 = scmp.eq.s32.totalorder %s31, 1
    %p154 = por %p152, %p153
    %p156 = scmp.ne.s32.totalorder %s141, %s155
    %p157 = scmp.eq.s32.totalorder %s31, 0
    %p158 = por %p156, %p157
    %s159 = ssub.s32 %s25, %s32
    %p160 = scmp.eq.s32.totalorder %s159, 0
    %s162 = sadd.s32 %s161, 1
    %s163 = scalar_select %p160, %s161, %s162
    %p166 = pneg %p160
    %p167 = scmp.eq.s32.totalorder %s25, 1
    %p168 = por %p166, %p167
    %p169 = scmp.ne.s32.totalorder %s161, %s164
    %p170 = scmp.eq.s32.totalorder %s25, 0
    %p171 = por %p169, %p170
    %p172 = scmp.ne.s32.totalorder %s161, %s164
    %p173 = scmp.eq.s32.totalorder %s30, 1
    %p174 = por %p172, %p173
    %p175 = scmp.ne.s32.totalorder %s164, %s165
    %p176 = scmp.eq.s32.totalorder %s30, 0
    %p177 = por %p175, %p176
    %p178 = scmp.ne.s32.totalorder %s164, %s165
    %p179 = scmp.eq.s32.totalorder %s31, 1
    %p180 = por %p178, %p179
    %p182 = scmp.ne.s32.totalorder %s165, %s181
    %p183 = scmp.eq.s32.totalorder %s31, 0
    %p184 = por %p182, %p183
    %p185 = scmp.le.s32.totalorder 1, %s25
    %p186 = scmp.lt.s32.totalorder %s25, 3
    %p187 = pnand %p185, %p186
    %p188 = pneg %p187
    // Predicated region
    $region9: #{collab_filter_net.1} parent=5 // pred_check
      _
    $region10: #{collab_filter_net.1} parent=5 // pred_check_branch
      %190 = sbr.rel (%p187) target = $region12
    $region11: #{collab_filter_net.1} parent=5 // pred_region
      %s191 = ssub.s32 %s25, 1
      // Predicated region
      $region13: #{collab_filter_net.1} parent=11 // pred_check
        %p192 = pneg %p46
      $region14: #{collab_filter_net.1} parent=11 // pred_check_branch
        %194 = sbr.rel (%p192) target = $region16
      $region15: #{collab_filter_net.1} parent=11 // pred_region
        _
      $region16: #{collab_filter_net.1} parent=11 // pred_fallthru
        _
      // Predicated region
      $region17: #{collab_filter_net.1} parent=11 // pred_check
        %p195 = pneg %p67
      $region18: #{collab_filter_net.1} parent=11 // pred_check_branch
        %197 = sbr.rel (%p195) target = $region20
      $region19: #{collab_filter_net.1} parent=11 // pred_region
        _
      $region20: #{collab_filter_net.1} parent=11 // pred_fallthru
        _
      // Predicated region
      $region21: #{collab_filter_net.1} parent=11 // pred_check
        %p198 = pneg %p88
      $region22: #{collab_filter_net.1} parent=11 // pred_check_branch
        %200 = sbr.rel (%p198) target = $region24
      $region23: #{collab_filter_net.1} parent=11 // pred_region
        _
      $region24: #{collab_filter_net.1} parent=11 // pred_fallthru
        _
      // Predicated region
      $region25: #{collab_filter_net.1} parent=11 // pred_check
        %p201 = pneg %p109
      $region26: #{collab_filter_net.1} parent=11 // pred_check_branch
        %203 = sbr.rel (%p201) target = $region28
      $region27: #{collab_filter_net.1} parent=11 // pred_region
        _
      $region28: #{collab_filter_net.1} parent=11 // pred_fallthru
        _
      // Predicated region
      $region29: #{collab_filter_net.1} parent=11 // pred_check
        %p204 = pneg %p130
      $region30: #{collab_filter_net.1} parent=11 // pred_check_branch
        %206 = sbr.rel (%p204) target = $region32
      $region31: #{collab_filter_net.1} parent=11 // pred_region
        _
      $region32: #{collab_filter_net.1} parent=11 // pred_fallthru
        _
      // Predicated region
      $region33: #{collab_filter_net.1} parent=11 // pred_check
        %p207 = pneg %p151
      $region34: #{collab_filter_net.1} parent=11 // pred_check_branch
        %209 = sbr.rel (%p207) target = $region36
      $region35: #{collab_filter_net.1} parent=11 // pred_region
        _
      $region36: #{collab_filter_net.1} parent=11 // pred_fallthru
        _
    $region12: #{collab_filter_net.1} parent=5 // pred_fallthru
      _
    %p210 = scmp.lt.s32.totalorder %s25, 2
    // Predicated region
    $region37: #{collab_filter_net.1} parent=5 // pred_check
      %p211 = pneg %p210
    $region38: #{collab_filter_net.1} parent=5 // pred_check_branch
      %213 = sbr.rel (%p211) target = $region40
    $region39: #{collab_filter_net.1} parent=5 // pred_region
      _
    $region40: #{collab_filter_net.1} parent=5 // pred_fallthru
      _
    %p214 = scmp.le.s32.totalorder 1, %s25
    %p215 = scmp.lt.s32.totalorder %s25, 3
    %p216 = pnand %p214, %p215
    %p217 = pneg %p216
    // Predicated region
    $region41: #{collab_filter_net.1} parent=5 // pred_check
      _
    $region42: #{collab_filter_net.1} parent=5 // pred_check_branch
      %219 = sbr.rel (%p216) target = $region44
    $region43: #{collab_filter_net.1} parent=5 // pred_region
      %s220 = ssub.s32 %s25, 1
      %p221 = pneg %p46
      %p222 = pneg %p43
      %p223 = pneg %p67
      %p224 = pneg %p64
      %p225 = pneg %p88
      %p226 = pneg %p85
      %p227 = pneg %p109
      %p228 = pneg %p106
      %p229 = pneg %p130
      %p230 = pneg %p127
      %p231 = pneg %p151
      %p232 = pneg %p148
      %p233 = pneg %p177
      %p234 = pneg %p174
      %p235 = scmp.lt.s32.totalorder %s30, 1
      %s236 = scalar_select %p235, %s30, 1
      %s237 = scalar_lea.vmem %s8, %s236
      %p238 = scmp.lt.s32.totalorder %s30, 1
      %s239 = scalar_select %p238, %s30, 1
      %s240 = scalar_lea.vmem %s8, %s239
      %s242 = smul.u32 %s30, 128
      %s243 = sld [smem:[#allocation4 + %s242]]
      %s244 = sld [smem:[#allocation5 + %s242]]
      %s245 = scalar_lea.vmem %s2, %s243
      %v246 = vld [vmem:[%s245] sm:$0x1]
      %247 = vst [vmem:[#allocation2] sm:$0x1] %v246
      %s248 = scalar_lea.vmem %s3, %s244
      %v249 = vld [vmem:[%s248] sm:$0x1]
      %250 = vst [vmem:[#allocation2 + $0x8] sm:$0x1] %v249
      %s251 = sadd.s32 %s242, 1
      %s252 = sld [smem:[#allocation4 + %s251]]
      %s253 = sld [smem:[#allocation5 + %s251]]
      %s254 = scalar_lea.vmem %s2, %s252
      %v255 = vld [vmem:[%s254] sm:$0x1]
      %256 = vst [vmem:[#allocation2 + $0x1] sm:$0x1] %v255
      %s257 = scalar_lea.vmem %s3, %s253
      %v258 = vld [vmem:[%s257] sm:$0x1]
      %259 = vst [vmem:[#allocation2 + $0x9] sm:$0x1] %v258
      %s260 = sadd.s32 %s242, 2
      %s261 = sld [smem:[#allocation4 + %s260]]
      %s262 = sld [smem:[#allocation5 + %s260]]
      %s263 = scalar_lea.vmem %s2, %s261
      %v264 = vld [vmem:[%s263] sm:$0x1]
      %265 = vst [vmem:[#allocation2 + $0x2] sm:$0x1] %v264
      %s266 = scalar_lea.vmem %s3, %s262
      %v267 = vld [vmem:[%s266] sm:$0x1]
      %268 = vst [vmem:[#allocation2 + $0xa] sm:$0x1] %v267
      %s269 = sadd.s32 %s242, 3
      %s270 = sld [smem:[#allocation4 + %s269]]
      %s271 = sld [smem:[#allocation5 + %s269]]
      %s272 = scalar_lea.vmem %s2, %s270
      %v273 = vld [vmem:[%s272] sm:$0x1]
      %274 = vst [vmem:[#allocation2 + $0x3] sm:$0x1] %v273
      %s275 = scalar_lea.vmem %s3, %s271
      %v276 = vld [vmem:[%s275] sm:$0x1]
      %277 = vst [vmem:[#allocation2 + $0xb] sm:$0x1] %v276
      %s278 = sadd.s32 %s242, 4
      %s279 = sld [smem:[#allocation4 + %s278]]
      %s280 = sld [smem:[#allocation5 + %s278]]
      %s281 = scalar_lea.vmem %s2, %s279
      %v282 = vld [vmem:[%s281] sm:$0x1]
      %283 = vst [vmem:[#allocation2 + $0x4] sm:$0x1] %v282
      %s284 = scalar_lea.vmem %s3, %s280
      %v285 = vld [vmem:[%s284] sm:$0x1]
      %286 = vst [vmem:[#allocation2 + $0xc] sm:$0x1] %v285
      %s287 = sadd.s32 %s242, 5
      %s288 = sld [smem:[#allocation4 + %s287]]
      %s289 = sld [smem:[#allocation5 + %s287]]
      %s290 = scalar_lea.vmem %s2, %s288
      %v291 = vld [vmem:[%s290] sm:$0x1]
      %292 = vst [vmem:[#allocation2 + $0x5] sm:$0x1] %v291
      %s293 = scalar_lea.vmem %s3, %s289
      %v294 = vld [vmem:[%s293] sm:$0x1]
      %295 = vst [vmem:[#allocation2 + $0xd] sm:$0x1] %v294
      %s296 = sadd.s32 %s242, 6
      %s297 = sld [smem:[#allocation4 + %s296]]
      %s298 = sld [smem:[#allocation5 + %s296]]
      %s299 = scalar_lea.vmem %s2, %s297
      %v300 = vld [vmem:[%s299] sm:$0x1]
      %301 = vst [vmem:[#allocation2 + $0x6] sm:$0x1] %v300
      %s302 = scalar_lea.vmem %s3, %s298
      %v303 = vld [vmem:[%s302] sm:$0x1]
      %304 = vst [vmem:[#allocation2 + $0xe] sm:$0x1] %v303
      %s305 = sadd.s32 %s242, 7
      %s306 = sld [smem:[#allocation4 + %s305]]
      %s307 = sld [smem:[#allocation5 + %s305]]
      %s308 = scalar_lea.vmem %s2, %s306
      %v309 = vld [vmem:[%s308] sm:$0x1]
      %310 = vst [vmem:[#allocation2 + $0x7] sm:$0x1] %v309
      %s311 = scalar_lea.vmem %s3, %s307
      %v312 = vld [vmem:[%s311] sm:$0x1]
      %313 = vst [vmem:[#allocation2 + $0xf] sm:$0x1] %v312
      %s314 = sadd.s32 %s242, 8
      %s315 = sld [smem:[#allocation4 + %s314]]
      %s316 = sld [smem:[#allocation5 + %s314]]
      %s317 = scalar_lea.vmem %s2, %s315
      %v318 = vld [vmem:[%s317] sm:$0x1]
      %319 = vst [vmem:[#allocation2 + $0x10] sm:$0x1] %v318
      %s320 = scalar_lea.vmem %s3, %s316
      %v321 = vld [vmem:[%s320] sm:$0x1]
      %322 = vst [vmem:[#allocation2 + $0x18] sm:$0x1] %v321
      %s323 = sadd.s32 %s242, 9
      %s324 = sld [smem:[#allocation4 + %s323]]
      %s325 = sld [smem:[#allocation5 + %s323]]
      %s326 = scalar_lea.vmem %s2, %s324
      %v327 = vld [vmem:[%s326] sm:$0x1]
      %328 = vst [vmem:[#allocation2 + $0x11] sm:$0x1] %v327
      %s329 = scalar_lea.vmem %s3, %s325
      %v330 = vld [vmem:[%s329] sm:$0x1]
      %331 = vst [vmem:[#allocation2 + $0x19] sm:$0x1] %v330
      %s332 = sadd.s32 %s242, 10
      %s333 = sld [smem:[#allocation4 + %s332]]
      %s334 = sld [smem:[#allocation5 + %s332]]
      %s335 = scalar_lea.vmem %s2, %s333
      %v336 = vld [vmem:[%s335] sm:$0x1]
      %337 = vst [vmem:[#allocation2 + $0x12] sm:$0x1] %v336
      %s338 = scalar_lea.vmem %s3, %s334
      %v339 = vld [vmem:[%s338] sm:$0x1]
      %340 = vst [vmem:[#allocation2 + $0x1a] sm:$0x1] %v339
      %s341 = sadd.s32 %s242, 11
      %s342 = sld [smem:[#allocation4 + %s341]]
      %s343 = sld [smem:[#allocation5 + %s341]]
      %s344 = scalar_lea.vmem %s2, %s342
      %v345 = vld [vmem:[%s344] sm:$0x1]
      %346 = vst [vmem:[#allocation2 + $0x13] sm:$0x1] %v345
      %s347 = scalar_lea.vmem %s3, %s343
      %v348 = vld [vmem:[%s347] sm:$0x1]
      %349 = vst [vmem:[#allocation2 + $0x1b] sm:$0x1] %v348
      %s350 = sadd.s32 %s242, 12
      %s351 = sld [smem:[#allocation4 + %s350]]
      %s352 = sld [smem:[#allocation5 + %s350]]
      %s353 = scalar_lea.vmem %s2, %s351
      %v354 = vld [vmem:[%s353] sm:$0x1]
      %355 = vst [vmem:[#allocation2 + $0x14] sm:$0x1] %v354
      %s356 = scalar_lea.vmem %s3, %s352
      %v357 = vld [vmem:[%s356] sm:$0x1]
      %358 = vst [vmem:[#allocation2 + $0x1c] sm:$0x1] %v357
      %s359 = sadd.s32 %s242, 13
      %s360 = sld [smem:[#allocation4 + %s359]]
      %s361 = sld [smem:[#allocation5 + %s359]]
      %s362 = scalar_lea.vmem %s2, %s360
      %v363 = vld [vmem:[%s362] sm:$0x1]
      %364 = vst [vmem:[#allocation2 + $0x15] sm:$0x1] %v363
      %s365 = scalar_lea.vmem %s3, %s361
      %v366 = vld [vmem:[%s365] sm:$0x1]
      %367 = vst [vmem:[#allocation2 + $0x1d] sm:$0x1] %v366
      %s368 = sadd.s32 %s242, 14
      %s369 = sld [smem:[#allocation4 + %s368]]
      %s370 = sld [smem:[#allocation5 + %s368]]
      %s371 = scalar_lea.vmem %s2, %s369
      %v372 = vld [vmem:[%s371] sm:$0x1]
      %373 = vst [vmem:[#allocation2 + $0x16] sm:$0x1] %v372
      %s374 = scalar_lea.vmem %s3, %s370
      %v375 = vld [vmem:[%s374] sm:$0x1]
      %376 = vst [vmem:[#allocation2 + $0x1e] sm:$0x1] %v375
      %s377 = sadd.s32 %s242, 15
      %s378 = sld [smem:[#allocation4 + %s377]]
      %s379 = sld [smem:[#allocation5 + %s377]]
      %s380 = scalar_lea.vmem %s2, %s378
      %v381 = vld [vmem:[%s380] sm:$0x1]
      %382 = vst [vmem:[#allocation2 + $0x17] sm:$0x1] %v381
      %s383 = scalar_lea.vmem %s3, %s379
      %v384 = vld [vmem:[%s383] sm:$0x1]
      %385 = vst [vmem:[#allocation2 + $0x1f] sm:$0x1] %v384
      %s386 = sadd.s32 %s242, 16
      %s387 = sld [smem:[#allocation4 + %s386]]
      %s388 = sld [smem:[#allocation5 + %s386]]
      %s389 = scalar_lea.vmem %s2, %s387
      %v390 = vld [vmem:[%s389] sm:$0x1]
      %391 = vst [vmem:[#allocation2 + $0x20] sm:$0x1] %v390
      %s392 = scalar_lea.vmem %s3, %s388
      %v393 = vld [vmem:[%s392] sm:$0x1]
      %394 = vst [vmem:[#allocation2 + $0x28] sm:$0x1] %v393
      %s395 = sadd.s32 %s242, 17
      %s396 = sld [smem:[#allocation4 + %s395]]
      %s397 = sld [smem:[#allocation5 + %s395]]
      %s398 = scalar_lea.vmem %s2, %s396
      %v399 = vld [vmem:[%s398] sm:$0x1]
      %400 = vst [vmem:[#allocation2 + $0x21] sm:$0x1] %v399
      %s401 = scalar_lea.vmem %s3, %s397
      %v402 = vld [vmem:[%s401] sm:$0x1]
      %403 = vst [vmem:[#allocation2 + $0x29] sm:$0x1] %v402
      %s404 = sadd.s32 %s242, 18
      %s405 = sld [smem:[#allocation4 + %s404]]
      %s406 = sld [smem:[#allocation5 + %s404]]
      %s407 = scalar_lea.vmem %s2, %s405
      %v408 = vld [vmem:[%s407] sm:$0x1]
      %409 = vst [vmem:[#allocation2 + $0x22] sm:$0x1] %v408
      %s410 = scalar_lea.vmem %s3, %s406
      %v411 = vld [vmem:[%s410] sm:$0x1]
      %412 = vst [vmem:[#allocation2 + $0x2a] sm:$0x1] %v411
      %s413 = sadd.s32 %s242, 19
      %s414 = sld [smem:[#allocation4 + %s413]]
      %s415 = sld [smem:[#allocation5 + %s413]]
      %s416 = scalar_lea.vmem %s2, %s414
      %v417 = vld [vmem:[%s416] sm:$0x1]
      %418 = vst [vmem:[#allocation2 + $0x23] sm:$0x1] %v417
      %s419 = scalar_lea.vmem %s3, %s415
      %v420 = vld [vmem:[%s419] sm:$0x1]
      %421 = vst [vmem:[#allocation2 + $0x2b] sm:$0x1] %v420
      %s422 = sadd.s32 %s242, 20
      %s423 = sld [smem:[#allocation4 + %s422]]
      %s424 = sld [smem:[#allocation5 + %s422]]
      %s425 = scalar_lea.vmem %s2, %s423
      %v426 = vld [vmem:[%s425] sm:$0x1]
      %427 = vst [vmem:[#allocation2 + $0x24] sm:$0x1] %v426
      %s428 = scalar_lea.vmem %s3, %s424
      %v429 = vld [vmem:[%s428] sm:$0x1]
      %430 = vst [vmem:[#allocation2 + $0x2c] sm:$0x1] %v429
      %s431 = sadd.s32 %s242, 21
      %s432 = sld [smem:[#allocation4 + %s431]]
      %s433 = sld [smem:[#allocation5 + %s431]]
      %s434 = scalar_lea.vmem %s2, %s432
      %v435 = vld [vmem:[%s434] sm:$0x1]
      %436 = vst [vmem:[#allocation2 + $0x25] sm:$0x1] %v435
      %s437 = scalar_lea.vmem %s3, %s433
      %v438 = vld [vmem:[%s437] sm:$0x1]
      %439 = vst [vmem:[#allocation2 + $0x2d] sm:$0x1] %v438
      %s440 = sadd.s32 %s242, 22
      %s441 = sld [smem:[#allocation4 + %s440]]
      %s442 = sld [smem:[#allocation5 + %s440]]
      %s443 = scalar_lea.vmem %s2, %s441
      %v444 = vld [vmem:[%s443] sm:$0x1]
      %445 = vst [vmem:[#allocation2 + $0x26] sm:$0x1] %v444
      %s446 = scalar_lea.vmem %s3, %s442
      %v447 = vld [vmem:[%s446] sm:$0x1]
      %448 = vst [vmem:[#allocation2 + $0x2e] sm:$0x1] %v447
      %s449 = sadd.s32 %s242, 23
      %s450 = sld [smem:[#allocation4 + %s449]]
      %s451 = sld [smem:[#allocation5 + %s449]]
      %s452 = scalar_lea.vmem %s2, %s450
      %v453 = vld [vmem:[%s452] sm:$0x1]
      %454 = vst [vmem:[#allocation2 + $0x27] sm:$0x1] %v453
      %s455 = scalar_lea.vmem %s3, %s451
      %v456 = vld [vmem:[%s455] sm:$0x1]
      %457 = vst [vmem:[#allocation2 + $0x2f] sm:$0x1] %v456
      %s458 = sadd.s32 %s242, 24
      %s459 = sld [smem:[#allocation4 + %s458]]
      %s460 = sld [smem:[#allocation5 + %s458]]
      %s461 = scalar_lea.vmem %s2, %s459
      %v462 = vld [vmem:[%s461] sm:$0x1]
      %463 = vst [vmem:[#allocation2 + $0x30] sm:$0x1] %v462
      %s464 = scalar_lea.vmem %s3, %s460
      %v465 = vld [vmem:[%s464] sm:$0x1]
      %466 = vst [vmem:[#allocation2 + $0x38] sm:$0x1] %v465
      %s467 = sadd.s32 %s242, 25
      %s468 = sld [smem:[#allocation4 + %s467]]
      %s469 = sld [smem:[#allocation5 + %s467]]
      %s470 = scalar_lea.vmem %s2, %s468
      %v471 = vld [vmem:[%s470] sm:$0x1]
      %472 = vst [vmem:[#allocation2 + $0x31] sm:$0x1] %v471
      %s473 = scalar_lea.vmem %s3, %s469
      %v474 = vld [vmem:[%s473] sm:$0x1]
      %475 = vst [vmem:[#allocation2 + $0x39] sm:$0x1] %v474
      %s476 = sadd.s32 %s242, 26
      %s477 = sld [smem:[#allocation4 + %s476]]
      %s478 = sld [smem:[#allocation5 + %s476]]
      %s479 = scalar_lea.vmem %s2, %s477
      %v480 = vld [vmem:[%s479] sm:$0x1]
      %481 = vst [vmem:[#allocation2 + $0x32] sm:$0x1] %v480
      %s482 = scalar_lea.vmem %s3, %s478
      %v483 = vld [vmem:[%s482] sm:$0x1]
      %484 = vst [vmem:[#allocation2 + $0x3a] sm:$0x1] %v483
      %s485 = sadd.s32 %s242, 27
      %s486 = sld [smem:[#allocation4 + %s485]]
      %s487 = sld [smem:[#allocation5 + %s485]]
      %s488 = scalar_lea.vmem %s2, %s486
      %v489 = vld [vmem:[%s488] sm:$0x1]
      %490 = vst [vmem:[#allocation2 + $0x33] sm:$0x1] %v489
      %s491 = scalar_lea.vmem %s3, %s487
      %v492 = vld [vmem:[%s491] sm:$0x1]
      %493 = vst [vmem:[#allocation2 + $0x3b] sm:$0x1] %v492
      %s494 = sadd.s32 %s242, 28
      %s495 = sld [smem:[#allocation4 + %s494]]
      %s496 = sld [smem:[#allocation5 + %s494]]
      %s497 = scalar_lea.vmem %s2, %s495
      %v498 = vld [vmem:[%s497] sm:$0x1]
      %499 = vst [vmem:[#allocation2 + $0x34] sm:$0x1] %v498
      %s500 = scalar_lea.vmem %s3, %s496
      %v501 = vld [vmem:[%s500] sm:$0x1]
      %502 = vst [vmem:[#allocation2 + $0x3c] sm:$0x1] %v501
      %s503 = sadd.s32 %s242, 29
      %s504 = sld [smem:[#allocation4 + %s503]]
      %s505 = sld [smem:[#allocation5 + %s503]]
      %s506 = scalar_lea.vmem %s2, %s504
      %v507 = vld [vmem:[%s506] sm:$0x1]
      %508 = vst [vmem:[#allocation2 + $0x35] sm:$0x1] %v507
      %s509 = scalar_lea.vmem %s3, %s505
      %v510 = vld [vmem:[%s509] sm:$0x1]
      %511 = vst [vmem:[#allocation2 + $0x3d] sm:$0x1] %v510
      %s512 = sadd.s32 %s242, 30
      %s513 = sld [smem:[#allocation4 + %s512]]
      %s514 = sld [smem:[#allocation5 + %s512]]
      %s515 = scalar_lea.vmem %s2, %s513
      %v516 = vld [vmem:[%s515] sm:$0x1]
      %517 = vst [vmem:[#allocation2 + $0x36] sm:$0x1] %v516
      %s518 = scalar_lea.vmem %s3, %s514
      %v519 = vld [vmem:[%s518] sm:$0x1]
      %520 = vst [vmem:[#allocation2 + $0x3e] sm:$0x1] %v519
      %s521 = sadd.s32 %s242, 31
      %s522 = sld [smem:[#allocation4 + %s521]]
      %s523 = sld [smem:[#allocation5 + %s521]]
      %s524 = scalar_lea.vmem %s2, %s522
      %v525 = vld [vmem:[%s524] sm:$0x1]
      %526 = vst [vmem:[#allocation2 + $0x37] sm:$0x1] %v525
      %s527 = scalar_lea.vmem %s3, %s523
      %v528 = vld [vmem:[%s527] sm:$0x1]
      %529 = vst [vmem:[#allocation2 + $0x3f] sm:$0x1] %v528
      %s530 = sadd.s32 %s242, 32
      %s531 = sld [smem:[#allocation4 + %s530]]
      %s532 = sld [smem:[#allocation5 + %s530]]
      %s533 = scalar_lea.vmem %s2, %s531
      %v534 = vld [vmem:[%s533] sm:$0x1]
      %535 = vst [vmem:[#allocation2 + $0x40] sm:$0x1] %v534
      %s536 = scalar_lea.vmem %s3, %s532
      %v537 = vld [vmem:[%s536] sm:$0x1]
      %538 = vst [vmem:[#allocation2 + $0x48] sm:$0x1] %v537
      %s539 = sadd.s32 %s242, 33
      %s540 = sld [smem:[#allocation4 + %s539]]
      %s541 = sld [smem:[#allocation5 + %s539]]
      %s542 = scalar_lea.vmem %s2, %s540
      %v543 = vld [vmem:[%s542] sm:$0x1]
      %544 = vst [vmem:[#allocation2 + $0x41] sm:$0x1] %v543
      %s545 = scalar_lea.vmem %s3, %s541
      %v546 = vld [vmem:[%s545] sm:$0x1]
      %547 = vst [vmem:[#allocation2 + $0x49] sm:$0x1] %v546
      %s548 = sadd.s32 %s242, 34
      %s549 = sld [smem:[#allocation4 + %s548]]
      %s550 = sld [smem:[#allocation5 + %s548]]
      %s551 = scalar_lea.vmem %s2, %s549
      %v552 = vld [vmem:[%s551] sm:$0x1]
      %553 = vst [vmem:[#allocation2 + $0x42] sm:$0x1] %v552
      %s554 = scalar_lea.vmem %s3, %s550
      %v555 = vld [vmem:[%s554] sm:$0x1]
      %556 = vst [vmem:[#allocation2 + $0x4a] sm:$0x1] %v555
      %s557 = sadd.s32 %s242, 35
      %s558 = sld [smem:[#allocation4 + %s557]]
      %s559 = sld [smem:[#allocation5 + %s557]]
      %s560 = scalar_lea.vmem %s2, %s558
      %v561 = vld [vmem:[%s560] sm:$0x1]
      %562 = vst [vmem:[#allocation2 + $0x43] sm:$0x1] %v561
      %s563 = scalar_lea.vmem %s3, %s559
      %v564 = vld [vmem:[%s563] sm:$0x1]
      %565 = vst [vmem:[#allocation2 + $0x4b] sm:$0x1] %v564
      %s566 = sadd.s32 %s242, 36
      %s567 = sld [smem:[#allocation4 + %s566]]
      %s568 = sld [smem:[#allocation5 + %s566]]
      %s569 = scalar_lea.vmem %s2, %s567
      %v570 = vld [vmem:[%s569] sm:$0x1]
      %571 = vst [vmem:[#allocation2 + $0x44] sm:$0x1] %v570
      %s572 = scalar_lea.vmem %s3, %s568
      %v573 = vld [vmem:[%s572] sm:$0x1]
      %574 = vst [vmem:[#allocation2 + $0x4c] sm:$0x1] %v573
      %s575 = sadd.s32 %s242, 37
      %s576 = sld [smem:[#allocation4 + %s575]]
      %s577 = sld [smem:[#allocation5 + %s575]]
      %s578 = scalar_lea.vmem %s2, %s576
      %v579 = vld [vmem:[%s578] sm:$0x1]
      %580 = vst [vmem:[#allocation2 + $0x45] sm:$0x1] %v579
      %s581 = scalar_lea.vmem %s3, %s577
      %v582 = vld [vmem:[%s581] sm:$0x1]
      %583 = vst [vmem:[#allocation2 + $0x4d] sm:$0x1] %v582
      %s584 = sadd.s32 %s242, 38
      %s585 = sld [smem:[#allocation4 + %s584]]
      %s586 = sld [smem:[#allocation5 + %s584]]
      %s587 = scalar_lea.vmem %s2, %s585
      %v588 = vld [vmem:[%s587] sm:$0x1]
      %589 = vst [vmem:[#allocation2 + $0x46] sm:$0x1] %v588
      %s590 = scalar_lea.vmem %s3, %s586
      %v591 = vld [vmem:[%s590] sm:$0x1]
      %592 = vst [vmem:[#allocation2 + $0x4e] sm:$0x1] %v591
      %s593 = sadd.s32 %s242, 39
      %s594 = sld [smem:[#allocation4 + %s593]]
      %s595 = sld [smem:[#allocation5 + %s593]]
      %s596 = scalar_lea.vmem %s2, %s594
      %v597 = vld [vmem:[%s596] sm:$0x1]
      %598 = vst [vmem:[#allocation2 + $0x47] sm:$0x1] %v597
      %s599 = scalar_lea.vmem %s3, %s595
      %v600 = vld [vmem:[%s599] sm:$0x1]
      %601 = vst [vmem:[#allocation2 + $0x4f] sm:$0x1] %v600
      %s602 = sadd.s32 %s242, 40
      %s603 = sld [smem:[#allocation4 + %s602]]
      %s604 = sld [smem:[#allocation5 + %s602]]
      %s605 = scalar_lea.vmem %s2, %s603
      %v606 = vld [vmem:[%s605] sm:$0x1]
      %607 = vst [vmem:[#allocation2 + $0x50] sm:$0x1] %v606
      %s608 = scalar_lea.vmem %s3, %s604
      %v609 = vld [vmem:[%s608] sm:$0x1]
      %610 = vst [vmem:[#allocation2 + $0x58] sm:$0x1] %v609
      %s611 = sadd.s32 %s242, 41
      %s612 = sld [smem:[#allocation4 + %s611]]
      %s613 = sld [smem:[#allocation5 + %s611]]
      %s614 = scalar_lea.vmem %s2, %s612
      %v615 = vld [vmem:[%s614] sm:$0x1]
      %616 = vst [vmem:[#allocation2 + $0x51] sm:$0x1] %v615
      %s617 = scalar_lea.vmem %s3, %s613
      %v618 = vld [vmem:[%s617] sm:$0x1]
      %619 = vst [vmem:[#allocation2 + $0x59] sm:$0x1] %v618
      %s620 = sadd.s32 %s242, 42
      %s621 = sld [smem:[#allocation4 + %s620]]
      %s622 = sld [smem:[#allocation5 + %s620]]
      %s623 = scalar_lea.vmem %s2, %s621
      %v624 = vld [vmem:[%s623] sm:$0x1]
      %625 = vst [vmem:[#allocation2 + $0x52] sm:$0x1] %v624
      %s626 = scalar_lea.vmem %s3, %s622
      %v627 = vld [vmem:[%s626] sm:$0x1]
      %628 = vst [vmem:[#allocation2 + $0x5a] sm:$0x1] %v627
      %s629 = sadd.s32 %s242, 43
      %s630 = sld [smem:[#allocation4 + %s629]]
      %s631 = sld [smem:[#allocation5 + %s629]]
      %s632 = scalar_lea.vmem %s2, %s630
      %v633 = vld [vmem:[%s632] sm:$0x1]
      %634 = vst [vmem:[#allocation2 + $0x53] sm:$0x1] %v633
      %s635 = scalar_lea.vmem %s3, %s631
      %v636 = vld [vmem:[%s635] sm:$0x1]
      %637 = vst [vmem:[#allocation2 + $0x5b] sm:$0x1] %v636
      %s638 = sadd.s32 %s242, 44
      %s639 = sld [smem:[#allocation4 + %s638]]
      %s640 = sld [smem:[#allocation5 + %s638]]
      %s641 = scalar_lea.vmem %s2, %s639
      %v642 = vld [vmem:[%s641] sm:$0x1]
      %643 = vst [vmem:[#allocation2 + $0x54] sm:$0x1] %v642
      %s644 = scalar_lea.vmem %s3, %s640
      %v645 = vld [vmem:[%s644] sm:$0x1]
      %646 = vst [vmem:[#allocation2 + $0x5c] sm:$0x1] %v645
      %s647 = sadd.s32 %s242, 45
      %s648 = sld [smem:[#allocation4 + %s647]]
      %s649 = sld [smem:[#allocation5 + %s647]]
      %s650 = scalar_lea.vmem %s2, %s648
      %v651 = vld [vmem:[%s650] sm:$0x1]
      %652 = vst [vmem:[#allocation2 + $0x55] sm:$0x1] %v651
      %s653 = scalar_lea.vmem %s3, %s649
      %v654 = vld [vmem:[%s653] sm:$0x1]
      %655 = vst [vmem:[#allocation2 + $0x5d] sm:$0x1] %v654
      %s656 = sadd.s32 %s242, 46
      %s657 = sld [smem:[#allocation4 + %s656]]
      %s658 = sld [smem:[#allocation5 + %s656]]
      %s659 = scalar_lea.vmem %s2, %s657
      %v660 = vld [vmem:[%s659] sm:$0x1]
      %661 = vst [vmem:[#allocation2 + $0x56] sm:$0x1] %v660
      %s662 = scalar_lea.vmem %s3, %s658
      %v663 = vld [vmem:[%s662] sm:$0x1]
      %664 = vst [vmem:[#allocation2 + $0x5e] sm:$0x1] %v663
      %s665 = sadd.s32 %s242, 47
      %s666 = sld [smem:[#allocation4 + %s665]]
      %s667 = sld [smem:[#allocation5 + %s665]]
      %s668 = scalar_lea.vmem %s2, %s666
      %v669 = vld [vmem:[%s668] sm:$0x1]
      %670 = vst [vmem:[#allocation2 + $0x57] sm:$0x1] %v669
      %s671 = scalar_lea.vmem %s3, %s667
      %v672 = vld [vmem:[%s671] sm:$0x1]
      %673 = vst [vmem:[#allocation2 + $0x5f] sm:$0x1] %v672
      %s674 = sadd.s32 %s242, 48
      %s675 = sld [smem:[#allocation4 + %s674]]
      %s676 = sld [smem:[#allocation5 + %s674]]
      %s677 = scalar_lea.vmem %s2, %s675
      %v678 = vld [vmem:[%s677] sm:$0x1]
      %679 = vst [vmem:[#allocation2 + $0x60] sm:$0x1] %v678
      %s680 = scalar_lea.vmem %s3, %s676
      %v681 = vld [vmem:[%s680] sm:$0x1]
      %682 = vst [vmem:[#allocation2 + $0x68] sm:$0x1] %v681
      %s683 = sadd.s32 %s242, 49
      %s684 = sld [smem:[#allocation4 + %s683]]
      %s685 = sld [smem:[#allocation5 + %s683]]
      %s686 = scalar_lea.vmem %s2, %s684
      %v687 = vld [vmem:[%s686] sm:$0x1]
      %688 = vst [vmem:[#allocation2 + $0x61] sm:$0x1] %v687
      %s689 = scalar_lea.vmem %s3, %s685
      %v690 = vld [vmem:[%s689] sm:$0x1]
      %691 = vst [vmem:[#allocation2 + $0x69] sm:$0x1] %v690
      %s692 = sadd.s32 %s242, 50
      %s693 = sld [smem:[#allocation4 + %s692]]
      %s694 = sld [smem:[#allocation5 + %s692]]
      %s695 = scalar_lea.vmem %s2, %s693
      %v696 = vld [vmem:[%s695] sm:$0x1]
      %697 = vst [vmem:[#allocation2 + $0x62] sm:$0x1] %v696
      %s698 = scalar_lea.vmem %s3, %s694
      %v699 = vld [vmem:[%s698] sm:$0x1]
      %700 = vst [vmem:[#allocation2 + $0x6a] sm:$0x1] %v699
      %s701 = sadd.s32 %s242, 51
      %s702 = sld [smem:[#allocation4 + %s701]]
      %s703 = sld [smem:[#allocation5 + %s701]]
      %s704 = scalar_lea.vmem %s2, %s702
      %v705 = vld [vmem:[%s704] sm:$0x1]
      %706 = vst [vmem:[#allocation2 + $0x63] sm:$0x1] %v705
      %s707 = scalar_lea.vmem %s3, %s703
      %v708 = vld [vmem:[%s707] sm:$0x1]
      %709 = vst [vmem:[#allocation2 + $0x6b] sm:$0x1] %v708
      %s710 = sadd.s32 %s242, 52
      %s711 = sld [smem:[#allocation4 + %s710]]
      %s712 = sld [smem:[#allocation5 + %s710]]
      %s713 = scalar_lea.vmem %s2, %s711
      %v714 = vld [vmem:[%s713] sm:$0x1]
      %715 = vst [vmem:[#allocation2 + $0x64] sm:$0x1] %v714
      %s716 = scalar_lea.vmem %s3, %s712
      %v717 = vld [vmem:[%s716] sm:$0x1]
      %718 = vst [vmem:[#allocation2 + $0x6c] sm:$0x1] %v717
      %s719 = sadd.s32 %s242, 53
      %s720 = sld [smem:[#allocation4 + %s719]]
      %s721 = sld [smem:[#allocation5 + %s719]]
      %s722 = scalar_lea.vmem %s2, %s720
      %v723 = vld [vmem:[%s722] sm:$0x1]
      %724 = vst [vmem:[#allocation2 + $0x65] sm:$0x1] %v723
      %s725 = scalar_lea.vmem %s3, %s721
      %v726 = vld [vmem:[%s725] sm:$0x1]
      %727 = vst [vmem:[#allocation2 + $0x6d] sm:$0x1] %v726
      %s728 = sadd.s32 %s242, 54
      %s729 = sld [smem:[#allocation4 + %s728]]
      %s730 = sld [smem:[#allocation5 + %s728]]
      %s731 = scalar_lea.vmem %s2, %s729
      %v732 = vld [vmem:[%s731] sm:$0x1]
      %733 = vst [vmem:[#allocation2 + $0x66] sm:$0x1] %v732
      %s734 = scalar_lea.vmem %s3, %s730
      %v735 = vld [vmem:[%s734] sm:$0x1]
      %736 = vst [vmem:[#allocation2 + $0x6e] sm:$0x1] %v735
      %s737 = sadd.s32 %s242, 55
      %s738 = sld [smem:[#allocation4 + %s737]]
      %s739 = sld [smem:[#allocation5 + %s737]]
      %s740 = scalar_lea.vmem %s2, %s738
      %v741 = vld [vmem:[%s740] sm:$0x1]
      %742 = vst [vmem:[#allocation2 + $0x67] sm:$0x1] %v741
      %s743 = scalar_lea.vmem %s3, %s739
      %v744 = vld [vmem:[%s743] sm:$0x1]
      %745 = vst [vmem:[#allocation2 + $0x6f] sm:$0x1] %v744
      %s746 = sadd.s32 %s242, 56
      %s747 = sld [smem:[#allocation4 + %s746]]
      %s748 = sld [smem:[#allocation5 + %s746]]
      %s749 = scalar_lea.vmem %s2, %s747
      %v750 = vld [vmem:[%s749] sm:$0x1]
      %751 = vst [vmem:[#allocation2 + $0x70] sm:$0x1] %v750
      %s752 = scalar_lea.vmem %s3, %s748
      %v753 = vld [vmem:[%s752] sm:$0x1]
      %754 = vst [vmem:[#allocation2 + $0x78] sm:$0x1] %v753
      %s755 = sadd.s32 %s242, 57
      %s756 = sld [smem:[#allocation4 + %s755]]
      %s757 = sld [smem:[#allocation5 + %s755]]
      %s758 = scalar_lea.vmem %s2, %s756
      %v759 = vld [vmem:[%s758] sm:$0x1]
      %760 = vst [vmem:[#allocation2 + $0x71] sm:$0x1] %v759
      %s761 = scalar_lea.vmem %s3, %s757
      %v762 = vld [vmem:[%s761] sm:$0x1]
      %763 = vst [vmem:[#allocation2 + $0x79] sm:$0x1] %v762
      %s764 = sadd.s32 %s242, 58
      %s765 = sld [smem:[#allocation4 + %s764]]
      %s766 = sld [smem:[#allocation5 + %s764]]
      %s767 = scalar_lea.vmem %s2, %s765
      %v768 = vld [vmem:[%s767] sm:$0x1]
      %769 = vst [vmem:[#allocation2 + $0x72] sm:$0x1] %v768
      %s770 = scalar_lea.vmem %s3, %s766
      %v771 = vld [vmem:[%s770] sm:$0x1]
      %772 = vst [vmem:[#allocation2 + $0x7a] sm:$0x1] %v771
      %s773 = sadd.s32 %s242, 59
      %s774 = sld [smem:[#allocation4 + %s773]]
      %s775 = sld [smem:[#allocation5 + %s773]]
      %s776 = scalar_lea.vmem %s2, %s774
      %v777 = vld [vmem:[%s776] sm:$0x1]
      %778 = vst [vmem:[#allocation2 + $0x73] sm:$0x1] %v777
      %s779 = scalar_lea.vmem %s3, %s775
      %v780 = vld [vmem:[%s779] sm:$0x1]
      %781 = vst [vmem:[#allocation2 + $0x7b] sm:$0x1] %v780
      %s782 = sadd.s32 %s242, 60
      %s783 = sld [smem:[#allocation4 + %s782]]
      %s784 = sld [smem:[#allocation5 + %s782]]
      %s785 = scalar_lea.vmem %s2, %s783
      %v786 = vld [vmem:[%s785] sm:$0x1]
      %787 = vst [vmem:[#allocation2 + $0x74] sm:$0x1] %v786
      %s788 = scalar_lea.vmem %s3, %s784
      %v789 = vld [vmem:[%s788] sm:$0x1]
      %790 = vst [vmem:[#allocation2 + $0x7c] sm:$0x1] %v789
      %s791 = sadd.s32 %s242, 61
      %s792 = sld [smem:[#allocation4 + %s791]]
      %s793 = sld [smem:[#allocation5 + %s791]]
      %s794 = scalar_lea.vmem %s2, %s792
      %v795 = vld [vmem:[%s794] sm:$0x1]
      %796 = vst [vmem:[#allocation2 + $0x75] sm:$0x1] %v795
      %s797 = scalar_lea.vmem %s3, %s793
      %v798 = vld [vmem:[%s797] sm:$0x1]
      %799 = vst [vmem:[#allocation2 + $0x7d] sm:$0x1] %v798
      %s800 = sadd.s32 %s242, 62
      %s801 = sld [smem:[#allocation4 + %s800]]
      %s802 = sld [smem:[#allocation5 + %s800]]
      %s803 = scalar_lea.vmem %s2, %s801
      %v804 = vld [vmem:[%s803] sm:$0x1]
      %805 = vst [vmem:[#allocation2 + $0x76] sm:$0x1] %v804
      %s806 = scalar_lea.vmem %s3, %s802
      %v807 = vld [vmem:[%s806] sm:$0x1]
      %808 = vst [vmem:[#allocation2 + $0x7e] sm:$0x1] %v807
      %s809 = sadd.s32 %s242, 63
      %s810 = sld [smem:[#allocation4 + %s809]]
      %s811 = sld [smem:[#allocation5 + %s809]]
      %s812 = scalar_lea.vmem %s2, %s810
      %v813 = vld [vmem:[%s812] sm:$0x1]
      %814 = vst [vmem:[#allocation2 + $0x77] sm:$0x1] %v813
      %s815 = scalar_lea.vmem %s3, %s811
      %v816 = vld [vmem:[%s815] sm:$0x1]
      %817 = vst [vmem:[#allocation2 + $0x7f] sm:$0x1] %v816
      %s818 = sadd.s32 %s242, 64
      %s819 = sld [smem:[#allocation4 + %s818]]
      %s820 = sld [smem:[#allocation5 + %s818]]
      %s821 = scalar_lea.vmem %s2, %s819
      %v822 = vld [vmem:[%s821] sm:$0x1]
      %823 = vst [vmem:[#allocation2 + $0x80] sm:$0x1] %v822
      %s824 = scalar_lea.vmem %s3, %s820
      %v825 = vld [vmem:[%s824] sm:$0x1]
      %826 = vst [vmem:[#allocation2 + $0x88] sm:$0x1] %v825
      %s827 = sadd.s32 %s242, 65
      %s828 = sld [smem:[#allocation4 + %s827]]
      %s829 = sld [smem:[#allocation5 + %s827]]
      %s830 = scalar_lea.vmem %s2, %s828
      %v831 = vld [vmem:[%s830] sm:$0x1]
      %832 = vst [vmem:[#allocation2 + $0x81] sm:$0x1] %v831
      %s833 = scalar_lea.vmem %s3, %s829
      %v834 = vld [vmem:[%s833] sm:$0x1]
      %835 = vst [vmem:[#allocation2 + $0x89] sm:$0x1] %v834
      %s836 = sadd.s32 %s242, 66
      %s837 = sld [smem:[#allocation4 + %s836]]
      %s838 = sld [smem:[#allocation5 + %s836]]
      %s839 = scalar_lea.vmem %s2, %s837
      %v840 = vld [vmem:[%s839] sm:$0x1]
      %841 = vst [vmem:[#allocation2 + $0x82] sm:$0x1] %v840
      %s842 = scalar_lea.vmem %s3, %s838
      %v843 = vld [vmem:[%s842] sm:$0x1]
      %844 = vst [vmem:[#allocation2 + $0x8a] sm:$0x1] %v843
      %s845 = sadd.s32 %s242, 67
      %s846 = sld [smem:[#allocation4 + %s845]]
      %s847 = sld [smem:[#allocation5 + %s845]]
      %s848 = scalar_lea.vmem %s2, %s846
      %v849 = vld [vmem:[%s848] sm:$0x1]
      %850 = vst [vmem:[#allocation2 + $0x83] sm:$0x1] %v849
      %s851 = scalar_lea.vmem %s3, %s847
      %v852 = vld [vmem:[%s851] sm:$0x1]
      %853 = vst [vmem:[#allocation2 + $0x8b] sm:$0x1] %v852
      %s854 = sadd.s32 %s242, 68
      %s855 = sld [smem:[#allocation4 + %s854]]
      %s856 = sld [smem:[#allocation5 + %s854]]
      %s857 = scalar_lea.vmem %s2, %s855
      %v858 = vld [vmem:[%s857] sm:$0x1]
      %859 = vst [vmem:[#allocation2 + $0x84] sm:$0x1] %v858
      %s860 = scalar_lea.vmem %s3, %s856
      %v861 = vld [vmem:[%s860] sm:$0x1]
      %862 = vst [vmem:[#allocation2 + $0x8c] sm:$0x1] %v861
      %s863 = sadd.s32 %s242, 69
      %s864 = sld [smem:[#allocation4 + %s863]]
      %s865 = sld [smem:[#allocation5 + %s863]]
      %s866 = scalar_lea.vmem %s2, %s864
      %v867 = vld [vmem:[%s866] sm:$0x1]
      %868 = vst [vmem:[#allocation2 + $0x85] sm:$0x1] %v867
      %s869 = scalar_lea.vmem %s3, %s865
      %v870 = vld [vmem:[%s869] sm:$0x1]
      %871 = vst [vmem:[#allocation2 + $0x8d] sm:$0x1] %v870
      %s872 = sadd.s32 %s242, 70
      %s873 = sld [smem:[#allocation4 + %s872]]
      %s874 = sld [smem:[#allocation5 + %s872]]
      %s875 = scalar_lea.vmem %s2, %s873
      %v876 = vld [vmem:[%s875] sm:$0x1]
      %877 = vst [vmem:[#allocation2 + $0x86] sm:$0x1] %v876
      %s878 = scalar_lea.vmem %s3, %s874
      %v879 = vld [vmem:[%s878] sm:$0x1]
      %880 = vst [vmem:[#allocation2 + $0x8e] sm:$0x1] %v879
      %s881 = sadd.s32 %s242, 71
      %s882 = sld [smem:[#allocation4 + %s881]]
      %s883 = sld [smem:[#allocation5 + %s881]]
      %s884 = scalar_lea.vmem %s2, %s882
      %v885 = vld [vmem:[%s884] sm:$0x1]
      %886 = vst [vmem:[#allocation2 + $0x87] sm:$0x1] %v885
      %s887 = scalar_lea.vmem %s3, %s883
      %v888 = vld [vmem:[%s887] sm:$0x1]
      %889 = vst [vmem:[#allocation2 + $0x8f] sm:$0x1] %v888
      %s890 = sadd.s32 %s242, 72
      %s891 = sld [smem:[#allocation4 + %s890]]
      %s892 = sld [smem:[#allocation5 + %s890]]
      %s893 = scalar_lea.vmem %s2, %s891
      %v894 = vld [vmem:[%s893] sm:$0x1]
      %895 = vst [vmem:[#allocation2 + $0x90] sm:$0x1] %v894
      %s896 = scalar_lea.vmem %s3, %s892
      %v897 = vld [vmem:[%s896] sm:$0x1]
      %898 = vst [vmem:[#allocation2 + $0x98] sm:$0x1] %v897
      %s899 = sadd.s32 %s242, 73
      %s900 = sld [smem:[#allocation4 + %s899]]
      %s901 = sld [smem:[#allocation5 + %s899]]
      %s902 = scalar_lea.vmem %s2, %s900
      %v903 = vld [vmem:[%s902] sm:$0x1]
      %904 = vst [vmem:[#allocation2 + $0x91] sm:$0x1] %v903
      %s905 = scalar_lea.vmem %s3, %s901
      %v906 = vld [vmem:[%s905] sm:$0x1]
      %907 = vst [vmem:[#allocation2 + $0x99] sm:$0x1] %v906
      %s908 = sadd.s32 %s242, 74
      %s909 = sld [smem:[#allocation4 + %s908]]
      %s910 = sld [smem:[#allocation5 + %s908]]
      %s911 = scalar_lea.vmem %s2, %s909
      %v912 = vld [vmem:[%s911] sm:$0x1]
      %913 = vst [vmem:[#allocation2 + $0x92] sm:$0x1] %v912
      %s914 = scalar_lea.vmem %s3, %s910
      %v915 = vld [vmem:[%s914] sm:$0x1]
      %916 = vst [vmem:[#allocation2 + $0x9a] sm:$0x1] %v915
      %s917 = sadd.s32 %s242, 75
      %s918 = sld [smem:[#allocation4 + %s917]]
      %s919 = sld [smem:[#allocation5 + %s917]]
      %s920 = scalar_lea.vmem %s2, %s918
      %v921 = vld [vmem:[%s920] sm:$0x1]
      %922 = vst [vmem:[#allocation2 + $0x93] sm:$0x1] %v921
      %s923 = scalar_lea.vmem %s3, %s919
      %v924 = vld [vmem:[%s923] sm:$0x1]
      %925 = vst [vmem:[#allocation2 + $0x9b] sm:$0x1] %v924
      %s926 = sadd.s32 %s242, 76
      %s927 = sld [smem:[#allocation4 + %s926]]
      %s928 = sld [smem:[#allocation5 + %s926]]
      %s929 = scalar_lea.vmem %s2, %s927
      %v930 = vld [vmem:[%s929] sm:$0x1]
      %931 = vst [vmem:[#allocation2 + $0x94] sm:$0x1] %v930
      %s932 = scalar_lea.vmem %s3, %s928
      %v933 = vld [vmem:[%s932] sm:$0x1]
      %934 = vst [vmem:[#allocation2 + $0x9c] sm:$0x1] %v933
      %s935 = sadd.s32 %s242, 77
      %s936 = sld [smem:[#allocation4 + %s935]]
      %s937 = sld [smem:[#allocation5 + %s935]]
      %s938 = scalar_lea.vmem %s2, %s936
      %v939 = vld [vmem:[%s938] sm:$0x1]
      %940 = vst [vmem:[#allocation2 + $0x95] sm:$0x1] %v939
      %s941 = scalar_lea.vmem %s3, %s937
      %v942 = vld [vmem:[%s941] sm:$0x1]
      %943 = vst [vmem:[#allocation2 + $0x9d] sm:$0x1] %v942
      %s944 = sadd.s32 %s242, 78
      %s945 = sld [smem:[#allocation4 + %s944]]
      %s946 = sld [smem:[#allocation5 + %s944]]
      %s947 = scalar_lea.vmem %s2, %s945
      %v948 = vld [vmem:[%s947] sm:$0x1]
      %949 = vst [vmem:[#allocation2 + $0x96] sm:$0x1] %v948
      %s950 = scalar_lea.vmem %s3, %s946
      %v951 = vld [vmem:[%s950] sm:$0x1]
      %952 = vst [vmem:[#allocation2 + $0x9e] sm:$0x1] %v951
      %s953 = sadd.s32 %s242, 79
      %s954 = sld [smem:[#allocation4 + %s953]]
      %s955 = sld [smem:[#allocation5 + %s953]]
      %s956 = scalar_lea.vmem %s2, %s954
      %v957 = vld [vmem:[%s956] sm:$0x1]
      %958 = vst [vmem:[#allocation2 + $0x97] sm:$0x1] %v957
      %s959 = scalar_lea.vmem %s3, %s955
      %v960 = vld [vmem:[%s959] sm:$0x1]
      %961 = vst [vmem:[#allocation2 + $0x9f] sm:$0x1] %v960
      %s962 = sadd.s32 %s242, 80
      %s963 = sld [smem:[#allocation4 + %s962]]
      %s964 = sld [smem:[#allocation5 + %s962]]
      %s965 = scalar_lea.vmem %s2, %s963
      %v966 = vld [vmem:[%s965] sm:$0x1]
      %967 = vst [vmem:[#allocation2 + $0xa0] sm:$0x1] %v966
      %s968 = scalar_lea.vmem %s3, %s964
      %v969 = vld [vmem:[%s968] sm:$0x1]
      %970 = vst [vmem:[#allocation2 + $0xa8] sm:$0x1] %v969
      %s971 = sadd.s32 %s242, 81
      %s972 = sld [smem:[#allocation4 + %s971]]
      %s973 = sld [smem:[#allocation5 + %s971]]
      %s974 = scalar_lea.vmem %s2, %s972
      %v975 = vld [vmem:[%s974] sm:$0x1]
      %976 = vst [vmem:[#allocation2 + $0xa1] sm:$0x1] %v975
      %s977 = scalar_lea.vmem %s3, %s973
      %v978 = vld [vmem:[%s977] sm:$0x1]
      %979 = vst [vmem:[#allocation2 + $0xa9] sm:$0x1] %v978
      %s980 = sadd.s32 %s242, 82
      %s981 = sld [smem:[#allocation4 + %s980]]
      %s982 = sld [smem:[#allocation5 + %s980]]
      %s983 = scalar_lea.vmem %s2, %s981
      %v984 = vld [vmem:[%s983] sm:$0x1]
      %985 = vst [vmem:[#allocation2 + $0xa2] sm:$0x1] %v984
      %s986 = scalar_lea.vmem %s3, %s982
      %v987 = vld [vmem:[%s986] sm:$0x1]
      %988 = vst [vmem:[#allocation2 + $0xaa] sm:$0x1] %v987
      %s989 = sadd.s32 %s242, 83
      %s990 = sld [smem:[#allocation4 + %s989]]
      %s991 = sld [smem:[#allocation5 + %s989]]
      %s992 = scalar_lea.vmem %s2, %s990
      %v993 = vld [vmem:[%s992] sm:$0x1]
      %994 = vst [vmem:[#allocation2 + $0xa3] sm:$0x1] %v993
      %s995 = scalar_lea.vmem %s3, %s991
      %v996 = vld [vmem:[%s995] sm:$0x1]
      %997 = vst [vmem:[#allocation2 + $0xab] sm:$0x1] %v996
      %s998 = sadd.s32 %s242, 84
      %s999 = sld [smem:[#allocation4 + %s998]]
      %s1000 = sld [smem:[#allocation5 + %s998]]
      %s1001 = scalar_lea.vmem %s2, %s999
      %v1002 = vld [vmem:[%s1001] sm:$0x1]
      %1003 = vst [vmem:[#allocation2 + $0xa4] sm:$0x1] %v1002
      %s1004 = scalar_lea.vmem %s3, %s1000
      %v1005 = vld [vmem:[%s1004] sm:$0x1]
      %1006 = vst [vmem:[#allocation2 + $0xac] sm:$0x1] %v1005
      %s1007 = sadd.s32 %s242, 85
      %s1008 = sld [smem:[#allocation4 + %s1007]]
      %s1009 = sld [smem:[#allocation5 + %s1007]]
      %s1010 = scalar_lea.vmem %s2, %s1008
      %v1011 = vld [vmem:[%s1010] sm:$0x1]
      %1012 = vst [vmem:[#allocation2 + $0xa5] sm:$0x1] %v1011
      %s1013 = scalar_lea.vmem %s3, %s1009
      %v1014 = vld [vmem:[%s1013] sm:$0x1]
      %1015 = vst [vmem:[#allocation2 + $0xad] sm:$0x1] %v1014
      %s1016 = sadd.s32 %s242, 86
      %s1017 = sld [smem:[#allocation4 + %s1016]]
      %s1018 = sld [smem:[#allocation5 + %s1016]]
      %s1019 = scalar_lea.vmem %s2, %s1017
      %v1020 = vld [vmem:[%s1019] sm:$0x1]
      %1021 = vst [vmem:[#allocation2 + $0xa6] sm:$0x1] %v1020
      %s1022 = scalar_lea.vmem %s3, %s1018
      %v1023 = vld [vmem:[%s1022] sm:$0x1]
      %1024 = vst [vmem:[#allocation2 + $0xae] sm:$0x1] %v1023
      %s1025 = sadd.s32 %s242, 87
      %s1026 = sld [smem:[#allocation4 + %s1025]]
      %s1027 = sld [smem:[#allocation5 + %s1025]]
      %s1028 = scalar_lea.vmem %s2, %s1026
      %v1029 = vld [vmem:[%s1028] sm:$0x1]
      %1030 = vst [vmem:[#allocation2 + $0xa7] sm:$0x1] %v1029
      %s1031 = scalar_lea.vmem %s3, %s1027
      %v1032 = vld [vmem:[%s1031] sm:$0x1]
      %1033 = vst [vmem:[#allocation2 + $0xaf] sm:$0x1] %v1032
      %s1034 = sadd.s32 %s242, 88
      %s1035 = sld [smem:[#allocation4 + %s1034]]
      %s1036 = sld [smem:[#allocation5 + %s1034]]
      %s1037 = scalar_lea.vmem %s2, %s1035
      %v1038 = vld [vmem:[%s1037] sm:$0x1]
      %1039 = vst [vmem:[#allocation2 + $0xb0] sm:$0x1] %v1038
      %s1040 = scalar_lea.vmem %s3, %s1036
      %v1041 = vld [vmem:[%s1040] sm:$0x1]
      %1042 = vst [vmem:[#allocation2 + $0xb8] sm:$0x1] %v1041
      %s1043 = sadd.s32 %s242, 89
      %s1044 = sld [smem:[#allocation4 + %s1043]]
      %s1045 = sld [smem:[#allocation5 + %s1043]]
      %s1046 = scalar_lea.vmem %s2, %s1044
      %v1047 = vld [vmem:[%s1046] sm:$0x1]
      %1048 = vst [vmem:[#allocation2 + $0xb1] sm:$0x1] %v1047
      %s1049 = scalar_lea.vmem %s3, %s1045
      %v1050 = vld [vmem:[%s1049] sm:$0x1]
      %1051 = vst [vmem:[#allocation2 + $0xb9] sm:$0x1] %v1050
      %s1052 = sadd.s32 %s242, 90
      %s1053 = sld [smem:[#allocation4 + %s1052]]
      %s1054 = sld [smem:[#allocation5 + %s1052]]
      %s1055 = scalar_lea.vmem %s2, %s1053
      %v1056 = vld [vmem:[%s1055] sm:$0x1]
      %1057 = vst [vmem:[#allocation2 + $0xb2] sm:$0x1] %v1056
      %s1058 = scalar_lea.vmem %s3, %s1054
      %v1059 = vld [vmem:[%s1058] sm:$0x1]
      %1060 = vst [vmem:[#allocation2 + $0xba] sm:$0x1] %v1059
      %s1061 = sadd.s32 %s242, 91
      %s1062 = sld [smem:[#allocation4 + %s1061]]
      %s1063 = sld [smem:[#allocation5 + %s1061]]
      %s1064 = scalar_lea.vmem %s2, %s1062
      %v1065 = vld [vmem:[%s1064] sm:$0x1]
      %1066 = vst [vmem:[#allocation2 + $0xb3] sm:$0x1] %v1065
      %s1067 = scalar_lea.vmem %s3, %s1063
      %v1068 = vld [vmem:[%s1067] sm:$0x1]
      %1069 = vst [vmem:[#allocation2 + $0xbb] sm:$0x1] %v1068
      %s1070 = sadd.s32 %s242, 92
      %s1071 = sld [smem:[#allocation4 + %s1070]]
      %s1072 = sld [smem:[#allocation5 + %s1070]]
      %s1073 = scalar_lea.vmem %s2, %s1071
      %v1074 = vld [vmem:[%s1073] sm:$0x1]
      %1075 = vst [vmem:[#allocation2 + $0xb4] sm:$0x1] %v1074
      %s1076 = scalar_lea.vmem %s3, %s1072
      %v1077 = vld [vmem:[%s1076] sm:$0x1]
      %1078 = vst [vmem:[#allocation2 + $0xbc] sm:$0x1] %v1077
      %s1079 = sadd.s32 %s242, 93
      %s1080 = sld [smem:[#allocation4 + %s1079]]
      %s1081 = sld [smem:[#allocation5 + %s1079]]
      %s1082 = scalar_lea.vmem %s2, %s1080
      %v1083 = vld [vmem:[%s1082] sm:$0x1]
      %1084 = vst [vmem:[#allocation2 + $0xb5] sm:$0x1] %v1083
      %s1085 = scalar_lea.vmem %s3, %s1081
      %v1086 = vld [vmem:[%s1085] sm:$0x1]
      %1087 = vst [vmem:[#allocation2 + $0xbd] sm:$0x1] %v1086
      %s1088 = sadd.s32 %s242, 94
      %s1089 = sld [smem:[#allocation4 + %s1088]]
      %s1090 = sld [smem:[#allocation5 + %s1088]]
      %s1091 = scalar_lea.vmem %s2, %s1089
      %v1092 = vld [vmem:[%s1091] sm:$0x1]
      %1093 = vst [vmem:[#allocation2 + $0xb6] sm:$0x1] %v1092
      %s1094 = scalar_lea.vmem %s3, %s1090
      %v1095 = vld [vmem:[%s1094] sm:$0x1]
      %1096 = vst [vmem:[#allocation2 + $0xbe] sm:$0x1] %v1095
      %s1097 = sadd.s32 %s242, 95
      %s1098 = sld [smem:[#allocation4 + %s1097]]
      %s1099 = sld [smem:[#allocation5 + %s1097]]
      %s1100 = scalar_lea.vmem %s2, %s1098
      %v1101 = vld [vmem:[%s1100] sm:$0x1]
      %1102 = vst [vmem:[#allocation2 + $0xb7] sm:$0x1] %v1101
      %s1103 = scalar_lea.vmem %s3, %s1099
      %v1104 = vld [vmem:[%s1103] sm:$0x1]
      %1105 = vst [vmem:[#allocation2 + $0xbf] sm:$0x1] %v1104
      %s1106 = sadd.s32 %s242, 96
      %s1107 = sld [smem:[#allocation4 + %s1106]]
      %s1108 = sld [smem:[#allocation5 + %s1106]]
      %s1109 = scalar_lea.vmem %s2, %s1107
      %v1110 = vld [vmem:[%s1109] sm:$0x1]
      %1111 = vst [vmem:[#allocation2 + $0xc0] sm:$0x1] %v1110
      %s1112 = scalar_lea.vmem %s3, %s1108
      %v1113 = vld [vmem:[%s1112] sm:$0x1]
      %1114 = vst [vmem:[#allocation2 + $0xc8] sm:$0x1] %v1113
      %s1115 = sadd.s32 %s242, 97
      %s1116 = sld [smem:[#allocation4 + %s1115]]
      %s1117 = sld [smem:[#allocation5 + %s1115]]
      %s1118 = scalar_lea.vmem %s2, %s1116
      %v1119 = vld [vmem:[%s1118] sm:$0x1]
      %1120 = vst [vmem:[#allocation2 + $0xc1] sm:$0x1] %v1119
      %s1121 = scalar_lea.vmem %s3, %s1117
      %v1122 = vld [vmem:[%s1121] sm:$0x1]
      %1123 = vst [vmem:[#allocation2 + $0xc9] sm:$0x1] %v1122
      %s1124 = sadd.s32 %s242, 98
      %s1125 = sld [smem:[#allocation4 + %s1124]]
      %s1126 = sld [smem:[#allocation5 + %s1124]]
      %s1127 = scalar_lea.vmem %s2, %s1125
      %v1128 = vld [vmem:[%s1127] sm:$0x1]
      %1129 = vst [vmem:[#allocation2 + $0xc2] sm:$0x1] %v1128
      %s1130 = scalar_lea.vmem %s3, %s1126
      %v1131 = vld [vmem:[%s1130] sm:$0x1]
      %1132 = vst [vmem:[#allocation2 + $0xca] sm:$0x1] %v1131
      %s1133 = sadd.s32 %s242, 99
      %s1134 = sld [smem:[#allocation4 + %s1133]]
      %s1135 = sld [smem:[#allocation5 + %s1133]]
      %s1136 = scalar_lea.vmem %s2, %s1134
      %v1137 = vld [vmem:[%s1136] sm:$0x1]
      %1138 = vst [vmem:[#allocation2 + $0xc3] sm:$0x1] %v1137
      %s1139 = scalar_lea.vmem %s3, %s1135
      %v1140 = vld [vmem:[%s1139] sm:$0x1]
      %1141 = vst [vmem:[#allocation2 + $0xcb] sm:$0x1] %v1140
      %s1142 = sadd.s32 %s242, 100
      %s1143 = sld [smem:[#allocation4 + %s1142]]
      %s1144 = sld [smem:[#allocation5 + %s1142]]
      %s1145 = scalar_lea.vmem %s2, %s1143
      %v1146 = vld [vmem:[%s1145] sm:$0x1]
      %1147 = vst [vmem:[#allocation2 + $0xc4] sm:$0x1] %v1146
      %s1148 = scalar_lea.vmem %s3, %s1144
      %v1149 = vld [vmem:[%s1148] sm:$0x1]
      %1150 = vst [vmem:[#allocation2 + $0xcc] sm:$0x1] %v1149
      %s1151 = sadd.s32 %s242, 101
      %s1152 = sld [smem:[#allocation4 + %s1151]]
      %s1153 = sld [smem:[#allocation5 + %s1151]]
      %s1154 = scalar_lea.vmem %s2, %s1152
      %v1155 = vld [vmem:[%s1154] sm:$0x1]
      %1156 = vst [vmem:[#allocation2 + $0xc5] sm:$0x1] %v1155
      %s1157 = scalar_lea.vmem %s3, %s1153
      %v1158 = vld [vmem:[%s1157] sm:$0x1]
      %1159 = vst [vmem:[#allocation2 + $0xcd] sm:$0x1] %v1158
      %s1160 = sadd.s32 %s242, 102
      %s1161 = sld [smem:[#allocation4 + %s1160]]
      %s1162 = sld [smem:[#allocation5 + %s1160]]
      %s1163 = scalar_lea.vmem %s2, %s1161
      %v1164 = vld [vmem:[%s1163] sm:$0x1]
      %1165 = vst [vmem:[#allocation2 + $0xc6] sm:$0x1] %v1164
      %s1166 = scalar_lea.vmem %s3, %s1162
      %v1167 = vld [vmem:[%s1166] sm:$0x1]
      %1168 = vst [vmem:[#allocation2 + $0xce] sm:$0x1] %v1167
      %s1169 = sadd.s32 %s242, 103
      %s1170 = sld [smem:[#allocation4 + %s1169]]
      %s1171 = sld [smem:[#allocation5 + %s1169]]
      %s1172 = scalar_lea.vmem %s2, %s1170
      %v1173 = vld [vmem:[%s1172] sm:$0x1]
      %1174 = vst [vmem:[#allocation2 + $0xc7] sm:$0x1] %v1173
      %s1175 = scalar_lea.vmem %s3, %s1171
      %v1176 = vld [vmem:[%s1175] sm:$0x1]
      %1177 = vst [vmem:[#allocation2 + $0xcf] sm:$0x1] %v1176
      %s1178 = sadd.s32 %s242, 104
      %s1179 = sld [smem:[#allocation4 + %s1178]]
      %s1180 = sld [smem:[#allocation5 + %s1178]]
      %s1181 = scalar_lea.vmem %s2, %s1179
      %v1182 = vld [vmem:[%s1181] sm:$0x1]
      %1183 = vst [vmem:[#allocation2 + $0xd0] sm:$0x1] %v1182
      %s1184 = scalar_lea.vmem %s3, %s1180
      %v1185 = vld [vmem:[%s1184] sm:$0x1]
      %1186 = vst [vmem:[#allocation2 + $0xd8] sm:$0x1] %v1185
      %s1187 = sadd.s32 %s242, 105
      %s1188 = sld [smem:[#allocation4 + %s1187]]
      %s1189 = sld [smem:[#allocation5 + %s1187]]
      %s1190 = scalar_lea.vmem %s2, %s1188
      %v1191 = vld [vmem:[%s1190] sm:$0x1]
      %1192 = vst [vmem:[#allocation2 + $0xd1] sm:$0x1] %v1191
      %s1193 = scalar_lea.vmem %s3, %s1189
      %v1194 = vld [vmem:[%s1193] sm:$0x1]
      %1195 = vst [vmem:[#allocation2 + $0xd9] sm:$0x1] %v1194
      %s1196 = sadd.s32 %s242, 106
      %s1197 = sld [smem:[#allocation4 + %s1196]]
      %s1198 = sld [smem:[#allocation5 + %s1196]]
      %s1199 = scalar_lea.vmem %s2, %s1197
      %v1200 = vld [vmem:[%s1199] sm:$0x1]
      %1201 = vst [vmem:[#allocation2 + $0xd2] sm:$0x1] %v1200
      %s1202 = scalar_lea.vmem %s3, %s1198
      %v1203 = vld [vmem:[%s1202] sm:$0x1]
      %1204 = vst [vmem:[#allocation2 + $0xda] sm:$0x1] %v1203
      %s1205 = sadd.s32 %s242, 107
      %s1206 = sld [smem:[#allocation4 + %s1205]]
      %s1207 = sld [smem:[#allocation5 + %s1205]]
      %s1208 = scalar_lea.vmem %s2, %s1206
      %v1209 = vld [vmem:[%s1208] sm:$0x1]
      %1210 = vst [vmem:[#allocation2 + $0xd3] sm:$0x1] %v1209
      %s1211 = scalar_lea.vmem %s3, %s1207
      %v1212 = vld [vmem:[%s1211] sm:$0x1]
      %1213 = vst [vmem:[#allocation2 + $0xdb] sm:$0x1] %v1212
      %s1214 = sadd.s32 %s242, 108
      %s1215 = sld [smem:[#allocation4 + %s1214]]
      %s1216 = sld [smem:[#allocation5 + %s1214]]
      %s1217 = scalar_lea.vmem %s2, %s1215
      %v1218 = vld [vmem:[%s1217] sm:$0x1]
      %1219 = vst [vmem:[#allocation2 + $0xd4] sm:$0x1] %v1218
      %s1220 = scalar_lea.vmem %s3, %s1216
      %v1221 = vld [vmem:[%s1220] sm:$0x1]
      %1222 = vst [vmem:[#allocation2 + $0xdc] sm:$0x1] %v1221
      %s1223 = sadd.s32 %s242, 109
      %s1224 = sld [smem:[#allocation4 + %s1223]]
      %s1225 = sld [smem:[#allocation5 + %s1223]]
      %s1226 = scalar_lea.vmem %s2, %s1224
      %v1227 = vld [vmem:[%s1226] sm:$0x1]
      %1228 = vst [vmem:[#allocation2 + $0xd5] sm:$0x1] %v1227
      %s1229 = scalar_lea.vmem %s3, %s1225
      %v1230 = vld [vmem:[%s1229] sm:$0x1]
      %1231 = vst [vmem:[#allocation2 + $0xdd] sm:$0x1] %v1230
      %s1232 = sadd.s32 %s242, 110
      %s1233 = sld [smem:[#allocation4 + %s1232]]
      %s1234 = sld [smem:[#allocation5 + %s1232]]
      %s1235 = scalar_lea.vmem %s2, %s1233
      %v1236 = vld [vmem:[%s1235] sm:$0x1]
      %1237 = vst [vmem:[#allocation2 + $0xd6] sm:$0x1] %v1236
      %s1238 = scalar_lea.vmem %s3, %s1234
      %v1239 = vld [vmem:[%s1238] sm:$0x1]
      %1240 = vst [vmem:[#allocation2 + $0xde] sm:$0x1] %v1239
      %s1241 = sadd.s32 %s242, 111
      %s1242 = sld [smem:[#allocation4 + %s1241]]
      %s1243 = sld [smem:[#allocation5 + %s1241]]
      %s1244 = scalar_lea.vmem %s2, %s1242
      %v1245 = vld [vmem:[%s1244] sm:$0x1]
      %1246 = vst [vmem:[#allocation2 + $0xd7] sm:$0x1] %v1245
      %s1247 = scalar_lea.vmem %s3, %s1243
      %v1248 = vld [vmem:[%s1247] sm:$0x1]
      %1249 = vst [vmem:[#allocation2 + $0xdf] sm:$0x1] %v1248
      %s1250 = sadd.s32 %s242, 112
      %s1251 = sld [smem:[#allocation4 + %s1250]]
      %s1252 = sld [smem:[#allocation5 + %s1250]]
      %s1253 = scalar_lea.vmem %s2, %s1251
      %v1254 = vld [vmem:[%s1253] sm:$0x1]
      %1255 = vst [vmem:[#allocation2 + $0xe0] sm:$0x1] %v1254
      %s1256 = scalar_lea.vmem %s3, %s1252
      %v1257 = vld [vmem:[%s1256] sm:$0x1]
      %1258 = vst [vmem:[#allocation2 + $0xe8] sm:$0x1] %v1257
      %s1259 = sadd.s32 %s242, 113
      %s1260 = sld [smem:[#allocation4 + %s1259]]
      %s1261 = sld [smem:[#allocation5 + %s1259]]
      %s1262 = scalar_lea.vmem %s2, %s1260
      %v1263 = vld [vmem:[%s1262] sm:$0x1]
      %1264 = vst [vmem:[#allocation2 + $0xe1] sm:$0x1] %v1263
      %s1265 = scalar_lea.vmem %s3, %s1261
      %v1266 = vld [vmem:[%s1265] sm:$0x1]
      %1267 = vst [vmem:[#allocation2 + $0xe9] sm:$0x1] %v1266
      %s1268 = sadd.s32 %s242, 114
      %s1269 = sld [smem:[#allocation4 + %s1268]]
      %s1270 = sld [smem:[#allocation5 + %s1268]]
      %s1271 = scalar_lea.vmem %s2, %s1269
      %v1272 = vld [vmem:[%s1271] sm:$0x1]
      %1273 = vst [vmem:[#allocation2 + $0xe2] sm:$0x1] %v1272
      %s1274 = scalar_lea.vmem %s3, %s1270
      %v1275 = vld [vmem:[%s1274] sm:$0x1]
      %1276 = vst [vmem:[#allocation2 + $0xea] sm:$0x1] %v1275
      %s1277 = sadd.s32 %s242, 115
      %s1278 = sld [smem:[#allocation4 + %s1277]]
      %s1279 = sld [smem:[#allocation5 + %s1277]]
      %s1280 = scalar_lea.vmem %s2, %s1278
      %v1281 = vld [vmem:[%s1280] sm:$0x1]
      %1282 = vst [vmem:[#allocation2 + $0xe3] sm:$0x1] %v1281
      %s1283 = scalar_lea.vmem %s3, %s1279
      %v1284 = vld [vmem:[%s1283] sm:$0x1]
      %1285 = vst [vmem:[#allocation2 + $0xeb] sm:$0x1] %v1284
      %s1286 = sadd.s32 %s242, 116
      %s1287 = sld [smem:[#allocation4 + %s1286]]
      %s1288 = sld [smem:[#allocation5 + %s1286]]
      %s1289 = scalar_lea.vmem %s2, %s1287
      %v1290 = vld [vmem:[%s1289] sm:$0x1]
      %1291 = vst [vmem:[#allocation2 + $0xe4] sm:$0x1] %v1290
      %s1292 = scalar_lea.vmem %s3, %s1288
      %v1293 = vld [vmem:[%s1292] sm:$0x1]
      %1294 = vst [vmem:[#allocation2 + $0xec] sm:$0x1] %v1293
      %s1295 = sadd.s32 %s242, 117
      %s1296 = sld [smem:[#allocation4 + %s1295]]
      %s1297 = sld [smem:[#allocation5 + %s1295]]
      %s1298 = scalar_lea.vmem %s2, %s1296
      %v1299 = vld [vmem:[%s1298] sm:$0x1]
      %1300 = vst [vmem:[#allocation2 + $0xe5] sm:$0x1] %v1299
      %s1301 = scalar_lea.vmem %s3, %s1297
      %v1302 = vld [vmem:[%s1301] sm:$0x1]
      %1303 = vst [vmem:[#allocation2 + $0xed] sm:$0x1] %v1302
      %s1304 = sadd.s32 %s242, 118
      %s1305 = sld [smem:[#allocation4 + %s1304]]
      %s1306 = sld [smem:[#allocation5 + %s1304]]
      %s1307 = scalar_lea.vmem %s2, %s1305
      %v1308 = vld [vmem:[%s1307] sm:$0x1]
      %1309 = vst [vmem:[#allocation2 + $0xe6] sm:$0x1] %v1308
      %s1310 = scalar_lea.vmem %s3, %s1306
      %v1311 = vld [vmem:[%s1310] sm:$0x1]
      %1312 = vst [vmem:[#allocation2 + $0xee] sm:$0x1] %v1311
      %s1313 = sadd.s32 %s242, 119
      %s1314 = sld [smem:[#allocation4 + %s1313]]
      %s1315 = sld [smem:[#allocation5 + %s1313]]
      %s1316 = scalar_lea.vmem %s2, %s1314
      %v1317 = vld [vmem:[%s1316] sm:$0x1]
      %1318 = vst [vmem:[#allocation2 + $0xe7] sm:$0x1] %v1317
      %s1319 = scalar_lea.vmem %s3, %s1315
      %v1320 = vld [vmem:[%s1319] sm:$0x1]
      %1321 = vst [vmem:[#allocation2 + $0xef] sm:$0x1] %v1320
      %s1322 = sadd.s32 %s242, 120
      %s1323 = sld [smem:[#allocation4 + %s1322]]
      %s1324 = sld [smem:[#allocation5 + %s1322]]
      %s1325 = scalar_lea.vmem %s2, %s1323
      %v1326 = vld [vmem:[%s1325] sm:$0x1]
      %1327 = vst [vmem:[#allocation2 + $0xf0] sm:$0x1] %v1326
      %s1328 = scalar_lea.vmem %s3, %s1324
      %v1329 = vld [vmem:[%s1328] sm:$0x1]
      %1330 = vst [vmem:[#allocation2 + $0xf8] sm:$0x1] %v1329
      %s1331 = sadd.s32 %s242, 121
      %s1332 = sld [smem:[#allocation4 + %s1331]]
      %s1333 = sld [smem:[#allocation5 + %s1331]]
      %s1334 = scalar_lea.vmem %s2, %s1332
      %v1335 = vld [vmem:[%s1334] sm:$0x1]
      %1336 = vst [vmem:[#allocation2 + $0xf1] sm:$0x1] %v1335
      %s1337 = scalar_lea.vmem %s3, %s1333
      %v1338 = vld [vmem:[%s1337] sm:$0x1]
      %1339 = vst [vmem:[#allocation2 + $0xf9] sm:$0x1] %v1338
      %s1340 = sadd.s32 %s242, 122
      %s1341 = sld [smem:[#allocation4 + %s1340]]
      %s1342 = sld [smem:[#allocation5 + %s1340]]
      %s1343 = scalar_lea.vmem %s2, %s1341
      %v1344 = vld [vmem:[%s1343] sm:$0x1]
      %1345 = vst [vmem:[#allocation2 + $0xf2] sm:$0x1] %v1344
      %s1346 = scalar_lea.vmem %s3, %s1342
      %v1347 = vld [vmem:[%s1346] sm:$0x1]
      %1348 = vst [vmem:[#allocation2 + $0xfa] sm:$0x1] %v1347
      %s1349 = sadd.s32 %s242, 123
      %s1350 = sld [smem:[#allocation4 + %s1349]]
      %s1351 = sld [smem:[#allocation5 + %s1349]]
      %s1352 = scalar_lea.vmem %s2, %s1350
      %v1353 = vld [vmem:[%s1352] sm:$0x1]
      %1354 = vst [vmem:[#allocation2 + $0xf3] sm:$0x1] %v1353
      %s1355 = scalar_lea.vmem %s3, %s1351
      %v1356 = vld [vmem:[%s1355] sm:$0x1]
      %1357 = vst [vmem:[#allocation2 + $0xfb] sm:$0x1] %v1356
      %s1358 = sadd.s32 %s242, 124
      %s1359 = sld [smem:[#allocation4 + %s1358]]
      %s1360 = sld [smem:[#allocation5 + %s1358]]
      %s1361 = scalar_lea.vmem %s2, %s1359
      %v1362 = vld [vmem:[%s1361] sm:$0x1]
      %1363 = vst [vmem:[#allocation2 + $0xf4] sm:$0x1] %v1362
      %s1364 = scalar_lea.vmem %s3, %s1360
      %v1365 = vld [vmem:[%s1364] sm:$0x1]
      %1366 = vst [vmem:[#allocation2 + $0xfc] sm:$0x1] %v1365
      %s1367 = sadd.s32 %s242, 125
      %s1368 = sld [smem:[#allocation4 + %s1367]]
      %s1369 = sld [smem:[#allocation5 + %s1367]]
      %s1370 = scalar_lea.vmem %s2, %s1368
      %v1371 = vld [vmem:[%s1370] sm:$0x1]
      %1372 = vst [vmem:[#allocation2 + $0xf5] sm:$0x1] %v1371
      %s1373 = scalar_lea.vmem %s3, %s1369
      %v1374 = vld [vmem:[%s1373] sm:$0x1]
      %1375 = vst [vmem:[#allocation2 + $0xfd] sm:$0x1] %v1374
      %s1376 = sadd.s32 %s242, 126
      %s1377 = sld [smem:[#allocation4 + %s1376]]
      %s1378 = sld [smem:[#allocation5 + %s1376]]
      %s1379 = scalar_lea.vmem %s2, %s1377
      %v1380 = vld [vmem:[%s1379] sm:$0x1]
      %1381 = vst [vmem:[#allocation2 + $0xf6] sm:$0x1] %v1380
      %s1382 = scalar_lea.vmem %s3, %s1378
      %v1383 = vld [vmem:[%s1382] sm:$0x1]
      %1384 = vst [vmem:[#allocation2 + $0xfe] sm:$0x1] %v1383
      %s1385 = sadd.s32 %s242, 127
      %s1386 = sld [smem:[#allocation4 + %s1385]]
      %s1387 = sld [smem:[#allocation5 + %s1385]]
      %s1388 = scalar_lea.vmem %s2, %s1386
      %v1389 = vld [vmem:[%s1388] sm:$0x1]
      %1390 = vst [vmem:[#allocation2 + $0xf7] sm:$0x1] %v1389
      %s1391 = scalar_lea.vmem %s3, %s1387
      %v1392 = vld [vmem:[%s1391] sm:$0x1]
      %1393 = vst [vmem:[#allocation2 + $0xff] sm:$0x1] %v1392
      %v1394 = vld [vmem:[#allocation2] sm:$0xff]
      %v1395 = vld [vmem:[#allocation2 + $0x8] sm:$0xff]
      %v1396 = vld [vmem:[#allocation2 + $0x10] sm:$0xff]
      %v1397 = vld [vmem:[#allocation2 + $0x18] sm:$0xff]
      %v1398 = vld [vmem:[#allocation2 + $0x20] sm:$0xff]
      %v1399 = vld [vmem:[#allocation2 + $0x28] sm:$0xff]
      %v1400 = vld [vmem:[#allocation2 + $0x30] sm:$0xff]
      %v1401 = vld [vmem:[#allocation2 + $0x38] sm:$0xff]
      %v1402 = vld [vmem:[#allocation2 + $0x40] sm:$0xff]
      %v1403 = vld [vmem:[#allocation2 + $0x48] sm:$0xff]
      %v1404 = vld [vmem:[#allocation2 + $0x50] sm:$0xff]
      %v1405 = vld [vmem:[#allocation2 + $0x58] sm:$0xff]
      %v1406 = vld [vmem:[#allocation2 + $0x60] sm:$0xff]
      %v1407 = vld [vmem:[#allocation2 + $0x68] sm:$0xff]
      %v1408 = vld [vmem:[#allocation2 + $0x70] sm:$0xff]
      %v1409 = vld [vmem:[#allocation2 + $0x78] sm:$0xff]
      %v1410 = vld [vmem:[#allocation2 + $0x80] sm:$0xff]
      %v1411 = vld [vmem:[#allocation2 + $0x88] sm:$0xff]
      %v1412 = vld [vmem:[#allocation2 + $0x90] sm:$0xff]
      %v1413 = vld [vmem:[#allocation2 + $0x98] sm:$0xff]
      %v1414 = vld [vmem:[#allocation2 + $0xa0] sm:$0xff]
      %v1415 = vld [vmem:[#allocation2 + $0xa8] sm:$0xff]
      %v1416 = vld [vmem:[#allocation2 + $0xb0] sm:$0xff]
      %v1417 = vld [vmem:[#allocation2 + $0xb8] sm:$0xff]
      %v1418 = vld [vmem:[#allocation2 + $0xc0] sm:$0xff]
      %v1419 = vld [vmem:[#allocation2 + $0xc8] sm:$0xff]
      %v1420 = vld [vmem:[#allocation2 + $0xd0] sm:$0xff]
      %v1421 = vld [vmem:[#allocation2 + $0xd8] sm:$0xff]
      %v1422 = vld [vmem:[#allocation2 + $0xe0] sm:$0xff]
      %v1423 = vld [vmem:[#allocation2 + $0xe8] sm:$0xff]
      %v1424 = vld [vmem:[#allocation2 + $0xf0] sm:$0xff]
      %v1425 = vld [vmem:[#allocation2 + $0xf8] sm:$0xff]
      %v1426 = vmax.f32 %v1394, 0.0
      %v1427 = vmax.f32 %v1395, 0.0
      %v1428 = vmax.f32 %v1396, 0.0
      %v1429 = vmax.f32 %v1397, 0.0
      %v1430 = vmax.f32 %v1398, 0.0
      %v1431 = vmax.f32 %v1399, 0.0
      %v1432 = vmax.f32 %v1400, 0.0
      %v1433 = vmax.f32 %v1401, 0.0
      %v1434 = vmax.f32 %v1402, 0.0
      %v1435 = vmax.f32 %v1403, 0.0
      %v1436 = vmax.f32 %v1404, 0.0
      %v1437 = vmax.f32 %v1405, 0.0
      %v1438 = vmax.f32 %v1406, 0.0
      %v1439 = vmax.f32 %v1407, 0.0
      %v1440 = vmax.f32 %v1408, 0.0
      %v1441 = vmax.f32 %v1409, 0.0
      %v1442 = vmax.f32 %v1410, 0.0
      %v1443 = vmax.f32 %v1411, 0.0
      %v1444 = vmax.f32 %v1412, 0.0
      %v1445 = vmax.f32 %v1413, 0.0
      %v1446 = vmax.f32 %v1414, 0.0
      %v1447 = vmax.f32 %v1415, 0.0
      %v1448 = vmax.f32 %v1416, 0.0
      %v1449 = vmax.f32 %v1417, 0.0
      %v1450 = vmax.f32 %v1418, 0.0
      %v1451 = vmax.f32 %v1419, 0.0
      %v1452 = vmax.f32 %v1420, 0.0
      %v1453 = vmax.f32 %v1421, 0.0
      %v1454 = vmax.f32 %v1422, 0.0
      %v1455 = vmax.f32 %v1423, 0.0
      %v1456 = vmax.f32 %v1424, 0.0
      %v1457 = vmax.f32 %v1425, 0.0
      %v1458 = vpack.c.bf16 %v1428, %v1426
      %v1459 = vpack.c.bf16 %v1429, %v1427
      %v1460 = vpack.c.bf16 %v1432, %v1430
      %v1461 = vpack.c.bf16 %v1433, %v1431
      %v1462 = vpack.c.bf16 %v1436, %v1434
      %v1463 = vpack.c.bf16 %v1437, %v1435
      %v1464 = vpack.c.bf16 %v1440, %v1438
      %v1465 = vpack.c.bf16 %v1441, %v1439
      %v1466 = vpack.c.bf16 %v1444, %v1442
      %v1467 = vpack.c.bf16 %v1445, %v1443
      %v1468 = vpack.c.bf16 %v1448, %v1446
      %v1469 = vpack.c.bf16 %v1449, %v1447
      %v1470 = vpack.c.bf16 %v1452, %v1450
      %v1471 = vpack.c.bf16 %v1453, %v1451
      %v1472 = vpack.c.bf16 %v1456, %v1454
      %v1473 = vpack.c.bf16 %v1457, %v1455
      %v1474 = vld [vmem:[%s4] sm:$0xf]
      %v1475 = vld [vmem:[%s4 + $0x4] sm:$0xf]
      %v1476 = vld [vmem:[%s4 + $0x8] sm:$0xf]
      %v1477 = vld [vmem:[%s4 + $0xc] sm:$0xf]
      %v1478 = vld [vmem:[%s4 + $0x10] sm:$0xf]
      %v1479 = vld [vmem:[%s4 + $0x14] sm:$0xf]
      %v1480 = vld [vmem:[%s4 + $0x18] sm:$0xf]
      %v1481 = vld [vmem:[%s4 + $0x1c] sm:$0xf]
      %v1482 = vld [vmem:[%s4 + $0x20] sm:$0xf]
      %v1483 = vld [vmem:[%s4 + $0x24] sm:$0xf]
      %v1484 = vld [vmem:[%s4 + $0x28] sm:$0xf]
      %v1485 = vld [vmem:[%s4 + $0x2c] sm:$0xf]
      %v1486 = vld [vmem:[%s4 + $0x30] sm:$0xf]
      %v1487 = vld [vmem:[%s4 + $0x34] sm:$0xf]
      %v1488 = vld [vmem:[%s4 + $0x38] sm:$0xf]
      %v1489 = vld [vmem:[%s4 + $0x3c] sm:$0xf]
      %v1490 = vld [vmem:[%s4 + $0x40] sm:$0xf]
      %v1491 = vld [vmem:[%s4 + $0x44] sm:$0xf]
      %v1492 = vld [vmem:[%s4 + $0x48] sm:$0xf]
      %v1493 = vld [vmem:[%s4 + $0x4c] sm:$0xf]
      %v1494 = vld [vmem:[%s4 + $0x50] sm:$0xf]
      %v1495 = vld [vmem:[%s4 + $0x54] sm:$0xf]
      %v1496 = vld [vmem:[%s4 + $0x58] sm:$0xf]
      %v1497 = vld [vmem:[%s4 + $0x5c] sm:$0xf]
      %v1498 = vld [vmem:[%s4 + $0x60] sm:$0xf]
      %v1499 = vld [vmem:[%s4 + $0x64] sm:$0xf]
      %v1500 = vld [vmem:[%s4 + $0x68] sm:$0xf]
      %v1501 = vld [vmem:[%s4 + $0x6c] sm:$0xf]
      %v1502 = vld [vmem:[%s4 + $0x70] sm:$0xf]
      %v1503 = vld [vmem:[%s4 + $0x74] sm:$0xf]
      %v1504 = vld [vmem:[%s4 + $0x78] sm:$0xf]
      %v1505 = vld [vmem:[%s4 + $0x7c] sm:$0xf]
      %v1506 = vld [vmem:[%s5] sm:$0x1]
      %v1508 = vlaneseq
      %v1509 = vshrl.u32 %v1508, 7
      %v1510 = vsub.s32 0, %v1509
      %v1511 = vrot.slane %v1506, %v1510
      %v1545 = vunpack.c.l.b16 %v1474
      %v1546 = vunpack.c.l.b16 %v1475
      %v1547 = vunpack.c.l.b16 %v1476
      %v1548 = vunpack.c.l.b16 %v1477
      %v1549 = vunpack.c.l.b16 %v1478
      %v1550 = vunpack.c.l.b16 %v1479
      %v1551 = vunpack.c.l.b16 %v1480
      %v1552 = vunpack.c.l.b16 %v1481
      %v1553 = vunpack.c.l.b16 %v1482
      %v1554 = vunpack.c.l.b16 %v1483
      %v1555 = vunpack.c.l.b16 %v1484
      %v1556 = vunpack.c.l.b16 %v1485
      %v1557 = vunpack.c.l.b16 %v1486
      %v1558 = vunpack.c.l.b16 %v1487
      %v1559 = vunpack.c.l.b16 %v1488
      %v1560 = vunpack.c.l.b16 %v1489
      %v1561 = vunpack.c.l.b16 %v1490
      %v1562 = vunpack.c.l.b16 %v1491
      %v1563 = vunpack.c.l.b16 %v1492
      %v1564 = vunpack.c.l.b16 %v1493
      %v1565 = vunpack.c.l.b16 %v1494
      %v1566 = vunpack.c.l.b16 %v1495
      %v1567 = vunpack.c.l.b16 %v1496
      %v1568 = vunpack.c.l.b16 %v1497
      %v1569 = vunpack.c.l.b16 %v1498
      %v1570 = vunpack.c.l.b16 %v1499
      %v1571 = vunpack.c.l.b16 %v1500
      %v1572 = vunpack.c.l.b16 %v1501
      %v1573 = vunpack.c.l.b16 %v1502
      %v1574 = vunpack.c.l.b16 %v1503
      %v1575 = vunpack.c.l.b16 %v1504
      %v1576 = vunpack.c.l.b16 %v1505
      %v1577 = vpack.c.b16 %v1546, %v1545
      %v1578 = vpack.c.b16 %v1548, %v1547
      %v1579 = vpack.c.b16 %v1550, %v1549
      %v1580 = vpack.c.b16 %v1552, %v1551
      %v1581 = vpack.c.b16 %v1554, %v1553
      %v1582 = vpack.c.b16 %v1556, %v1555
      %v1583 = vpack.c.b16 %v1558, %v1557
      %v1584 = vpack.c.b16 %v1560, %v1559
      %v1585 = vpack.c.b16 %v1562, %v1561
      %v1586 = vpack.c.b16 %v1564, %v1563
      %v1587 = vpack.c.b16 %v1566, %v1565
      %v1588 = vpack.c.b16 %v1568, %v1567
      %v1589 = vpack.c.b16 %v1570, %v1569
      %v1590 = vpack.c.b16 %v1572, %v1571
      %v1591 = vpack.c.b16 %v1574, %v1573
      %v1592 = vpack.c.b16 %v1576, %v1575
      %1609 = vmatprep.subr.bf16.mxu0 0
      %1610 = vmatpush1.bf16.msra.mxu0 %v1577
      %1611 = vmatprep.subr.bf16.mxu0 0
      %1612 = vmatpush1.bf16.msra.mxu0 %v1578
      %1613 = vmatprep.subr.bf16.mxu0 0
      %1614 = vmatpush1.bf16.msra.mxu0 %v1579
      %1615 = vmatprep.subr.bf16.mxu0 0
      %1616 = vmatpush1.bf16.msra.mxu0 %v1580
      %1617 = vmatprep.subr.bf16.mxu0 0
      %1618 = vmatpush1.bf16.msra.mxu0 %v1581
      %1619 = vmatprep.subr.bf16.mxu0 0
      %1620 = vmatpush1.bf16.msra.mxu0 %v1582
      %1621 = vmatprep.subr.bf16.mxu0 0
      %1622 = vmatpush1.bf16.msra.mxu0 %v1583
      %1623 = vmatprep.subr.bf16.mxu0 0
      %1624 = vmatpush1.bf16.msra.mxu0 %v1584
      %1625 = vmatprep.subr.bf16.mxu0 0
      %1626 = vmatpush1.bf16.msra.mxu0 %v1585
      %1627 = vmatprep.subr.bf16.mxu0 0
      %1628 = vmatpush1.bf16.msra.mxu0 %v1586
      %1629 = vmatprep.subr.bf16.mxu0 0
      %1630 = vmatpush1.bf16.msra.mxu0 %v1587
      %1631 = vmatprep.subr.bf16.mxu0 0
      %1632 = vmatpush1.bf16.msra.mxu0 %v1588
      %1633 = vmatprep.subr.bf16.mxu0 0
      %1634 = vmatpush1.bf16.msra.mxu0 %v1589
      %1635 = vmatprep.subr.bf16.mxu0 0
      %1636 = vmatpush1.bf16.msra.mxu0 %v1590
      %1637 = vmatprep.subr.bf16.mxu0 0
      %1638 = vmatpush1.bf16.msra.mxu0 %v1591
      %1639 = vmatprep.subr.bf16.mxu0 0
      %1640 = vmatpush1.bf16.msra.mxu0 %v1592
      %1641 = vmatprep.mubr.bf16.mxu0 %v1459
      %1642 = vmatmul.mubr.bf16.gmra.mrb[0].mxu0 %v1458
      %v1643 = vpop.f32.mrb[0].mxu0
      %v1644 = vadd.f32 %v1511, %v1643
      %v1645 = vpop.f32.mrb[0].mxu0
      %v1646 = vpop.f32.mrb[0].mxu0
      %v1647 = vadd.f32 %v1511, %v1646
      %v1648 = vpop.f32.mrb[0].mxu0
      %1649 = vmatprep.mubr.bf16.mxu0 %v1461
      %1650 = vmatmul.mubr.bf16.gmra.mrb[0].mxu0 %v1460
      %v1651 = vpop.f32.mrb[0].mxu0
      %v1652 = vadd.f32 %v1511, %v1651
      %v1653 = vpop.f32.mrb[0].mxu0
      %v1654 = vpop.f32.mrb[0].mxu0
      %v1655 = vadd.f32 %v1511, %v1654
      %v1656 = vpop.f32.mrb[0].mxu0
      %1657 = vmatprep.mubr.bf16.mxu0 %v1463
      %1658 = vmatmul.mubr.bf16.gmra.mrb[0].mxu0 %v1462
      %v1659 = vpop.f32.mrb[0].mxu0
      %v1660 = vadd.f32 %v1511, %v1659
      %v1661 = vpop.f32.mrb[0].mxu0
      %v1662 = vpop.f32.mrb[0].mxu0
      %v1663 = vadd.f32 %v1511, %v1662
      %v1664 = vpop.f32.mrb[0].mxu0
      %1665 = vmatprep.mubr.bf16.mxu0 %v1465
      %1666 = vmatmul.mubr.bf16.gmra.mrb[0].mxu0 %v1464
      %v1667 = vpop.f32.mrb[0].mxu0
      %v1668 = vadd.f32 %v1511, %v1667
      %v1669 = vpop.f32.mrb[0].mxu0
      %v1670 = vpop.f32.mrb[0].mxu0
      %v1671 = vadd.f32 %v1511, %v1670
      %v1672 = vpop.f32.mrb[0].mxu0
      %1673 = vmatprep.mubr.bf16.mxu0 %v1467
      %1674 = vmatmul.mubr.bf16.gmra.mrb[0].mxu0 %v1466
      %v1675 = vpop.f32.mrb[0].mxu0
      %v1676 = vadd.f32 %v1511, %v1675
      %v1677 = vpop.f32.mrb[0].mxu0
      %v1678 = vpop.f32.mrb[0].mxu0
      %v1679 = vadd.f32 %v1511, %v1678
      %v1680 = vpop.f32.mrb[0].mxu0
      %1681 = vmatprep.mubr.bf16.mxu0 %v1469
      %1682 = vmatmul.mubr.bf16.gmra.mrb[0].mxu0 %v1468
      %v1683 = vpop.f32.mrb[0].mxu0
      %v1684 = vadd.f32 %v1511, %v1683
      %v1685 = vpop.f32.mrb[0].mxu0
      %v1686 = vpop.f32.mrb[0].mxu0
      %v1687 = vadd.f32 %v1511, %v1686
      %v1688 = vpop.f32.mrb[0].mxu0
      %1689 = vmatprep.mubr.bf16.mxu0 %v1471
      %1690 = vmatmul.mubr.bf16.gmra.mrb[0].mxu0 %v1470
      %v1691 = vpop.f32.mrb[0].mxu0
      %v1692 = vadd.f32 %v1511, %v1691
      %v1693 = vpop.f32.mrb[0].mxu0
      %v1694 = vpop.f32.mrb[0].mxu0
      %v1695 = vadd.f32 %v1511, %v1694
      %v1696 = vpop.f32.mrb[0].mxu0
      %1697 = vmatprep.mubr.bf16.mxu0 %v1473
      %1698 = vmatmul.mubr.bf16.gmra.mrb[0].mxu0 %v1472
      %v1699 = vpop.f32.mrb[0].mxu0
      %v1700 = vadd.f32 %v1511, %v1699
      %v1701 = vpop.f32.mrb[0].mxu0
      %v1702 = vpop.f32.mrb[0].mxu0
      %v1703 = vadd.f32 %v1511, %v1702
      %v1704 = vpop.f32.mrb[0].mxu0
      %1705 = vdwg.mxu0
      %v1706 = vmax.f32 %v1644, 0.0
      %v1707 = vmax.f32 %v1647, 0.0
      %v1708 = vmax.f32 %v1652, 0.0
      %v1709 = vmax.f32 %v1655, 0.0
      %v1710 = vmax.f32 %v1660, 0.0
      %v1711 = vmax.f32 %v1663, 0.0
      %v1712 = vmax.f32 %v1668, 0.0
      %v1713 = vmax.f32 %v1671, 0.0
      %v1714 = vmax.f32 %v1676, 0.0
      %v1715 = vmax.f32 %v1679, 0.0
      %v1716 = vmax.f32 %v1684, 0.0
      %v1717 = vmax.f32 %v1687, 0.0
      %v1718 = vmax.f32 %v1692, 0.0
      %v1719 = vmax.f32 %v1695, 0.0
      %v1720 = vmax.f32 %v1700, 0.0
      %v1721 = vmax.f32 %v1703, 0.0
      %v1722 = vld [vmem:[%s6] sm:$0x1]
      %v1724 = vlaneseq
      %v1725 = vshrl.u32 %v1724, 7
      %v1726 = vsub.s32 0, %v1725
      %v1727 = vrot.slane %v1722, %v1726
      %v1729 = vmul.f32 %v1706, %v1727
      %v1730 = vmul.f32 %v1707, %v1727
      %v1731 = vmul.f32 %v1708, %v1727
      %v1732 = vmul.f32 %v1709, %v1727
      %v1733 = vmul.f32 %v1710, %v1727
      %v1734 = vmul.f32 %v1711, %v1727
      %v1735 = vmul.f32 %v1712, %v1727
      %v1736 = vmul.f32 %v1713, %v1727
      %v1737 = vmul.f32 %v1714, %v1727
      %v1738 = vmul.f32 %v1715, %v1727
      %v1739 = vmul.f32 %v1716, %v1727
      %v1740 = vmul.f32 %v1717, %v1727
      %v1741 = vmul.f32 %v1718, %v1727
      %v1742 = vmul.f32 %v1719, %v1727
      %v1743 = vmul.f32 %v1720, %v1727
      %v1744 = vmul.f32 %v1721, %v1727
      %1745 = vadd.xlane.f32.xlu0 %v1729
      %v1746 = vpop.xlane.xlu0 %1745
      %1747 = vadd.xlane.f32.xlu0 %v1730
      %v1748 = vpop.xlane.xlu0 %1747
      %1749 = vadd.xlane.f32.xlu0 %v1731
      %v1750 = vpop.xlane.xlu0 %1749
      %1751 = vadd.xlane.f32.xlu0 %v1732
      %v1752 = vpop.xlane.xlu0 %1751
      %1753 = vadd.xlane.f32.xlu0 %v1733
      %v1754 = vpop.xlane.xlu0 %1753
      %1755 = vadd.xlane.f32.xlu0 %v1734
      %v1756 = vpop.xlane.xlu0 %1755
      %1757 = vadd.xlane.f32.xlu0 %v1735
      %v1758 = vpop.xlane.xlu0 %1757
      %1759 = vadd.xlane.f32.xlu0 %v1736
      %v1760 = vpop.xlane.xlu0 %1759
      %1761 = vadd.xlane.f32.xlu0 %v1737
      %v1762 = vpop.xlane.xlu0 %1761
      %1763 = vadd.xlane.f32.xlu0 %v1738
      %v1764 = vpop.xlane.xlu0 %1763
      %1765 = vadd.xlane.f32.xlu0 %v1739
      %v1766 = vpop.xlane.xlu0 %1765
      %1767 = vadd.xlane.f32.xlu0 %v1740
      %v1768 = vpop.xlane.xlu0 %1767
      %1769 = vadd.xlane.f32.xlu0 %v1741
      %v1770 = vpop.xlane.xlu0 %1769
      %1771 = vadd.xlane.f32.xlu0 %v1742
      %v1772 = vpop.xlane.xlu0 %1771
      %1773 = vadd.xlane.f32.xlu0 %v1743
      %v1774 = vpop.xlane.xlu0 %1773
      %1775 = vadd.xlane.f32.xlu0 %v1744
      %v1776 = vpop.xlane.xlu0 %1775
      %s1777 = sld [smem:[#allocation6]]
      %v1778 = vstv %s1777
      %v1779 = vadd.f32 %v1746, %v1778
      %v1780 = vadd.f32 %v1748, %v1778
      %v1781 = vadd.f32 %v1750, %v1778
      %v1782 = vadd.f32 %v1752, %v1778
      %v1783 = vadd.f32 %v1754, %v1778
      %v1784 = vadd.f32 %v1756, %v1778
      %v1785 = vadd.f32 %v1758, %v1778
      %v1786 = vadd.f32 %v1760, %v1778
      %v1787 = vadd.f32 %v1762, %v1778
      %v1788 = vadd.f32 %v1764, %v1778
      %v1789 = vadd.f32 %v1766, %v1778
      %v1790 = vadd.f32 %v1768, %v1778
      %v1791 = vadd.f32 %v1770, %v1778
      %v1792 = vadd.f32 %v1772, %v1778
      %v1793 = vadd.f32 %v1774, %v1778
      %v1794 = vadd.f32 %v1776, %v1778
      %v1811 = vlaneseq
      %v1812 = vand.u32 %v1811, 127
      %v1813 = vlaneseq
      %v1814 = vshrl.u32 %v1813, 7
      %v1815 = vsub.s32 %v1812, %v1814
      %v1816 = vrot.slane %v1779, %v1815
      %v1817 = vadd.s32 %v1812, 4294967288
      %v1818 = vlaneseq
      %v1819 = vshrl.u32 %v1818, 7
      %v1820 = vsub.s32 %v1817, %v1819
      %v1821 = vrot.slane %v1780, %v1820
      %vm1822 = vcmask 130112
      %v1823 = vsel %vm1822, %v1821, %v1816
      %v1824 = vadd.s32 %v1812, 4294967280
      %v1825 = vlaneseq
      %v1826 = vshrl.u32 %v1825, 7
      %v1827 = vsub.s32 %v1824, %v1826
      %v1828 = vrot.slane %v1781, %v1827
      %vm1829 = vcmask 195712
      %v1830 = vsel %vm1829, %v1828, %v1823
      %v1831 = vadd.s32 %v1812, 4294967272
      %v1832 = vlaneseq
      %v1833 = vshrl.u32 %v1832, 7
      %v1834 = vsub.s32 %v1831, %v1833
      %v1835 = vrot.slane %v1782, %v1834
      %vm1836 = vcmask 261312
      %v1837 = vsel %vm1836, %v1835, %v1830
      %v1838 = vadd.s32 %v1812, 4294967264
      %v1839 = vlaneseq
      %v1840 = vshrl.u32 %v1839, 7
      %v1841 = vsub.s32 %v1838, %v1840
      %v1842 = vrot.slane %v1783, %v1841
      %vm1843 = vcmask 326912
      %v1844 = vsel %vm1843, %v1842, %v1837
      %v1845 = vadd.s32 %v1812, 4294967256
      %v1846 = vlaneseq
      %v1847 = vshrl.u32 %v1846, 7
      %v1848 = vsub.s32 %v1845, %v1847
      %v1849 = vrot.slane %v1784, %v1848
      %vm1850 = vcmask 392512
      %v1851 = vsel %vm1850, %v1849, %v1844
      %v1852 = vadd.s32 %v1812, 4294967248
      %v1853 = vlaneseq
      %v1854 = vshrl.u32 %v1853, 7
      %v1855 = vsub.s32 %v1852, %v1854
      %v1856 = vrot.slane %v1785, %v1855
      %vm1857 = vcmask 458112
      %v1858 = vsel %vm1857, %v1856, %v1851
      %v1859 = vadd.s32 %v1812, 4294967240
      %v1860 = vlaneseq
      %v1861 = vshrl.u32 %v1860, 7
      %v1862 = vsub.s32 %v1859, %v1861
      %v1863 = vrot.slane %v1786, %v1862
      %vm1864 = vcmask 523712
      %v1865 = vsel %vm1864, %v1863, %v1858
      %v1866 = vadd.s32 %v1812, 4294967232
      %v1867 = vlaneseq
      %v1868 = vshrl.u32 %v1867, 7
      %v1869 = vsub.s32 %v1866, %v1868
      %v1870 = vrot.slane %v1787, %v1869
      %vm1871 = vcmask 589312
      %v1872 = vsel %vm1871, %v1870, %v1865
      %v1873 = vadd.s32 %v1812, 4294967224
      %v1874 = vlaneseq
      %v1875 = vshrl.u32 %v1874, 7
      %v1876 = vsub.s32 %v1873, %v1875
      %v1877 = vrot.slane %v1788, %v1876
      %vm1878 = vcmask 654912
      %v1879 = vsel %vm1878, %v1877, %v1872
      %v1880 = vadd.s32 %v1812, 4294967216
      %v1881 = vlaneseq
      %v1882 = vshrl.u32 %v1881, 7
      %v1883 = vsub.s32 %v1880, %v1882
      %v1884 = vrot.slane %v1789, %v1883
      %vm1885 = vcmask 720512
      %v1886 = vsel %vm1885, %v1884, %v1879
      %v1887 = vadd.s32 %v1812, 4294967208
      %v1888 = vlaneseq
      %v1889 = vshrl.u32 %v1888, 7
      %v1890 = vsub.s32 %v1887, %v1889
      %v1891 = vrot.slane %v1790, %v1890
      %vm1892 = vcmask 786112
      %v1893 = vsel %vm1892, %v1891, %v1886
      %v1894 = vadd.s32 %v1812, 4294967200
      %v1895 = vlaneseq
      %v1896 = vshrl.u32 %v1895, 7
      %v1897 = vsub.s32 %v1894, %v1896
      %v1898 = vrot.slane %v1791, %v1897
      %vm1899 = vcmask 851712
      %v1900 = vsel %vm1899, %v1898, %v1893
      %v1901 = vadd.s32 %v1812, 4294967192
      %v1902 = vlaneseq
      %v1903 = vshrl.u32 %v1902, 7
      %v1904 = vsub.s32 %v1901, %v1903
      %v1905 = vrot.slane %v1792, %v1904
      %vm1906 = vcmask 917312
      %v1907 = vsel %vm1906, %v1905, %v1900
      %v1908 = vadd.s32 %v1812, 4294967184
      %v1909 = vlaneseq
      %v1910 = vshrl.u32 %v1909, 7
      %v1911 = vsub.s32 %v1908, %v1910
      %v1912 = vrot.slane %v1793, %v1911
      %vm1913 = vcmask 982912
      %v1914 = vsel %vm1913, %v1912, %v1907
      %v1915 = vadd.s32 %v1812, 4294967176
      %v1916 = vlaneseq
      %v1917 = vshrl.u32 %v1916, 7
      %v1918 = vsub.s32 %v1915, %v1917
      %v1919 = vrot.slane %v1794, %v1918
      %vm1920 = vcmask 1048512
      %v1921 = vsel %vm1920, %v1919, %v1914
      %1923 = vst [vmem:[%s240] sm:$0x1] %v1921
      %p1924 = scmp.lt.s32.totalorder %s30, 1
      %s1925 = scalar_select %p1924, %s30, 1
      %s1926 = scalar_lea.vmem %s8, %s1925
      // Predicated region
      $region45: #{collab_filter_net.1} parent=43 // pred_check
        %p1927 = pneg %p174
      $region46: #{collab_filter_net.1} parent=43 // pred_check_branch
        %1929 = sbr.rel (%p1927) target = $region48
      $region47: #{collab_filter_net.1} parent=43 // pred_region
        _
      $region48: #{collab_filter_net.1} parent=43 // pred_fallthru
        _
    $region44: #{collab_filter_net.1} parent=5 // pred_fallthru
      _
    %p1930 = scmp.le.s32.totalorder 2, %s25
    // Predicated region
    $region49: #{collab_filter_net.1} parent=5 // pred_check
      %p1931 = pneg %p1930
    $region50: #{collab_filter_net.1} parent=5 // pred_check_branch
      %1933 = sbr.rel (%p1931) target = $region52
    $region51: #{collab_filter_net.1} parent=5 // pred_region
      %s1934 = ssub.s32 %s25, 2
      // Predicated region
      $region53: #{collab_filter_net.1} parent=51 // pred_check
        %p1935 = pneg %p180
      $region54: #{collab_filter_net.1} parent=51 // pred_check_branch
        %1937 = sbr.rel (%p1935) target = $region56
      $region55: #{collab_filter_net.1} parent=51 // pred_region
        %p1938 = scmp.lt.s32.totalorder %s31, 1
        %s1939 = scalar_select %p1938, %s31, 1
        %s1940 = scalar_lea.vmem %s8, %s1939
      $region56: #{collab_filter_net.1} parent=51 // pred_fallthru
        _
    $region52: #{collab_filter_net.1} parent=5 // pred_fallthru
      _
  $region6: #{collab_filter_net.1} parent=0 // loop_footer
    %s29 = sadd.s32 1, %s25
  $region7: #{collab_filter_net.1} parent=0 // loop_footer_branch
    %24 = sbr.rel target = $region3
  $region8: #{collab_filter_net.1} parent=0 // loop_exit
    _

</llo_original>
